<compile_context>
chip_gen: v5e
topology: v5e:2x2
jax: 0.10.0
libtpu: 0.0.40
codegen_flags: <defaults>
</compile_context>

<pallas_src>
import functools
import math

import jax
import jax.numpy as jnp
import numpy as np
from jax.experimental import pallas as pl
from jax.experimental.pallas import tpu as pltpu

_VMEM_LIMIT = 48 * 1024 * 1024   # fits v7x (64 MiB physical) with headroom
_TM_TARGET = 256                 # M tile target for the GEMMs (N<=256 here)


# ----------------------------- small helpers -------------------------------

def _round_up(v, m):
    return (v + m - 1) // m * m


def _pick_m_tile(m, target=_TM_TARGET):
    """Return (tile, padded_m) with tile | padded_m and tile 8-aligned (or full)."""
    mp = _round_up(m, 8)
    if mp <= target:
        return mp, mp
    mp = _round_up(m, target)
    return target, mp


def _largest_divisor_tile(mp, cap=1024):
    """Largest 8-aligned tile <= cap that divides mp (mp is always 8-aligned)."""
    t = min(mp, cap)
    t -= t % 8
    while mp % t != 0:
        t -= 8
    return t


def _pad2d(a, rows, cols):
    r, c = a.shape
    if r == rows and c == cols:
        return a
    return jnp.pad(a, ((0, rows - r), (0, cols - c)))


# ----------------------------- Pallas kernels ------------------------------

def _gemm_bias_lrelu_kernel(a_ref, w_ref, b_ref, o_ref, *, slope):
    # a:(tm,Kp) bf16, w:(Kp,tn) bf16, b:(1,tn) f32 -> o:(tm,tn) bf16
    acc = jnp.dot(a_ref[...], w_ref[...], preferred_element_type=jnp.float32)
    acc = acc + b_ref[...]
    o_ref[...] = jnp.where(acc >= 0.0, acc, slope * acc).astype(o_ref.dtype)


def gemm_bias_lrelu(a, w, b, *, slope=0.2):
    """LeakyReLU(a @ w + b): bf16 MXU inputs, fp32 accumulate, bf16 output, tiled."""
    M, K = a.shape
    N = w.shape[1]
    Kp = _round_up(K, 128)
    tm, Mp = _pick_m_tile(M)
    tn = N if N <= 256 else 256
    assert N % tn == 0

    a_p = _pad2d(a.astype(jnp.bfloat16), Mp, Kp)
    w_p = _pad2d(w.astype(jnp.bfloat16), Kp, N)
    b_p = b.reshape(1, N).astype(jnp.float32)

    grid = (Mp // tm, N // tn)
    out = pl.pallas_call(
        functools.partial(_gemm_bias_lrelu_kernel, slope=slope),
        out_shape=jax.ShapeDtypeStruct((Mp, N), jnp.bfloat16),
        grid_spec=pltpu.PrefetchScalarGridSpec(
            num_scalar_prefetch=0,
            grid=grid,
            in_specs=[
                pl.BlockSpec((tm, Kp), lambda i, j: (i, 0)),
                pl.BlockSpec((Kp, tn), lambda i, j: (0, j)),
                pl.BlockSpec((1, tn), lambda i, j: (0, j)),
            ],
            out_specs=pl.BlockSpec((tm, tn), lambda i, j: (i, j)),
        ),
        compiler_params=pltpu.CompilerParams(
            dimension_semantics=("parallel", "parallel"),
            vmem_limit_bytes=_VMEM_LIMIT,
        ),
        cost_estimate=pl.CostEstimate(
            flops=2 * Mp * N * Kp,
            transcendentals=0,
            bytes_accessed=a_p.size * 2 + w_p.size * 2 + Mp * N * 2 + N * 4,
        ),
    )(a_p, w_p, b_p)
    return out[:M]


def _gemm_bias_stats_kernel(a_ref, w_ref, b_ref, o_ref, s_ref, ss_ref):
    # grid = (N_tiles, M_tiles): N outer so the per-column stat blocks stay resident
    # in VMEM across the whole inner M loop (accumulator pattern, no revisits).
    i = pl.program_id(1)
    acc = jnp.dot(a_ref[...], w_ref[...], preferred_element_type=jnp.float32)
    acc = acc + b_ref[...]
    o_ref[...] = acc

    ps = jnp.sum(acc, axis=0, keepdims=True)
    pss = jnp.sum(acc * acc, axis=0, keepdims=True)

    @pl.when(i == 0)
    def _():
        s_ref[...] = ps
        ss_ref[...] = pss

    @pl.when(i > 0)
    def _():
        s_ref[...] += ps
        ss_ref[...] += pss


def gemm_bias_stats(a, w, b):
    """(a @ w + b) plus fused per-column sum / sum-of-squares (BatchNorm statistics)."""
    M, K = a.shape
    N = w.shape[1]
    Kp = _round_up(K, 128)
    tm, Mp = _pick_m_tile(M)
    tn = N if N <= 256 else 256
    assert N % tn == 0

    a_p = _pad2d(a.astype(jnp.bfloat16), Mp, Kp)
    w_p = _pad2d(w.astype(jnp.bfloat16), Kp, N)
    b_p = b.reshape(1, N).astype(jnp.float32)

    grid = (N // tn, Mp // tm)   # N outer, M inner
    out, colsum, colsumsq = pl.pallas_call(
        _gemm_bias_stats_kernel,
        out_shape=(
            jax.ShapeDtypeStruct((Mp, N), jnp.float32),
            jax.ShapeDtypeStruct((1, N), jnp.float32),
            jax.ShapeDtypeStruct((1, N), jnp.float32),
        ),
        grid_spec=pltpu.PrefetchScalarGridSpec(
            num_scalar_prefetch=0,
            grid=grid,
            in_specs=[
                pl.BlockSpec((tm, Kp), lambda j, i: (i, 0)),
                pl.BlockSpec((Kp, tn), lambda j, i: (0, j)),
                pl.BlockSpec((1, tn), lambda j, i: (0, j)),
            ],
            out_specs=(
                pl.BlockSpec((tm, tn), lambda j, i: (i, j)),
                pl.BlockSpec((1, tn), lambda j, i: (0, j)),
                pl.BlockSpec((1, tn), lambda j, i: (0, j)),
            ),
        ),
        compiler_params=pltpu.CompilerParams(
            dimension_semantics=("parallel", "arbitrary"),
            vmem_limit_bytes=_VMEM_LIMIT,
        ),
        cost_estimate=pl.CostEstimate(
            flops=2 * Mp * N * Kp,
            transcendentals=0,
            bytes_accessed=a_p.size * 2 + w_p.size * 2 + Mp * N * 4 + 3 * N * 4,
        ),
    )(a_p, w_p, b_p)
    return out, colsum, colsumsq, Mp


def _scale_shift_lrelu_kernel(x_ref, sc_ref, sh_ref, o_ref, *, slope):
    y = x_ref[...] * sc_ref[...] + sh_ref[...]
    o_ref[...] = jnp.where(y >= 0.0, y, slope * y).astype(o_ref.dtype)


def bn_lrelu_apply(x_pad, scale, shift, *, slope=0.2):
    """Tiled normalize (precomputed per-column scale/shift) + LeakyReLU -> bf16."""
    Mp, N = x_pad.shape
    tm = _largest_divisor_tile(Mp, cap=1024)   # mem-bound pass: bigger tiles
    grid = (Mp // tm,)
    return pl.pallas_call(
        functools.partial(_scale_shift_lrelu_kernel, slope=slope),
        out_shape=jax.ShapeDtypeStruct((Mp, N), jnp.bfloat16),
        grid_spec=pltpu.PrefetchScalarGridSpec(
            num_scalar_prefetch=0,
            grid=grid,
            in_specs=[
                pl.BlockSpec((tm, N), lambda i: (i, 0)),
                pl.BlockSpec((1, N), lambda i: (0, 0)),
                pl.BlockSpec((1, N), lambda i: (0, 0)),
            ],
            out_specs=pl.BlockSpec((tm, N), lambda i: (i, 0)),
        ),
        compiler_params=pltpu.CompilerParams(
            dimension_semantics=("parallel",),
            vmem_limit_bytes=_VMEM_LIMIT,
        ),
        cost_estimate=pl.CostEstimate(
            flops=3 * Mp * N,
            transcendentals=0,
            bytes_accessed=Mp * N * 4 + Mp * N * 2 + 2 * N * 4,
        ),
    )(x_pad, scale, shift)


def _conv_pool_kernel(a_ref, w_ref, bias_ref, o_ref, *, inv_count):
    # Fused Conv2d(Cout=1) + AdaptiveAvgPool2d(1).
    # grid = (B, M_tiles); output (Bp,128) is resident across the whole grid and used
    # as the accumulator (lane-dense store; no (M,1) lane-sparse intermediate).
    b = pl.program_id(0)
    m = pl.program_id(1)
    nb = pl.num_programs(0)
    nm = pl.num_programs(1)

    @pl.when((b == 0) & (m == 0))
    def _():
        o_ref[...] = jnp.zeros_like(o_ref)

    a = a_ref[0].astype(jnp.float32)        # (tl, Kp)
    w = w_ref[...].astype(jnp.float32)      # (1, Kp)
    partial = jnp.sum(a * w) * inv_count    # scalar contribution to the batch mean

    rows = jax.lax.broadcasted_iota(jnp.int32, o_ref.shape, 0)
    o_ref[...] += jnp.where(rows == b, partial, 0.0)

    @pl.when((b == nb - 1) & (m == nm - 1))
    def _():
        o_ref[...] += bias_ref[...]


def conv4_avgpool(h_nhwc, w_oihw, bias):
    """Conv2d(256->1, k=4, s=1, p=1) fused with AdaptiveAvgPool2d(1) -> (B, 1)."""
    B = h_nhwc.shape[0]
    cout, cin, k, _ = w_oihw.shape
    a, _, Ho, Wo = im2col_nhwc(h_nhwc, k, 1, 1)
    L = Ho * Wo
    K = k * k * cin
    Kp = _round_up(K, 128)
    tl, Lp = _pick_m_tile(L)
    Bp = _round_up(B, 8)

    a3 = a.reshape(B, L, K).astype(jnp.bfloat16)
    a3 = jnp.pad(a3, ((0, 0), (0, Lp - L), (0, Kp - K)))
    w_row = jnp.transpose(w_oihw, (2, 3, 1, 0)).reshape(1, K).astype(jnp.bfloat16)
    w_row = jnp.pad(w_row, ((0, 0), (0, Kp - K)))
    bias_row = jnp.tile(bias.reshape(1, 1).astype(jnp.float32), (1, 128))

    grid = (B, Lp // tl)
    out = pl.pallas_call(
        functools.partial(_conv_pool_kernel, inv_count=1.0 / L),
        out_shape=jax.ShapeDtypeStruct((Bp, 128), jnp.float32),
        grid_spec=pltpu.PrefetchScalarGridSpec(
            num_scalar_prefetch=0,
            grid=grid,
            in_specs=[
                pl.BlockSpec((1, tl, Kp), lambda bb, m: (bb, m, 0)),
                pl.BlockSpec((1, Kp), lambda bb, m: (0, 0)),
                pl.BlockSpec((1, 128), lambda bb, m: (0, 0)),
            ],
            out_specs=pl.BlockSpec((Bp, 128), lambda bb, m: (0, 0)),
        ),
        compiler_params=pltpu.CompilerParams(
            dimension_semantics=("arbitrary", "arbitrary"),
            vmem_limit_bytes=_VMEM_LIMIT,
        ),
        cost_estimate=pl.CostEstimate(
            flops=2 * B * Lp * Kp,
            transcendentals=0,
            bytes_accessed=a3.size * 2 + Kp * 2 + Bp * 128 * 4,
        ),
    )(a3, w_row, bias_row)
    return out[:B, :1]


# ------------------------------- glue (JAX) --------------------------------

def im2col_nhwc(x, k, stride, pad):
    """x: (B, H, W, C) -> patches (B*Ho*Wo, k*k*C) (kernel pos outer, C inner)."""
    x = jnp.pad(x, ((0, 0), (pad, pad), (pad, pad), (0, 0)))
    B, Hp, Wp, C = x.shape
    Ho = (Hp - k) // stride + 1
    Wo = (Wp - k) // stride + 1
    cols = []
    for i in range(k):
        for j in range(k):
            cols.append(x[:, i:i + stride * Ho:stride, j:j + stride * Wo:stride, :])
    patches = jnp.stack(cols, axis=3)                  # (B, Ho, Wo, k*k, C)
    return patches.reshape(B * Ho * Wo, k * k * C), B, Ho, Wo


def _bn_scale_shift(colsum, colsumsq, m_valid, n_pad, bias, gamma, beta, eps=1e-5):
    # Zero-padded GEMM rows evaluate to exactly `bias`; remove them analytically so
    # the batch statistics are taken over the m_valid real rows only.
    b = bias.astype(jnp.float32)
    s = colsum[0] - n_pad * b
    ss = colsumsq[0] - n_pad * b * b
    mean = s / m_valid
    var = jnp.maximum(ss / m_valid - mean * mean, 0.0)   # biased variance (train mode)
    inv = jax.lax.rsqrt(var + eps)
    scale = gamma * inv
    shift = beta - mean * scale
    return scale.reshape(1, -1), shift.reshape(1, -1)


def _conv_bn_lrelu(h_nhwc, w_oihw, bias, gamma, beta):
    cout, _, k, _ = w_oihw.shape
    a, B, Ho, Wo = im2col_nhwc(h_nhwc, k, 2, 1)
    M = B * Ho * Wo
    w_mat = jnp.transpose(w_oihw, (2, 3, 1, 0)).reshape(-1, cout)
    o_pad, colsum, colsumsq, Mp = gemm_bias_stats(a, w_mat, bias)
    scale, shift = _bn_scale_shift(colsum, colsumsq, M, Mp - M, bias, gamma, beta)
    y_pad = bn_lrelu_apply(o_pad, scale, shift, slope=0.2)
    return y_pad[:M].reshape(B, Ho, Wo, cout)


def init_params(key):
    def conv_params(key, cout, cin, k):
        k1, k2 = jax.random.split(key)
        bound = 1.0 / math.sqrt(cin * k * k)           # PyTorch default conv init
        w = jax.random.uniform(k1, (cout, cin, k, k), jnp.float32, -bound, bound)
        b = jax.random.uniform(k2, (cout,), jnp.float32, -bound, bound)
        return w, b

    keys = jax.random.split(key, 4)
    p = {}
    p["w1"], p["b1"] = conv_params(keys[0], 64, 6, 4)
    p["w2"], p["b2"] = conv_params(keys[1], 128, 64, 4)
    p["w3"], p["b3"] = conv_params(keys[2], 256, 128, 4)
    p["w4"], p["b4"] = conv_params(keys[3], 1, 256, 4)
    p["g2"], p["be2"] = jnp.ones((128,), jnp.float32), jnp.zeros((128,), jnp.float32)
    p["g3"], p["be3"] = jnp.ones((256,), jnp.float32), jnp.zeros((256,), jnp.float32)
    return p


def discriminator_forward(params, x_nchw, y_nchw):
    combined = jnp.concatenate([x_nchw, y_nchw], axis=1)            # (B, 6, H, W)
    h = jnp.transpose(combined, (0, 2, 3, 1)).astype(jnp.float32)   # NHWC

    # conv1 + LeakyReLU(0.2)  -> bf16 activation (next GEMM consumes bf16 anyway)
    a, B, Ho, Wo = im2col_nhwc(h, 4, 2, 1)
    w1 = jnp.transpose(params["w1"], (2, 3, 1, 0)).reshape(-1, 64)
    h = gemm_bias_lrelu(a, w1, params["b1"], slope=0.2).reshape(B, Ho, Wo, 64)

    # conv2 + BatchNorm(train) + LeakyReLU   (stats fused into the GEMM epilogue)
    h = _conv_bn_lrelu(h, params["w2"], params["b2"], params["g2"], params["be2"])

    # conv3 + BatchNorm(train) + LeakyReLU
    h = _conv_bn_lrelu(h, params["w3"], params["b3"], params["g3"], params["be3"])

    # conv4 (Cout=1, stride 1) fused with AdaptiveAvgPool2d(1) -> (B, 1)
    return conv4_avgpool(h, params["w4"], params["b4"])


# ------------------------- pure-JAX reference check -------------------------

def reference_forward(params, x, y):
    h = jnp.concatenate([x, y], axis=1).astype(jnp.float32)

    def conv(v, w, b, s, p):
        out = jax.lax.conv_general_dilated(
            v, w, (s, s), [(p, p), (p, p)],
            dimension_numbers=("NCHW", "OIHW", "NCHW"))
        return out + b.reshape(1, -1, 1, 1)

    lrelu = lambda v: jnp.where(v >= 0, v, 0.2 * v)

    def bn(v, g, be, eps=1e-5):
        mean = jnp.mean(v, axis=(0, 2, 3), keepdims=True)
        var = jnp.mean((v - mean) ** 2, axis=(0, 2, 3), keepdims=True)
        return (v - mean) / jnp.sqrt(var + eps) * g.reshape(1, -1, 1, 1) + be.reshape(1, -1, 1, 1)

    h = lrelu(conv(h, params["w1"], params["b1"], 2, 1))
    h = lrelu(bn(conv(h, params["w2"], params["b2"], 2, 1), params["g2"], params["be2"]))
    h = lrelu(bn(conv(h, params["w3"], params["b3"], 2, 1), params["g3"], params["be3"]))
    h = conv(h, params["w4"], params["b4"], 1, 1)
    return jnp.mean(h, axis=(2, 3)).reshape(-1, 1)


if __name__ == "__main__":
    key = jax.random.PRNGKey(0)
    kx, ky, kp = jax.random.split(key, 3)

    B, C, H, W = 2, 3, 16, 16
    x = jax.random.normal(kx, (B, C, H, W), jnp.float32)
    y = jax.random.normal(ky, (B, C, H, W), jnp.float32)
    params = init_params(kp)

    fwd = jax.jit(discriminator_forward)
    out = jax.block_until_ready(fwd(params, x, y))
    assert out.shape == (B, 1), out.shape

    ref = jax.block_until_ready(jax.jit(reference_forward)(params, x, y))
    # Tolerance relaxed vs pure fp32: GEMM inputs / inter-layer activations are bf16
    # (fp32 accumulate and fp32 BN stats inside the kernels).
    np.testing.assert_allclose(np.asarray(out), np.asarray(ref), rtol=5e-2, atol=5e-2)

    print("KERNEL_OK")
</pallas_src>

<mosaic_0001>
module attributes {stable_mosaic.version = 11 : i64} {
  func.func @_gemm_bias_lrelu_kernel(%arg0: i32, %arg1: i32, %arg2: memref<128x128xbf16, #tpu.memory_space<vmem>>, %arg3: memref<128x64xbf16, #tpu.memory_space<vmem>>, %arg4: memref<1x64xf32, #tpu.memory_space<vmem>>, %arg5: memref<128x64xbf16, #tpu.memory_space<vmem>>) attributes {dimension_semantics = [#tpu.dimension_semantics<parallel>, #tpu.dimension_semantics<parallel>], iteration_bounds = array<i64: 1, 1>, scalar_prefetch = 0 : i64, scratch_operands = 0 : i64, tpu.core_type = #tpu.core_type<tc>, window_params = [{transform_indices = @transform_0, window_bounds = array<i64: 128, 128>}, {transform_indices = @transform_1, window_bounds = array<i64: 128, 64>}, {transform_indices = @transform_2, window_bounds = array<i64: 1, 64>}, {transform_indices = @transform_3, window_bounds = array<i64: 128, 64>}]} {
    %c0 = arith.constant 0 : index
    %c0_0 = arith.constant 0 : index
    %0 = vector.load %arg2[%c0, %c0_0] : memref<128x128xbf16, #tpu.memory_space<vmem>>, vector<128x128xbf16>
    %c0_1 = arith.constant 0 : index
    %c0_2 = arith.constant 0 : index
    %1 = vector.load %arg3[%c0_1, %c0_2] : memref<128x64xbf16, #tpu.memory_space<vmem>>, vector<128x64xbf16>
    %cst = arith.constant dense<0.000000e+00> : vector<128x64xf32>
    %2 = tpu.matmul %0, %1, %cst {dimension_numbers = #tpu.dot_dimension_numbers<[1], [0], [0], [1], [0, 0, 1, 1], [], []>} : vector<128x128xbf16>, vector<128x64xbf16>, vector<128x64xf32> -> vector<128x64xf32>
    %c0_3 = arith.constant 0 : index
    %c0_4 = arith.constant 0 : index
    %3 = vector.load %arg4[%c0_3, %c0_4] : memref<1x64xf32, #tpu.memory_space<vmem>>, vector<1x64xf32>
    %4 = vector.broadcast %3 : vector<1x64xf32> to vector<128x64xf32>
    %5 = arith.addf %2, %4 : vector<128x64xf32>
    %cst_5 = arith.constant 0.000000e+00 : f32
    %6 = vector.broadcast %cst_5 : f32 to vector<128x64xf32>
    %7 = arith.cmpf oge, %5, %6 : vector<128x64xf32>
    %cst_6 = arith.constant 2.000000e-01 : f32
    %8 = vector.broadcast %cst_6 : f32 to vector<128x64xf32>
    %9 = arith.mulf %8, %5 : vector<128x64xf32>
    %10 = arith.select %7, %5, %9 : vector<128x64xi1>, vector<128x64xf32>
    %11 = arith.truncf %10 : vector<128x64xf32> to vector<128x64xbf16>
    %c0_7 = arith.constant 0 : index
    %c0_8 = arith.constant 0 : index
    %12 = vector.load %arg5[%c0_7, %c0_8] : memref<128x64xbf16, #tpu.memory_space<vmem>>, vector<128x64xbf16>
    tpu.vector_store %arg5[%c0_7, %c0_8], %11 {strides = array<i32>} : memref<128x64xbf16, #tpu.memory_space<vmem>>, vector<128x64xbf16>,
    return
  }
  func.func @transform_0(%arg0: i32, %arg1: i32) -> (i32, i32) {
    %c0_i32 = arith.constant 0 : i32
    %c0_i32_0 = arith.constant 0 : i32
    return %arg0, %c0_i32 : i32, i32
  }
  func.func @transform_1(%arg0: i32, %arg1: i32) -> (i32, i32) {
    %c0_i32 = arith.constant 0 : i32
    %c0_i32_0 = arith.constant 0 : i32
    return %c0_i32, %arg1 : i32, i32
  }
  func.func @transform_2(%arg0: i32, %arg1: i32) -> (i32, i32) {
    %c0_i32 = arith.constant 0 : i32
    %c0_i32_0 = arith.constant 0 : i32
    return %c0_i32, %arg1 : i32, i32
  }
  func.func @transform_3(%arg0: i32, %arg1: i32) -> (i32, i32) {
    %c0_i32 = arith.constant 0 : i32
    return %arg0, %arg1 : i32, i32
  }
}

module attributes {stable_mosaic.version = 11 : i64} {
  func.func @_scale_shift_lrelu_kernel(%arg0: i32, %arg1: memref<32x128xf32, #tpu.memory_space<vmem>>, %arg2: memref<1x128xf32, #tpu.memory_space<vmem>>, %arg3: memref<1x128xf32, #tpu.memory_space<vmem>>, %arg4: memref<32x128xbf16, #tpu.memory_space<vmem>>) attributes {dimension_semantics = [#tpu.dimension_semantics<parallel>], iteration_bounds = array<i64: 1>, scalar_prefetch = 0 : i64, scratch_operands = 0 : i64, tpu.core_type = #tpu.core_type<tc>, window_params = [{transform_indices = @transform_0, window_bounds = array<i64: 32, 128>}, {pipeline_mode = #tpu.pipeline_mode<synchronous>, transform_indices = @transform_1, window_bounds = array<i64: 1, 128>}, {pipeline_mode = #tpu.pipeline_mode<synchronous>, transform_indices = @transform_2, window_bounds = array<i64: 1, 128>}, {transform_indices = @transform_3, window_bounds = array<i64: 32, 128>}]} {
    %c0 = arith.constant 0 : index
    %c0_0 = arith.constant 0 : index
    %0 = vector.load %arg1[%c0, %c0_0] : memref<32x128xf32, #tpu.memory_space<vmem>>, vector<32x128xf32>
    %c0_1 = arith.constant 0 : index
    %c0_2 = arith.constant 0 : index
    %1 = vector.load %arg2[%c0_1, %c0_2] : memref<1x128xf32, #tpu.memory_space<vmem>>, vector<1x128xf32>
    %2 = vector.broadcast %1 : vector<1x128xf32> to vector<32x128xf32>
    %3 = arith.mulf %0, %2 : vector<32x128xf32>
    %c0_3 = arith.constant 0 : index
    %c0_4 = arith.constant 0 : index
    %4 = vector.load %arg3[%c0_3, %c0_4] : memref<1x128xf32, #tpu.memory_space<vmem>>, vector<1x128xf32>
    %5 = vector.broadcast %4 : vector<1x128xf32> to vector<32x128xf32>
    %6 = arith.addf %3, %5 : vector<32x128xf32>
    %cst = arith.constant 0.000000e+00 : f32
    %7 = vector.broadcast %cst : f32 to vector<32x128xf32>
    %8 = arith.cmpf oge, %6, %7 : vector<32x128xf32>
    %cst_5 = arith.constant 2.000000e-01 : f32
    %9 = vector.broadcast %cst_5 : f32 to vector<32x128xf32>
    %10 = arith.mulf %9, %6 : vector<32x128xf32>
    %11 = arith.select %8, %6, %10 : vector<32x128xi1>, vector<32x128xf32>
    %12 = arith.truncf %11 : vector<32x128xf32> to vector<32x128xbf16>
    %c0_6 = arith.constant 0 : index
    %c0_7 = arith.constant 0 : index
    %13 = vector.load %arg4[%c0_6, %c0_7] : memref<32x128xbf16, #tpu.memory_space<vmem>>, vector<32x128xbf16>
    tpu.vector_store %arg4[%c0_6, %c0_7], %12 {strides = array<i32>} : memref<32x128xbf16, #tpu.memory_space<vmem>>, vector<32x128xbf16>,
    return
  }
  func.func @transform_0(%arg0: i32) -> (i32, i32) {
    %c0_i32 = arith.constant 0 : i32
    %c0_i32_0 = arith.constant 0 : i32
    return %arg0, %c0_i32 : i32, i32
  }
  func.func @transform_1(%arg0: i32) -> (i32, i32) {
    %c0_i32 = arith.constant 0 : i32
    %c0_i32_0 = arith.constant 0 : i32
    %c0_i32_1 = arith.constant 0 : i32
    return %c0_i32, %c0_i32_0 : i32, i32
  }
  func.func @transform_2(%arg0: i32) -> (i32, i32) {
    %c0_i32 = arith.constant 0 : i32
    %c0_i32_0 = arith.constant 0 : i32
    %c0_i32_1 = arith.constant 0 : i32
    return %c0_i32, %c0_i32_0 : i32, i32
  }
  func.func @transform_3(%arg0: i32) -> (i32, i32) {
    %c0_i32 = arith.constant 0 : i32
    %c0_i32_0 = arith.constant 0 : i32
    return %arg0, %c0_i32 : i32, i32
  }
}

module attributes {stable_mosaic.version = 11 : i64} {
  func.func @_gemm_bias_stats_kernel(%arg0: i32, %arg1: i32, %arg2: memref<32x1024xbf16, #tpu.memory_space<vmem>>, %arg3: memref<1024x128xbf16, #tpu.memory_space<vmem>>, %arg4: memref<1x128xf32, #tpu.memory_space<vmem>>, %arg5: memref<32x128xf32, #tpu.memory_space<vmem>>, %arg6: memref<1x128xf32, #tpu.memory_space<vmem>>, %arg7: memref<1x128xf32, #tpu.memory_space<vmem>>) attributes {dimension_semantics = [#tpu.dimension_semantics<parallel>, #tpu.dimension_semantics<arbitrary>], iteration_bounds = array<i64: 1, 1>, scalar_prefetch = 0 : i64, scratch_operands = 0 : i64, tpu.core_type = #tpu.core_type<tc>, window_params = [{transform_indices = @transform_0, window_bounds = array<i64: 32, 1024>}, {transform_indices = @transform_1, window_bounds = array<i64: 1024, 128>}, {transform_indices = @transform_2, window_bounds = array<i64: 1, 128>}, {transform_indices = @transform_3, window_bounds = array<i64: 32, 128>}, {transform_indices = @transform_4, window_bounds = array<i64: 1, 128>}, {transform_indices = @transform_5, window_bounds = array<i64: 1, 128>}]} {
    %c0 = arith.constant 0 : index
    %c0_0 = arith.constant 0 : index
    %0 = vector.load %arg2[%c0, %c0_0] : memref<32x1024xbf16, #tpu.memory_space<vmem>>, vector<32x1024xbf16>
    %c0_1 = arith.constant 0 : index
    %c0_2 = arith.constant 0 : index
    %1 = vector.load %arg3[%c0_1, %c0_2] : memref<1024x128xbf16, #tpu.memory_space<vmem>>, vector<1024x128xbf16>
    %cst = arith.constant dense<0.000000e+00> : vector<32x128xf32>
    %2 = tpu.matmul %0, %1, %cst {dimension_numbers = #tpu.dot_dimension_numbers<[1], [0], [0], [1], [0, 0, 1, 1], [], []>} : vector<32x1024xbf16>, vector<1024x128xbf16>, vector<32x128xf32> -> vector<32x128xf32>
    %c0_3 = arith.constant 0 : index
    %c0_4 = arith.constant 0 : index
    %3 = vector.load %arg4[%c0_3, %c0_4] : memref<1x128xf32, #tpu.memory_space<vmem>>, vector<1x128xf32>
    %4 = vector.broadcast %3 : vector<1x128xf32> to vector<32x128xf32>
    %5 = arith.addf %2, %4 : vector<32x128xf32>
    %c0_5 = arith.constant 0 : index
    %c0_6 = arith.constant 0 : index
    %6 = vector.load %arg5[%c0_5, %c0_6] : memref<32x128xf32, #tpu.memory_space<vmem>>, vector<32x128xf32>
    tpu.vector_store %arg5[%c0_5, %c0_6], %5 {strides = array<i32>} : memref<32x128xf32, #tpu.memory_space<vmem>>, vector<32x128xf32>,
    %cst_7 = arith.constant dense<0.000000e+00> : vector<128xf32>
    %7 = vector.multi_reduction <add>, %5, %cst_7 [0] : vector<32x128xf32> to vector<128xf32>
    %8 = vector.shape_cast %7 : vector<128xf32> to vector<1x128xf32>
    %9 = arith.mulf %5, %5 : vector<32x128xf32>
    %cst_8 = arith.constant dense<0.000000e+00> : vector<128xf32>
    %10 = vector.multi_reduction <add>, %9, %cst_8 [0] : vector<32x128xf32> to vector<128xf32>
    %11 = vector.shape_cast %10 : vector<128xf32> to vector<1x128xf32>
    %c0_i32 = arith.constant 0 : i32
    %12 = arith.cmpi eq, %arg1, %c0_i32 : i32
    %13 = arith.extui %12 : i1 to i32
    %c0_i32_9 = arith.constant 0 : i32
    %14 = arith.cmpi ne, %13, %c0_i32_9 : i32
    scf.if %14 {
      %c0_12 = arith.constant 0 : index
      %c0_13 = arith.constant 0 : index
      %18 = vector.load %arg6[%c0_12, %c0_13] : memref<1x128xf32, #tpu.memory_space<vmem>>, vector<1x128xf32>
      tpu.vector_store %arg6[%c0_12, %c0_13], %8 {strides = array<i32>} : memref<1x128xf32, #tpu.memory_space<vmem>>, vector<1x128xf32>,
      %c0_14 = arith.constant 0 : index
      %c0_15 = arith.constant 0 : index
      %19 = vector.load %arg7[%c0_14, %c0_15] : memref<1x128xf32, #tpu.memory_space<vmem>>, vector<1x128xf32>
      tpu.vector_store %arg7[%c0_14, %c0_15], %11 {strides = array<i32>} : memref<1x128xf32, #tpu.memory_space<vmem>>, vector<1x128xf32>,
    } else {
    }
    %c0_i32_10 = arith.constant 0 : i32
    %15 = arith.cmpi sgt, %arg1, %c0_i32_10 : i32
    %16 = arith.extui %15 : i1 to i32
    %c0_i32_11 = arith.constant 0 : i32
    %17 = arith.cmpi ne, %16, %c0_i32_11 : i32
    scf.if %17 {
      %c0_12 = arith.constant 0 : index
      %c0_13 = arith.constant 0 : index
      %18 = vector.load %arg6[%c0_12, %c0_13] : memref<1x128xf32, #tpu.memory_space<vmem>>, vector<1x128xf32>
      %19 = arith.addf %18, %8 : vector<1x128xf32>
      %c0_14 = arith.constant 0 : index
      %c0_15 = arith.constant 0 : index
      %20 = vector.load %arg6[%c0_14, %c0_15] : memref<1x128xf32, #tpu.memory_space<vmem>>, vector<1x128xf32>
      tpu.vector_store %arg6[%c0_14, %c0_15], %19 {strides = array<i32>} : memref<1x128xf32, #tpu.memory_space<vmem>>, vector<1x128xf32>,
      %c0_16 = arith.constant 0 : index
      %c0_17 = arith.constant 0 : index
      %21 = vector.load %arg7[%c0_16, %c0_17] : memref<1x128xf32, #tpu.memory_space<vmem>>, vector<1x128xf32>
      %22 = arith.addf %21, %11 : vector<1x128xf32>
      %c0_18 = arith.constant 0 : index
      %c0_19 = arith.constant 0 : index
      %23 = vector.load %arg7[%c0_18, %c0_19] : memref<1x128xf32, #tpu.memory_space<vmem>>, vector<1x128xf32>
      tpu.vector_store %arg7[%c0_18, %c0_19], %22 {strides = array<i32>} : memref<1x128xf32, #tpu.memory_space<vmem>>, vector<1x128xf32>,
    } else {
    }
    return
  }
  func.func @transform_0(%arg0: i32, %arg1: i32) -> (i32, i32) {
    %c0_i32 = arith.constant 0 : i32
    %c0_i32_0 = arith.constant 0 : i32
    return %arg1, %c0_i32 : i32, i32
  }
  func.func @transform_1(%arg0: i32, %arg1: i32) -> (i32, i32) {
    %c0_i32 = arith.constant 0 : i32
    %c0_i32_0 = arith.constant 0 : i32
    return %c0_i32, %arg0 : i32, i32
  }
  func.func @transform_2(%arg0: i32, %arg1: i32) -> (i32, i32) {
    %c0_i32 = arith.constant 0 : i32
    %c0_i32_0 = arith.constant 0 : i32
    return %c0_i32, %arg0 : i32, i32
  }
  func.func @transform_3(%arg0: i32, %arg1: i32) -> (i32, i32) {
    %c0_i32 = arith.constant 0 : i32
    return %arg1, %arg0 : i32, i32
  }
  func.func @transform_4(%arg0: i32, %arg1: i32) -> (i32, i32) {
    %c0_i32 = arith.constant 0 : i32
    %c0_i32_0 = arith.constant 0 : i32
    return %c0_i32, %arg0 : i32, i32
  }
  func.func @transform_5(%arg0: i32, %arg1: i32) -> (i32, i32) {
    %c0_i32 = arith.constant 0 : i32
    %c0_i32_0 = arith.constant 0 : i32
    return %c0_i32, %arg0 : i32, i32
  }
}

module attributes {stable_mosaic.version = 11 : i64} {
  func.func @_gemm_bias_stats_kernel(%arg0: i32, %arg1: i32, %arg2: memref<8x2048xbf16, #tpu.memory_space<vmem>>, %arg3: memref<2048x256xbf16, #tpu.memory_space<vmem>>, %arg4: memref<1x256xf32, #tpu.memory_space<vmem>>, %arg5: memref<8x256xf32, #tpu.memory_space<vmem>>, %arg6: memref<1x256xf32, #tpu.memory_space<vmem>>, %arg7: memref<1x256xf32, #tpu.memory_space<vmem>>) attributes {dimension_semantics = [#tpu.dimension_semantics<parallel>, #tpu.dimension_semantics<arbitrary>], iteration_bounds = array<i64: 1, 1>, scalar_prefetch = 0 : i64, scratch_operands = 0 : i64, tpu.core_type = #tpu.core_type<tc>, window_params = [{transform_indices = @transform_0, window_bounds = array<i64: 8, 2048>}, {transform_indices = @transform_1, window_bounds = array<i64: 2048, 256>}, {transform_indices = @transform_2, window_bounds = array<i64: 1, 256>}, {transform_indices = @transform_3, window_bounds = array<i64: 8, 256>}, {transform_indices = @transform_4, window_bounds = array<i64: 1, 256>}, {transform_indices = @transform_5, window_bounds = array<i64: 1, 256>}]} {
    %c0 = arith.constant 0 : index
    %c0_0 = arith.constant 0 : index
    %0 = vector.load %arg2[%c0, %c0_0] : memref<8x2048xbf16, #tpu.memory_space<vmem>>, vector<8x2048xbf16>
    %c0_1 = arith.constant 0 : index
    %c0_2 = arith.constant 0 : index
    %1 = vector.load %arg3[%c0_1, %c0_2] : memref<2048x256xbf16, #tpu.memory_space<vmem>>, vector<2048x256xbf16>
    %cst = arith.constant dense<0.000000e+00> : vector<8x256xf32>
    %2 = tpu.matmul %0, %1, %cst {dimension_numbers = #tpu.dot_dimension_numbers<[1], [0], [0], [1], [0, 0, 1, 1], [], []>} : vector<8x2048xbf16>, vector<2048x256xbf16>, vector<8x256xf32> -> vector<8x256xf32>
    %c0_3 = arith.constant 0 : index
    %c0_4 = arith.constant 0 : index
    %3 = vector.load %arg4[%c0_3, %c0_4] : memref<1x256xf32, #tpu.memory_space<vmem>>, vector<1x256xf32>
    %4 = vector.broadcast %3 : vector<1x256xf32> to vector<8x256xf32>
    %5 = arith.addf %2, %4 : vector<8x256xf32>
    %c0_5 = arith.constant 0 : index
    %c0_6 = arith.constant 0 : index
    %6 = vector.load %arg5[%c0_5, %c0_6] : memref<8x256xf32, #tpu.memory_space<vmem>>, vector<8x256xf32>
    tpu.vector_store %arg5[%c0_5, %c0_6], %5 {strides = array<i32>} : memref<8x256xf32, #tpu.memory_space<vmem>>, vector<8x256xf32>,
    %cst_7 = arith.constant dense<0.000000e+00> : vector<256xf32>
    %7 = vector.multi_reduction <add>, %5, %cst_7 [0] : vector<8x256xf32> to vector<256xf32>
    %8 = vector.shape_cast %7 : vector<256xf32> to vector<1x256xf32>
    %9 = arith.mulf %5, %5 : vector<8x256xf32>
    %cst_8 = arith.constant dense<0.000000e+00> : vector<256xf32>
    %10 = vector.multi_reduction <add>, %9, %cst_8 [0] : vector<8x256xf32> to vector<256xf32>
    %11 = vector.shape_cast %10 : vector<256xf32> to vector<1x256xf32>
    %c0_i32 = arith.constant 0 : i32
    %12 = arith.cmpi eq, %arg1, %c0_i32 : i32
    %13 = arith.extui %12 : i1 to i32
    %c0_i32_9 = arith.constant 0 : i32
    %14 = arith.cmpi ne, %13, %c0_i32_9 : i32
    scf.if %14 {
      %c0_12 = arith.constant 0 : index
      %c0_13 = arith.constant 0 : index
      %18 = vector.load %arg6[%c0_12, %c0_13] : memref<1x256xf32, #tpu.memory_space<vmem>>, vector<1x256xf32>
      tpu.vector_store %arg6[%c0_12, %c0_13], %8 {strides = array<i32>} : memref<1x256xf32, #tpu.memory_space<vmem>>, vector<1x256xf32>,
      %c0_14 = arith.constant 0 : index
      %c0_15 = arith.constant 0 : index
      %19 = vector.load %arg7[%c0_14, %c0_15] : memref<1x256xf32, #tpu.memory_space<vmem>>, vector<1x256xf32>
      tpu.vector_store %arg7[%c0_14, %c0_15], %11 {strides = array<i32>} : memref<1x256xf32, #tpu.memory_space<vmem>>, vector<1x256xf32>,
    } else {
    }
    %c0_i32_10 = arith.constant 0 : i32
    %15 = arith.cmpi sgt, %arg1, %c0_i32_10 : i32
    %16 = arith.extui %15 : i1 to i32
    %c0_i32_11 = arith.constant 0 : i32
    %17 = arith.cmpi ne, %16, %c0_i32_11 : i32
    scf.if %17 {
      %c0_12 = arith.constant 0 : index
      %c0_13 = arith.constant 0 : index
      %18 = vector.load %arg6[%c0_12, %c0_13] : memref<1x256xf32, #tpu.memory_space<vmem>>, vector<1x256xf32>
      %19 = arith.addf %18, %8 : vector<1x256xf32>
      %c0_14 = arith.constant 0 : index
      %c0_15 = arith.constant 0 : index
      %20 = vector.load %arg6[%c0_14, %c0_15] : memref<1x256xf32, #tpu.memory_space<vmem>>, vector<1x256xf32>
      tpu.vector_store %arg6[%c0_14, %c0_15], %19 {strides = array<i32>} : memref<1x256xf32, #tpu.memory_space<vmem>>, vector<1x256xf32>,
      %c0_16 = arith.constant 0 : index
      %c0_17 = arith.constant 0 : index
      %21 = vector.load %arg7[%c0_16, %c0_17] : memref<1x256xf32, #tpu.memory_space<vmem>>, vector<1x256xf32>
      %22 = arith.addf %21, %11 : vector<1x256xf32>
      %c0_18 = arith.constant 0 : index
      %c0_19 = arith.constant 0 : index
      %23 = vector.load %arg7[%c0_18, %c0_19] : memref<1x256xf32, #tpu.memory_space<vmem>>, vector<1x256xf32>
      tpu.vector_store %arg7[%c0_18, %c0_19], %22 {strides = array<i32>} : memref<1x256xf32, #tpu.memory_space<vmem>>, vector<1x256xf32>,
    } else {
    }
    return
  }
  func.func @transform_0(%arg0: i32, %arg1: i32) -> (i32, i32) {
    %c0_i32 = arith.constant 0 : i32
    %c0_i32_0 = arith.constant 0 : i32
    return %arg1, %c0_i32 : i32, i32
  }
  func.func @transform_1(%arg0: i32, %arg1: i32) -> (i32, i32) {
    %c0_i32 = arith.constant 0 : i32
    %c0_i32_0 = arith.constant 0 : i32
    return %c0_i32, %arg0 : i32, i32
  }
  func.func @transform_2(%arg0: i32, %arg1: i32) -> (i32, i32) {
    %c0_i32 = arith.constant 0 : i32
    %c0_i32_0 = arith.constant 0 : i32
    return %c0_i32, %arg0 : i32, i32
  }
  func.func @transform_3(%arg0: i32, %arg1: i32) -> (i32, i32) {
    %c0_i32 = arith.constant 0 : i32
    return %arg1, %arg0 : i32, i32
  }
  func.func @transform_4(%arg0: i32, %arg1: i32) -> (i32, i32) {
    %c0_i32 = arith.constant 0 : i32
    %c0_i32_0 = arith.constant 0 : i32
    return %c0_i32, %arg0 : i32, i32
  }
  func.func @transform_5(%arg0: i32, %arg1: i32) -> (i32, i32) {
    %c0_i32 = arith.constant 0 : i32
    %c0_i32_0 = arith.constant 0 : i32
    return %c0_i32, %arg0 : i32, i32
  }
}

module attributes {stable_mosaic.version = 11 : i64} {
  func.func @_scale_shift_lrelu_kernel(%arg0: i32, %arg1: memref<8x256xf32, #tpu.memory_space<vmem>>, %arg2: memref<1x256xf32, #tpu.memory_space<vmem>>, %arg3: memref<1x256xf32, #tpu.memory_space<vmem>>, %arg4: memref<8x256xbf16, #tpu.memory_space<vmem>>) attributes {dimension_semantics = [#tpu.dimension_semantics<parallel>], iteration_bounds = array<i64: 1>, scalar_prefetch = 0 : i64, scratch_operands = 0 : i64, tpu.core_type = #tpu.core_type<tc>, window_params = [{transform_indices = @transform_0, window_bounds = array<i64: 8, 256>}, {pipeline_mode = #tpu.pipeline_mode<synchronous>, transform_indices = @transform_1, window_bounds = array<i64: 1, 256>}, {pipeline_mode = #tpu.pipeline_mode<synchronous>, transform_indices = @transform_2, window_bounds = array<i64: 1, 256>}, {transform_indices = @transform_3, window_bounds = array<i64: 8, 256>}]} {
    %c0 = arith.constant 0 : index
    %c0_0 = arith.constant 0 : index
    %0 = vector.load %arg1[%c0, %c0_0] : memref<8x256xf32, #tpu.memory_space<vmem>>, vector<8x256xf32>
    %c0_1 = arith.constant 0 : index
    %c0_2 = arith.constant 0 : index
    %1 = vector.load %arg2[%c0_1, %c0_2] : memref<1x256xf32, #tpu.memory_space<vmem>>, vector<1x256xf32>
    %2 = vector.broadcast %1 : vector<1x256xf32> to vector<8x256xf32>
    %3 = arith.mulf %0, %2 : vector<8x256xf32>
    %c0_3 = arith.constant 0 : index
    %c0_4 = arith.constant 0 : index
    %4 = vector.load %arg3[%c0_3, %c0_4] : memref<1x256xf32, #tpu.memory_space<vmem>>, vector<1x256xf32>
    %5 = vector.broadcast %4 : vector<1x256xf32> to vector<8x256xf32>
    %6 = arith.addf %3, %5 : vector<8x256xf32>
    %cst = arith.constant 0.000000e+00 : f32
    %7 = vector.broadcast %cst : f32 to vector<8x256xf32>
    %8 = arith.cmpf oge, %6, %7 : vector<8x256xf32>
    %cst_5 = arith.constant 2.000000e-01 : f32
    %9 = vector.broadcast %cst_5 : f32 to vector<8x256xf32>
    %10 = arith.mulf %9, %6 : vector<8x256xf32>
    %11 = arith.select %8, %6, %10 : vector<8x256xi1>, vector<8x256xf32>
    %12 = arith.truncf %11 : vector<8x256xf32> to vector<8x256xbf16>
    %c0_6 = arith.constant 0 : index
    %c0_7 = arith.constant 0 : index
    %13 = vector.load %arg4[%c0_6, %c0_7] : memref<8x256xbf16, #tpu.memory_space<vmem>>, vector<8x256xbf16>
    tpu.vector_store %arg4[%c0_6, %c0_7], %12 {strides = array<i32>} : memref<8x256xbf16, #tpu.memory_space<vmem>>, vector<8x256xbf16>,
    return
  }
  func.func @transform_0(%arg0: i32) -> (i32, i32) {
    %c0_i32 = arith.constant 0 : i32
    %c0_i32_0 = arith.constant 0 : i32
    return %arg0, %c0_i32 : i32, i32
  }
  func.func @transform_1(%arg0: i32) -> (i32, i32) {
    %c0_i32 = arith.constant 0 : i32
    %c0_i32_0 = arith.constant 0 : i32
    %c0_i32_1 = arith.constant 0 : i32
    return %c0_i32, %c0_i32_0 : i32, i32
  }
  func.func @transform_2(%arg0: i32) -> (i32, i32) {
    %c0_i32 = arith.constant 0 : i32
    %c0_i32_0 = arith.constant 0 : i32
    %c0_i32_1 = arith.constant 0 : i32
    return %c0_i32, %c0_i32_0 : i32, i32
  }
  func.func @transform_3(%arg0: i32) -> (i32, i32) {
    %c0_i32 = arith.constant 0 : i32
    %c0_i32_0 = arith.constant 0 : i32
    return %arg0, %c0_i32 : i32, i32
  }
}

module attributes {stable_mosaic.version = 11 : i64} {
  func.func @_conv_pool_kernel(%arg0: i32, %arg1: i32, %arg2: memref<1x8x4096xbf16, #tpu.memory_space<vmem>>, %arg3: memref<1x4096xbf16, #tpu.memory_space<vmem>>, %arg4: memref<1x128xf32, #tpu.memory_space<vmem>>, %arg5: memref<8x128xf32, #tpu.memory_space<vmem>>) attributes {dimension_semantics = [#tpu.dimension_semantics<arbitrary>, #tpu.dimension_semantics<arbitrary>], iteration_bounds = array<i64: 2, 1>, scalar_prefetch = 0 : i64, scratch_operands = 0 : i64, tpu.core_type = #tpu.core_type<tc>, window_params = [{transform_indices = @transform_0, window_bounds = array<i64: 1, 8, 4096>}, {pipeline_mode = #tpu.pipeline_mode<synchronous>, transform_indices = @transform_1, window_bounds = array<i64: 1, 4096>}, {pipeline_mode = #tpu.pipeline_mode<synchronous>, transform_indices = @transform_2, window_bounds = array<i64: 1, 128>}, {pipeline_mode = #tpu.pipeline_mode<synchronous>, transform_indices = @transform_3, window_bounds = array<i64: 8, 128>}]} {
    %c0_i32 = arith.constant 0 : i32
    %0 = arith.cmpi eq, %arg0, %c0_i32 : i32
    %c0_i32_0 = arith.constant 0 : i32
    %1 = arith.cmpi eq, %arg1, %c0_i32_0 : i32
    %2 = arith.andi %0, %1 : i1
    %3 = arith.extui %2 : i1 to i32
    %c0_i32_1 = arith.constant 0 : i32
    %4 = arith.cmpi ne, %3, %c0_i32_1 : i32
    scf.if %4 {
      %cst_14 = arith.constant 0.000000e+00 : f32
      %31 = vector.broadcast %cst_14 : f32 to vector<8x128xf32>
      %c0_15 = arith.constant 0 : index
      %c0_16 = arith.constant 0 : index
      %32 = vector.load %arg5[%c0_15, %c0_16] : memref<8x128xf32, #tpu.memory_space<vmem>>, vector<8x128xf32>
      tpu.vector_store %arg5[%c0_15, %c0_16], %31 {strides = array<i32>} : memref<8x128xf32, #tpu.memory_space<vmem>>, vector<8x128xf32>,
    } else {
    }
    %c0 = arith.constant 0 : index
    %c0_2 = arith.constant 0 : index
    %c0_3 = arith.constant 0 : index
    %5 = vector.load %arg2[%c0, %c0_2, %c0_3] : memref<1x8x4096xbf16, #tpu.memory_space<vmem>>, vector<1x8x4096xbf16>
    %6 = vector.shape_cast %5 : vector<1x8x4096xbf16> to vector<8x4096xbf16>
    %7 = arith.extf %6 : vector<8x4096xbf16> to vector<8x4096xf32>
    %c0_4 = arith.constant 0 : index
    %c0_5 = arith.constant 0 : index
    %8 = vector.load %arg3[%c0_4, %c0_5] : memref<1x4096xbf16, #tpu.memory_space<vmem>>, vector<1x4096xbf16>
    %9 = arith.extf %8 : vector<1x4096xbf16> to vector<1x4096xf32>
    %10 = vector.broadcast %9 : vector<1x4096xf32> to vector<8x4096xf32>
    %11 = arith.mulf %7, %10 : vector<8x4096xf32>
    %12 = vector.shape_cast %11 : vector<8x4096xf32> to vector<1x8x4096xf32>
    %cst = arith.constant dense<0.000000e+00> : vector<1xf32>
    %13 = vector.multi_reduction <add>, %12, %cst [1, 2] : vector<1x8x4096xf32> to vector<1xf32>
    %14 = vector.shape_cast %13 : vector<1xf32> to vector<1x1x1xf32>
    %15 = vector.extract %14[0, 0, 0] : f32 from vector<1x1x1xf32>
    %cst_6 = arith.constant 1.000000e+00 : f32
    %16 = arith.mulf %15, %cst_6 : f32
    %17 = tpu.iota {dimensions = array<i32: 0>} : vector<8x128xi32>
    %c0_7 = arith.constant 0 : index
    %c0_8 = arith.constant 0 : index
    %18 = vector.load %arg5[%c0_7, %c0_8] : memref<8x128xf32, #tpu.memory_space<vmem>>, vector<8x128xf32>
    %19 = vector.broadcast %arg0 : i32 to vector<8x128xi32>
    %20 = arith.cmpi eq, %17, %19 : vector<8x128xi32>
    %cst_9 = arith.constant 0.000000e+00 : f32
    %21 = vector.broadcast %16 : f32 to vector<8x128xf32>
    %22 = vector.broadcast %cst_9 : f32 to vector<8x128xf32>
    %23 = arith.select %20, %21, %22 : vector<8x128xi1>, vector<8x128xf32>
    %24 = arith.addf %18, %23 : vector<8x128xf32>
    %c0_10 = arith.constant 0 : index
    %c0_11 = arith.constant 0 : index
    %25 = vector.load %arg5[%c0_10, %c0_11] : memref<8x128xf32, #tpu.memory_space<vmem>>, vector<8x128xf32>
    tpu.vector_store %arg5[%c0_10, %c0_11], %24 {strides = array<i32>} : memref<8x128xf32, #tpu.memory_space<vmem>>, vector<8x128xf32>,
    %c1_i32 = arith.constant 1 : i32
    %26 = arith.cmpi eq, %arg0, %c1_i32 : i32
    %c0_i32_12 = arith.constant 0 : i32
    %27 = arith.cmpi eq, %arg1, %c0_i32_12 : i32
    %28 = arith.andi %26, %27 : i1
    %29 = arith.extui %28 : i1 to i32
    %c0_i32_13 = arith.constant 0 : i32
    %30 = arith.cmpi ne, %29, %c0_i32_13 : i32
    scf.if %30 {
      %c0_14 = arith.constant 0 : index
      %c0_15 = arith.constant 0 : index
      %31 = vector.load %arg5[%c0_14, %c0_15] : memref<8x128xf32, #tpu.memory_space<vmem>>, vector<8x128xf32>
      %c0_16 = arith.constant 0 : index
      %c0_17 = arith.constant 0 : index
      %32 = vector.load %arg4[%c0_16, %c0_17] : memref<1x128xf32, #tpu.memory_space<vmem>>, vector<1x128xf32>
      %33 = vector.broadcast %32 : vector<1x128xf32> to vector<8x128xf32>
      %34 = arith.addf %31, %33 : vector<8x128xf32>
      %c0_18 = arith.constant 0 : index
      %c0_19 = arith.constant 0 : index
      %35 = vector.load %arg5[%c0_18, %c0_19] : memref<8x128xf32, #tpu.memory_space<vmem>>, vector<8x128xf32>
      tpu.vector_store %arg5[%c0_18, %c0_19], %34 {strides = array<i32>} : memref<8x128xf32, #tpu.memory_space<vmem>>, vector<8x128xf32>,
    } else {
    }
    return
  }
  func.func @transform_0(%arg0: i32, %arg1: i32) -> (i32, i32, i32) {
    %c0_i32 = arith.constant 0 : i32
    %c0_i32_0 = arith.constant 0 : i32
    return %arg0, %arg1, %c0_i32 : i32, i32, i32
  }
  func.func @transform_1(%arg0: i32, %arg1: i32) -> (i32, i32) {
    %c0_i32 = arith.constant 0 : i32
    %c0_i32_0 = arith.constant 0 : i32
    %c0_i32_1 = arith.constant 0 : i32
    return %c0_i32, %c0_i32_0 : i32, i32
  }
  func.func @transform_2(%arg0: i32, %arg1: i32) -> (i32, i32) {
    %c0_i32 = arith.constant 0 : i32
    %c0_i32_0 = arith.constant 0 : i32
    %c0_i32_1 = arith.constant 0 : i32
    return %c0_i32, %c0_i32_0 : i32, i32
  }
  func.func @transform_3(%arg0: i32, %arg1: i32) -> (i32, i32) {
    %c0_i32 = arith.constant 0 : i32
    %c0_i32_0 = arith.constant 0 : i32
    %c0_i32_1 = arith.constant 0 : i32
    return %c0_i32, %c0_i32_0 : i32, i32
  }
}

</mosaic_0001>

<llo_original>
// kernel: discriminator_forward.6
$region0: #{discriminator_forward.6}
  #allocation0 [shape = 'u32[]', space=smem, size = 0x4, offset = 0x4, fixed_abs, tag = 'smem constant byte address 0x4 - core index']
  #allocation1 [shape = 'u32[72,128]{1,0:T(1,128)}', space=vmem, size = 0x9000, scoped, tag = 'internal scratch']
  %s0 = inlined_call_operand.vmem [shape: bf16[128,128], index: 0, kind: input, shape index: {}]
  %s1 = inlined_call_operand.vmem [shape: bf16[128,64], index: 1, kind: input, shape index: {}]
  %s2 = inlined_call_operand.vmem [shape: f32[1,64], index: 2, kind: input, shape index: {}]
  %s3 = inlined_call_operand.vmem [shape: bf16[128,64], index: 3, kind: output, shape index: {}]
  %s4 = sld [smem:[#allocation0]]
  $region22: #{discriminator_forward.6} parent=0
    _
  %s6 = ssub.s32 1, %s4
  %s7 = scalar_select 0, %s6, %s4
  // Predicated region
  $region2: #{discriminator_forward.6} parent=0 // pred_check
    _
  $region3: #{discriminator_forward.6} parent=0 // pred_check_branch
    %9 = sbr.rel (0) target = $region5
  $region4: #{discriminator_forward.6} parent=0 // pred_region
    _
  $region5: #{discriminator_forward.6} parent=0 // pred_fallthru
    _
  // Predicated region
  $region6: #{discriminator_forward.6} parent=0 // pred_check
    _
  $region7: #{discriminator_forward.6} parent=0 // pred_check_branch
    %11 = sbr.rel (0) target = $region9
  $region8: #{discriminator_forward.6} parent=0 // pred_region
    _
  $region9: #{discriminator_forward.6} parent=0 // pred_fallthru
    _
  // Predicated region
  $region10: #{discriminator_forward.6} parent=0 // pred_check
    _
  $region11: #{discriminator_forward.6} parent=0 // pred_check_branch
    %13 = sbr.rel (0) target = $region13
  $region12: #{discriminator_forward.6} parent=0 // pred_region
    _
  $region13: #{discriminator_forward.6} parent=0 // pred_fallthru
    _
  %v14 = vld [vmem:[%s0] sm:$0xf]
  %v15 = vld [vmem:[%s0 + $0x4] sm:$0xf]
  %v16 = vld [vmem:[%s0 + $0x8] sm:$0xf]
  %v17 = vld [vmem:[%s0 + $0xc] sm:$0xf]
  %v18 = vld [vmem:[%s0 + $0x10] sm:$0xf]
  %v19 = vld [vmem:[%s0 + $0x14] sm:$0xf]
  %v20 = vld [vmem:[%s0 + $0x18] sm:$0xf]
  %v21 = vld [vmem:[%s0 + $0x1c] sm:$0xf]
  %v22 = vld [vmem:[%s0 + $0x20] sm:$0xf]
  %v23 = vld [vmem:[%s0 + $0x24] sm:$0xf]
  %v24 = vld [vmem:[%s0 + $0x28] sm:$0xf]
  %v25 = vld [vmem:[%s0 + $0x2c] sm:$0xf]
  %v26 = vld [vmem:[%s0 + $0x30] sm:$0xf]
  %v27 = vld [vmem:[%s0 + $0x34] sm:$0xf]
  %v28 = vld [vmem:[%s0 + $0x38] sm:$0xf]
  %v29 = vld [vmem:[%s0 + $0x3c] sm:$0xf]
  %v30 = vld [vmem:[%s1] sm:$0xf]
  %v31 = vld [vmem:[%s1 + $0x4] sm:$0xf]
  %v32 = vld [vmem:[%s1 + $0x8] sm:$0xf]
  %v33 = vld [vmem:[%s1 + $0xc] sm:$0xf]
  %v34 = vld [vmem:[%s1 + $0x10] sm:$0xf]
  %v35 = vld [vmem:[%s1 + $0x14] sm:$0xf]
  %v36 = vld [vmem:[%s1 + $0x18] sm:$0xf]
  %v37 = vld [vmem:[%s1 + $0x1c] sm:$0xf]
  %v38 = vld [vmem:[%s1 + $0x20] sm:$0xf]
  %v39 = vld [vmem:[%s1 + $0x24] sm:$0xf]
  %v40 = vld [vmem:[%s1 + $0x28] sm:$0xf]
  %v41 = vld [vmem:[%s1 + $0x2c] sm:$0xf]
  %v42 = vld [vmem:[%s1 + $0x30] sm:$0xf]
  %v43 = vld [vmem:[%s1 + $0x34] sm:$0xf]
  %v44 = vld [vmem:[%s1 + $0x38] sm:$0xf]
  %v45 = vld [vmem:[%s1 + $0x3c] sm:$0xf]
  %v46 = vld [vmem:[%s2] sm:$0x1]
  %v48 = vperm.slane %v46, 0
  %v66 = vunpack.c.l.b16 %v14
  %v67 = vunpack.c.l.b16 %v15
  %v68 = vunpack.c.l.b16 %v16
  %v69 = vunpack.c.l.b16 %v17
  %v70 = vunpack.c.l.b16 %v18
  %v71 = vunpack.c.l.b16 %v19
  %v72 = vunpack.c.l.b16 %v20
  %v73 = vunpack.c.l.b16 %v21
  %v74 = vunpack.c.l.b16 %v22
  %v75 = vunpack.c.l.b16 %v23
  %v76 = vunpack.c.l.b16 %v24
  %v77 = vunpack.c.l.b16 %v25
  %v78 = vunpack.c.l.b16 %v26
  %v79 = vunpack.c.l.b16 %v27
  %v80 = vunpack.c.l.b16 %v28
  %v81 = vunpack.c.l.b16 %v29
  %v82 = vpack.c.b16 %v67, %v66
  %v83 = vpack.c.b16 %v69, %v68
  %v84 = vpack.c.b16 %v71, %v70
  %v85 = vpack.c.b16 %v73, %v72
  %v86 = vpack.c.b16 %v75, %v74
  %v87 = vpack.c.b16 %v77, %v76
  %v88 = vpack.c.b16 %v79, %v78
  %v89 = vpack.c.b16 %v81, %v80
  %v114 = vunpack.c.l.b16 %v30
  %v115 = vunpack.c.l.b16 %v31
  %v116 = vunpack.c.l.b16 %v32
  %v117 = vunpack.c.l.b16 %v33
  %v118 = vunpack.c.l.b16 %v34
  %v119 = vunpack.c.l.b16 %v35
  %v120 = vunpack.c.l.b16 %v36
  %v121 = vunpack.c.l.b16 %v37
  %v122 = vunpack.c.l.b16 %v38
  %v123 = vunpack.c.l.b16 %v39
  %v124 = vunpack.c.l.b16 %v40
  %v125 = vunpack.c.l.b16 %v41
  %v126 = vunpack.c.l.b16 %v42
  %v127 = vunpack.c.l.b16 %v43
  %v128 = vunpack.c.l.b16 %v44
  %v129 = vunpack.c.l.b16 %v45
  %v130 = vpack.c.b16 %v115, %v114
  %v131 = vpack.c.b16 %v117, %v116
  %v132 = vpack.c.b16 %v119, %v118
  %v133 = vpack.c.b16 %v121, %v120
  %v134 = vpack.c.b16 %v123, %v122
  %v135 = vpack.c.b16 %v125, %v124
  %v136 = vpack.c.b16 %v127, %v126
  %v137 = vpack.c.b16 %v129, %v128
  %146 = vmatpush.bf16.msra.mxu0 %v137
  %147 = vmatpush.bf16.msra.mxu0 %v136
  %148 = vmatpush.bf16.msra.mxu0 %v135
  %149 = vmatpush.bf16.msra.mxu0 %v134
  %150 = vmatpush.bf16.msra.mxu0 %v133
  %151 = vmatpush.bf16.msra.mxu0 %v132
  %152 = vmatpush.bf16.msra.mxu0 %v131
  %153 = vmatpush.bf16.msra.mxu0 %v130
  %154 = vmatmul.bf16.gmra.mxu0 %v82
  %v155 = vpop.f32.mrf.mxu0
  %v156 = vadd.f32 %v48, %v155
  %v157 = vpop.f32.mrf.mxu0
  %v158 = vadd.f32 %v48, %v157
  %159 = vmatmul.bf16.gmra.mxu0 %v83
  %v160 = vpop.f32.mrf.mxu0
  %v161 = vadd.f32 %v48, %v160
  %v162 = vpop.f32.mrf.mxu0
  %v163 = vadd.f32 %v48, %v162
  %164 = vmatmul.bf16.gmra.mxu0 %v84
  %v165 = vpop.f32.mrf.mxu0
  %v166 = vadd.f32 %v48, %v165
  %v167 = vpop.f32.mrf.mxu0
  %v168 = vadd.f32 %v48, %v167
  %169 = vmatmul.bf16.gmra.mxu0 %v85
  %v170 = vpop.f32.mrf.mxu0
  %v171 = vadd.f32 %v48, %v170
  %v172 = vpop.f32.mrf.mxu0
  %v173 = vadd.f32 %v48, %v172
  %174 = vmatmul.bf16.gmra.mxu0 %v86
  %v175 = vpop.f32.mrf.mxu0
  %v176 = vadd.f32 %v48, %v175
  %v177 = vpop.f32.mrf.mxu0
  %v178 = vadd.f32 %v48, %v177
  %179 = vmatmul.bf16.gmra.mxu0 %v87
  %v180 = vpop.f32.mrf.mxu0
  %v181 = vadd.f32 %v48, %v180
  %v182 = vpop.f32.mrf.mxu0
  %v183 = vadd.f32 %v48, %v182
  %184 = vmatmul.bf16.gmra.mxu0 %v88
  %v185 = vpop.f32.mrf.mxu0
  %v186 = vadd.f32 %v48, %v185
  %v187 = vpop.f32.mrf.mxu0
  %v188 = vadd.f32 %v48, %v187
  %189 = vmatmul.bf16.gmra.mxu0 %v89
  %v190 = vpop.f32.mrf.mxu0
  %v191 = vadd.f32 %v48, %v190
  %v192 = vpop.f32.mrf.mxu0
  %v193 = vadd.f32 %v48, %v192
  %194 = vdwg.mxu0
  %vm195 = vcmp.ge.f32.partialorder %v156, 0.0
  %vm196 = vcmp.ge.f32.partialorder %v158, 0.0
  %vm197 = vcmp.ge.f32.partialorder %v161, 0.0
  %vm198 = vcmp.ge.f32.partialorder %v163, 0.0
  %vm199 = vcmp.ge.f32.partialorder %v166, 0.0
  %vm200 = vcmp.ge.f32.partialorder %v168, 0.0
  %vm201 = vcmp.ge.f32.partialorder %v171, 0.0
  %vm202 = vcmp.ge.f32.partialorder %v173, 0.0
  %vm203 = vcmp.ge.f32.partialorder %v176, 0.0
  %vm204 = vcmp.ge.f32.partialorder %v178, 0.0
  %vm205 = vcmp.ge.f32.partialorder %v181, 0.0
  %vm206 = vcmp.ge.f32.partialorder %v183, 0.0
  %vm207 = vcmp.ge.f32.partialorder %v186, 0.0
  %vm208 = vcmp.ge.f32.partialorder %v188, 0.0
  %vm209 = vcmp.ge.f32.partialorder %v191, 0.0
  %vm210 = vcmp.ge.f32.partialorder %v193, 0.0
  %v211 = vmul.f32 %v156, 0.2
  %v212 = vmul.f32 %v158, 0.2
  %v213 = vmul.f32 %v161, 0.2
  %v214 = vmul.f32 %v163, 0.2
  %v215 = vmul.f32 %v166, 0.2
  %v216 = vmul.f32 %v168, 0.2
  %v217 = vmul.f32 %v171, 0.2
  %v218 = vmul.f32 %v173, 0.2
  %v219 = vmul.f32 %v176, 0.2
  %v220 = vmul.f32 %v178, 0.2
  %v221 = vmul.f32 %v181, 0.2
  %v222 = vmul.f32 %v183, 0.2
  %v223 = vmul.f32 %v186, 0.2
  %v224 = vmul.f32 %v188, 0.2
  %v225 = vmul.f32 %v191, 0.2
  %v226 = vmul.f32 %v193, 0.2
  %v227 = vsel %vm195, %v156, %v211
  %v228 = vsel %vm196, %v158, %v212
  %v229 = vsel %vm197, %v161, %v213
  %v230 = vsel %vm198, %v163, %v214
  %v231 = vsel %vm199, %v166, %v215
  %v232 = vsel %vm200, %v168, %v216
  %v233 = vsel %vm201, %v171, %v217
  %v234 = vsel %vm202, %v173, %v218
  %v235 = vsel %vm203, %v176, %v219
  %v236 = vsel %vm204, %v178, %v220
  %v237 = vsel %vm205, %v181, %v221
  %v238 = vsel %vm206, %v183, %v222
  %v239 = vsel %vm207, %v186, %v223
  %v240 = vsel %vm208, %v188, %v224
  %v241 = vsel %vm209, %v191, %v225
  %v242 = vsel %vm210, %v193, %v226
  %v243 = vpack.c.bf16 %v227, %v227
  %v244 = vpack.c.bf16 %v228, %v228
  %v245 = vpack.c.bf16 %v229, %v229
  %v246 = vpack.c.bf16 %v230, %v230
  %v247 = vpack.c.bf16 %v231, %v231
  %v248 = vpack.c.bf16 %v232, %v232
  %v249 = vpack.c.bf16 %v233, %v233
  %v250 = vpack.c.bf16 %v234, %v234
  %v251 = vpack.c.bf16 %v235, %v235
  %v252 = vpack.c.bf16 %v236, %v236
  %v253 = vpack.c.bf16 %v237, %v237
  %v254 = vpack.c.bf16 %v238, %v238
  %v255 = vpack.c.bf16 %v239, %v239
  %v256 = vpack.c.bf16 %v240, %v240
  %v257 = vpack.c.bf16 %v241, %v241
  %v258 = vpack.c.bf16 %v242, %v242
  %vm259 = vcmask 519168
  %260 = vst.msk [vmem:[%s3] sm:$0xf] %vm259, %v243
  %261 = vst.msk [vmem:[%s3 + $0x4] sm:$0xf] %vm259, %v244
  %262 = vst.msk [vmem:[%s3 + $0x8] sm:$0xf] %vm259, %v245
  %263 = vst.msk [vmem:[%s3 + $0xc] sm:$0xf] %vm259, %v246
  %264 = vst.msk [vmem:[%s3 + $0x10] sm:$0xf] %vm259, %v247
  %265 = vst.msk [vmem:[%s3 + $0x14] sm:$0xf] %vm259, %v248
  %266 = vst.msk [vmem:[%s3 + $0x18] sm:$0xf] %vm259, %v249
  %267 = vst.msk [vmem:[%s3 + $0x1c] sm:$0xf] %vm259, %v250
  %268 = vst.msk [vmem:[%s3 + $0x20] sm:$0xf] %vm259, %v251
  %269 = vst.msk [vmem:[%s3 + $0x24] sm:$0xf] %vm259, %v252
  %270 = vst.msk [vmem:[%s3 + $0x28] sm:$0xf] %vm259, %v253
  %271 = vst.msk [vmem:[%s3 + $0x2c] sm:$0xf] %vm259, %v254
  %272 = vst.msk [vmem:[%s3 + $0x30] sm:$0xf] %vm259, %v255
  %273 = vst.msk [vmem:[%s3 + $0x34] sm:$0xf] %vm259, %v256
  %274 = vst.msk [vmem:[%s3 + $0x38] sm:$0xf] %vm259, %v257
  %275 = vst.msk [vmem:[%s3 + $0x3c] sm:$0xf] %vm259, %v258
  // Predicated region
  $region14: #{discriminator_forward.6} parent=0 // pred_check
    _
  $region15: #{discriminator_forward.6} parent=0 // pred_check_branch
    %277 = sbr.rel (0) target = $region17
  $region16: #{discriminator_forward.6} parent=0 // pred_region
    _
  $region17: #{discriminator_forward.6} parent=0 // pred_fallthru
    _
  // Predicated region
  $region18: #{discriminator_forward.6} parent=0 // pred_check
    _
  $region19: #{discriminator_forward.6} parent=0 // pred_check_branch
    %279 = sbr.rel (0) target = $region21
  $region20: #{discriminator_forward.6} parent=0 // pred_region
    _
  $region21: #{discriminator_forward.6} parent=0 // pred_fallthru
    _

// kernel: discriminator_forward.8
$region0: #{discriminator_forward.8}
  #allocation0 [shape = 'u32[]', space=smem, size = 0x4, offset = 0x4, fixed_abs, tag = 'smem constant byte address 0x4 - core index']
  #allocation1 [shape = 'u32[72,128]{1,0:T(1,128)}', space=vmem, size = 0x9000, scoped, tag = 'internal scratch']
  %s0 = inlined_call_operand.vmem [shape: f32[32,128], index: 0, kind: input, shape index: {}]
  %s1 = inlined_call_operand.vmem [shape: f32[1,128], index: 1, kind: input, shape index: {}]
  %s2 = inlined_call_operand.vmem [shape: f32[1,128], index: 2, kind: input, shape index: {}]
  %s3 = inlined_call_operand.vmem [shape: bf16[32,128], index: 3, kind: output, shape index: {}]
  %s4 = sld [smem:[#allocation0]]
  $region22: #{discriminator_forward.8} parent=0
    _
  %s6 = ssub.s32 1, %s4
  %s7 = scalar_select 0, %s6, %s4
  // Predicated region
  $region2: #{discriminator_forward.8} parent=0 // pred_check
    _
  $region3: #{discriminator_forward.8} parent=0 // pred_check_branch
    %9 = sbr.rel (0) target = $region5
  $region4: #{discriminator_forward.8} parent=0 // pred_region
    _
  $region5: #{discriminator_forward.8} parent=0 // pred_fallthru
    _
  // Predicated region
  $region6: #{discriminator_forward.8} parent=0 // pred_check
    _
  $region7: #{discriminator_forward.8} parent=0 // pred_check_branch
    %11 = sbr.rel (0) target = $region9
  $region8: #{discriminator_forward.8} parent=0 // pred_region
    _
  $region9: #{discriminator_forward.8} parent=0 // pred_fallthru
    _
  // Predicated region
  $region10: #{discriminator_forward.8} parent=0 // pred_check
    _
  $region11: #{discriminator_forward.8} parent=0 // pred_check_branch
    %13 = sbr.rel (0) target = $region13
  $region12: #{discriminator_forward.8} parent=0 // pred_region
    _
  $region13: #{discriminator_forward.8} parent=0 // pred_fallthru
    _
  %v14 = vld [vmem:[%s0] sm:$0xff]
  %v15 = vld [vmem:[%s0 + $0x8] sm:$0xff]
  %v16 = vld [vmem:[%s0 + $0x10] sm:$0xff]
  %v17 = vld [vmem:[%s0 + $0x18] sm:$0xff]
  %v18 = vld [vmem:[%s1] sm:$0x1]
  %v20 = vperm.slane %v18, 0
  %v22 = vmul.f32 %v14, %v20
  %v23 = vmul.f32 %v15, %v20
  %v24 = vmul.f32 %v16, %v20
  %v25 = vmul.f32 %v17, %v20
  %v26 = vld [vmem:[%s2] sm:$0x1]
  %v28 = vperm.slane %v26, 0
  %v30 = vadd.f32 %v22, %v28
  %v31 = vadd.f32 %v23, %v28
  %v32 = vadd.f32 %v24, %v28
  %v33 = vadd.f32 %v25, %v28
  %vm34 = vcmp.ge.f32.partialorder %v30, 0.0
  %vm35 = vcmp.ge.f32.partialorder %v31, 0.0
  %vm36 = vcmp.ge.f32.partialorder %v32, 0.0
  %vm37 = vcmp.ge.f32.partialorder %v33, 0.0
  %v38 = vmul.f32 %v30, 0.2
  %v39 = vmul.f32 %v31, 0.2
  %v40 = vmul.f32 %v32, 0.2
  %v41 = vmul.f32 %v33, 0.2
  %v42 = vsel %vm34, %v30, %v38
  %v43 = vsel %vm35, %v31, %v39
  %v44 = vsel %vm36, %v32, %v40
  %v45 = vsel %vm37, %v33, %v41
  %v46 = vpack.c.bf16 %v42, %v42
  %v47 = vpack.c.bf16 %v43, %v43
  %v48 = vpack.c.bf16 %v44, %v44
  %v49 = vpack.c.bf16 %v45, %v45
  %50 = vst [vmem:[%s3] sm:$0xf] %v46
  %51 = vst [vmem:[%s3 + $0x4] sm:$0xf] %v47
  %52 = vst [vmem:[%s3 + $0x8] sm:$0xf] %v48
  %53 = vst [vmem:[%s3 + $0xc] sm:$0xf] %v49
  // Predicated region
  $region14: #{discriminator_forward.8} parent=0 // pred_check
    _
  $region15: #{discriminator_forward.8} parent=0 // pred_check_branch
    %55 = sbr.rel (0) target = $region17
  $region16: #{discriminator_forward.8} parent=0 // pred_region
    _
  $region17: #{discriminator_forward.8} parent=0 // pred_fallthru
    _
  // Predicated region
  $region18: #{discriminator_forward.8} parent=0 // pred_check
    _
  $region19: #{discriminator_forward.8} parent=0 // pred_check_branch
    %57 = sbr.rel (0) target = $region21
  $region20: #{discriminator_forward.8} parent=0 // pred_region
    _
  $region21: #{discriminator_forward.8} parent=0 // pred_fallthru
    _

// kernel: discriminator_forward.7
$region0: #{discriminator_forward.7}
  #allocation0 [shape = 'u32[]', space=smem, size = 0x4, offset = 0x4, fixed_abs, tag = 'smem constant byte address 0x4 - core index']
  #allocation1 [shape = 'u32[72,128]{1,0:T(1,128)}', space=vmem, size = 0x9000, scoped, tag = 'internal scratch']
  %s0 = inlined_call_operand.vmem [shape: bf16[32,1024], index: 0, kind: input, shape index: {}]
  %s1 = inlined_call_operand.vmem [shape: bf16[1024,128], index: 1, kind: input, shape index: {}]
  %s2 = inlined_call_operand.vmem [shape: f32[1,128], index: 2, kind: input, shape index: {}]
  %s3 = inlined_call_operand.vmem [shape: f32[32,128], index: 3, kind: output, shape index: {0}]
  %s4 = inlined_call_operand.vmem [shape: f32[1,128], index: 4, kind: output, shape index: {1}]
  %s5 = inlined_call_operand.vmem [shape: f32[1,128], index: 5, kind: output, shape index: {2}]
  %6 = xla_tuple %s3, %s4, %s5
  %s7 = sld [smem:[#allocation0]]
  $region46: #{discriminator_forward.7} parent=0
    _
  %s9 = ssub.s32 1, %s7
  %s10 = scalar_select 0, %s9, %s7
  // Predicated region
  $region2: #{discriminator_forward.7} parent=0 // pred_check
    _
  $region3: #{discriminator_forward.7} parent=0 // pred_check_branch
    %12 = sbr.rel (0) target = $region5
  $region4: #{discriminator_forward.7} parent=0 // pred_region
    _
  $region5: #{discriminator_forward.7} parent=0 // pred_fallthru
    _
  // Predicated region
  $region6: #{discriminator_forward.7} parent=0 // pred_check
    _
  $region7: #{discriminator_forward.7} parent=0 // pred_check_branch
    %14 = sbr.rel (0) target = $region9
  $region8: #{discriminator_forward.7} parent=0 // pred_region
    _
  $region9: #{discriminator_forward.7} parent=0 // pred_fallthru
    _
  // Predicated region
  $region10: #{discriminator_forward.7} parent=0 // pred_check
    _
  $region11: #{discriminator_forward.7} parent=0 // pred_check_branch
    %16 = sbr.rel (0) target = $region13
  $region12: #{discriminator_forward.7} parent=0 // pred_region
    _
  $region13: #{discriminator_forward.7} parent=0 // pred_fallthru
    _
  %v17 = vld [vmem:[%s0] sm:$0xff]
  %v18 = vld [vmem:[%s0 + $0x8] sm:$0xff]
  %v19 = vld [vmem:[%s0 + $0x10] sm:$0xff]
  %v20 = vld [vmem:[%s0 + $0x18] sm:$0xff]
  %v21 = vld [vmem:[%s0 + $0x20] sm:$0xff]
  %v22 = vld [vmem:[%s0 + $0x28] sm:$0xff]
  %v23 = vld [vmem:[%s0 + $0x30] sm:$0xff]
  %v24 = vld [vmem:[%s0 + $0x38] sm:$0xff]
  %v25 = vld [vmem:[%s0 + $0x40] sm:$0xff]
  %v26 = vld [vmem:[%s0 + $0x48] sm:$0xff]
  %v27 = vld [vmem:[%s0 + $0x50] sm:$0xff]
  %v28 = vld [vmem:[%s0 + $0x58] sm:$0xff]
  %v29 = vld [vmem:[%s0 + $0x60] sm:$0xff]
  %v30 = vld [vmem:[%s0 + $0x68] sm:$0xff]
  %v31 = vld [vmem:[%s0 + $0x70] sm:$0xff]
  %v32 = vld [vmem:[%s0 + $0x78] sm:$0xff]
  %v33 = vld [vmem:[%s1] sm:$0xf]
  %v34 = vld [vmem:[%s1 + $0x4] sm:$0xf]
  %v35 = vld [vmem:[%s1 + $0x8] sm:$0xf]
  %v36 = vld [vmem:[%s1 + $0xc] sm:$0xf]
  %v37 = vld [vmem:[%s1 + $0x10] sm:$0xf]
  %v38 = vld [vmem:[%s1 + $0x14] sm:$0xf]
  %v39 = vld [vmem:[%s1 + $0x18] sm:$0xf]
  %v40 = vld [vmem:[%s1 + $0x1c] sm:$0xf]
  %v41 = vld [vmem:[%s1 + $0x20] sm:$0xf]
  %v42 = vld [vmem:[%s1 + $0x24] sm:$0xf]
  %v43 = vld [vmem:[%s1 + $0x28] sm:$0xf]
  %v44 = vld [vmem:[%s1 + $0x2c] sm:$0xf]
  %v45 = vld [vmem:[%s1 + $0x30] sm:$0xf]
  %v46 = vld [vmem:[%s1 + $0x34] sm:$0xf]
  %v47 = vld [vmem:[%s1 + $0x38] sm:$0xf]
  %v48 = vld [vmem:[%s1 + $0x3c] sm:$0xf]
  %v49 = vld [vmem:[%s1 + $0x40] sm:$0xf]
  %v50 = vld [vmem:[%s1 + $0x44] sm:$0xf]
  %v51 = vld [vmem:[%s1 + $0x48] sm:$0xf]
  %v52 = vld [vmem:[%s1 + $0x4c] sm:$0xf]
  %v53 = vld [vmem:[%s1 + $0x50] sm:$0xf]
  %v54 = vld [vmem:[%s1 + $0x54] sm:$0xf]
  %v55 = vld [vmem:[%s1 + $0x58] sm:$0xf]
  %v56 = vld [vmem:[%s1 + $0x5c] sm:$0xf]
  %v57 = vld [vmem:[%s1 + $0x60] sm:$0xf]
  %v58 = vld [vmem:[%s1 + $0x64] sm:$0xf]
  %v59 = vld [vmem:[%s1 + $0x68] sm:$0xf]
  %v60 = vld [vmem:[%s1 + $0x6c] sm:$0xf]
  %v61 = vld [vmem:[%s1 + $0x70] sm:$0xf]
  %v62 = vld [vmem:[%s1 + $0x74] sm:$0xf]
  %v63 = vld [vmem:[%s1 + $0x78] sm:$0xf]
  %v64 = vld [vmem:[%s1 + $0x7c] sm:$0xf]
  %v65 = vld [vmem:[%s1 + $0x80] sm:$0xf]
  %v66 = vld [vmem:[%s1 + $0x84] sm:$0xf]
  %v67 = vld [vmem:[%s1 + $0x88] sm:$0xf]
  %v68 = vld [vmem:[%s1 + $0x8c] sm:$0xf]
  %v69 = vld [vmem:[%s1 + $0x90] sm:$0xf]
  %v70 = vld [vmem:[%s1 + $0x94] sm:$0xf]
  %v71 = vld [vmem:[%s1 + $0x98] sm:$0xf]
  %v72 = vld [vmem:[%s1 + $0x9c] sm:$0xf]
  %v73 = vld [vmem:[%s1 + $0xa0] sm:$0xf]
  %v74 = vld [vmem:[%s1 + $0xa4] sm:$0xf]
  %v75 = vld [vmem:[%s1 + $0xa8] sm:$0xf]
  %v76 = vld [vmem:[%s1 + $0xac] sm:$0xf]
  %v77 = vld [vmem:[%s1 + $0xb0] sm:$0xf]
  %v78 = vld [vmem:[%s1 + $0xb4] sm:$0xf]
  %v79 = vld [vmem:[%s1 + $0xb8] sm:$0xf]
  %v80 = vld [vmem:[%s1 + $0xbc] sm:$0xf]
  %v81 = vld [vmem:[%s1 + $0xc0] sm:$0xf]
  %v82 = vld [vmem:[%s1 + $0xc4] sm:$0xf]
  %v83 = vld [vmem:[%s1 + $0xc8] sm:$0xf]
  %v84 = vld [vmem:[%s1 + $0xcc] sm:$0xf]
  %v85 = vld [vmem:[%s1 + $0xd0] sm:$0xf]
  %v86 = vld [vmem:[%s1 + $0xd4] sm:$0xf]
  %v87 = vld [vmem:[%s1 + $0xd8] sm:$0xf]
  %v88 = vld [vmem:[%s1 + $0xdc] sm:$0xf]
  %v89 = vld [vmem:[%s1 + $0xe0] sm:$0xf]
  %v90 = vld [vmem:[%s1 + $0xe4] sm:$0xf]
  %v91 = vld [vmem:[%s1 + $0xe8] sm:$0xf]
  %v92 = vld [vmem:[%s1 + $0xec] sm:$0xf]
  %v93 = vld [vmem:[%s1 + $0xf0] sm:$0xf]
  %v94 = vld [vmem:[%s1 + $0xf4] sm:$0xf]
  %v95 = vld [vmem:[%s1 + $0xf8] sm:$0xf]
  %v96 = vld [vmem:[%s1 + $0xfc] sm:$0xf]
  %v97 = vld [vmem:[%s1 + $0x100] sm:$0xf]
  %v98 = vld [vmem:[%s1 + $0x104] sm:$0xf]
  %v99 = vld [vmem:[%s1 + $0x108] sm:$0xf]
  %v100 = vld [vmem:[%s1 + $0x10c] sm:$0xf]
  %v101 = vld [vmem:[%s1 + $0x110] sm:$0xf]
  %v102 = vld [vmem:[%s1 + $0x114] sm:$0xf]
  %v103 = vld [vmem:[%s1 + $0x118] sm:$0xf]
  %v104 = vld [vmem:[%s1 + $0x11c] sm:$0xf]
  %v105 = vld [vmem:[%s1 + $0x120] sm:$0xf]
  %v106 = vld [vmem:[%s1 + $0x124] sm:$0xf]
  %v107 = vld [vmem:[%s1 + $0x128] sm:$0xf]
  %v108 = vld [vmem:[%s1 + $0x12c] sm:$0xf]
  %v109 = vld [vmem:[%s1 + $0x130] sm:$0xf]
  %v110 = vld [vmem:[%s1 + $0x134] sm:$0xf]
  %v111 = vld [vmem:[%s1 + $0x138] sm:$0xf]
  %v112 = vld [vmem:[%s1 + $0x13c] sm:$0xf]
  %v113 = vld [vmem:[%s1 + $0x140] sm:$0xf]
  %v114 = vld [vmem:[%s1 + $0x144] sm:$0xf]
  %v115 = vld [vmem:[%s1 + $0x148] sm:$0xf]
  %v116 = vld [vmem:[%s1 + $0x14c] sm:$0xf]
  %v117 = vld [vmem:[%s1 + $0x150] sm:$0xf]
  %v118 = vld [vmem:[%s1 + $0x154] sm:$0xf]
  %v119 = vld [vmem:[%s1 + $0x158] sm:$0xf]
  %v120 = vld [vmem:[%s1 + $0x15c] sm:$0xf]
  %v121 = vld [vmem:[%s1 + $0x160] sm:$0xf]
  %v122 = vld [vmem:[%s1 + $0x164] sm:$0xf]
  %v123 = vld [vmem:[%s1 + $0x168] sm:$0xf]
  %v124 = vld [vmem:[%s1 + $0x16c] sm:$0xf]
  %v125 = vld [vmem:[%s1 + $0x170] sm:$0xf]
  %v126 = vld [vmem:[%s1 + $0x174] sm:$0xf]
  %v127 = vld [vmem:[%s1 + $0x178] sm:$0xf]
  %v128 = vld [vmem:[%s1 + $0x17c] sm:$0xf]
  %v129 = vld [vmem:[%s1 + $0x180] sm:$0xf]
  %v130 = vld [vmem:[%s1 + $0x184] sm:$0xf]
  %v131 = vld [vmem:[%s1 + $0x188] sm:$0xf]
  %v132 = vld [vmem:[%s1 + $0x18c] sm:$0xf]
  %v133 = vld [vmem:[%s1 + $0x190] sm:$0xf]
  %v134 = vld [vmem:[%s1 + $0x194] sm:$0xf]
  %v135 = vld [vmem:[%s1 + $0x198] sm:$0xf]
  %v136 = vld [vmem:[%s1 + $0x19c] sm:$0xf]
  %v137 = vld [vmem:[%s1 + $0x1a0] sm:$0xf]
  %v138 = vld [vmem:[%s1 + $0x1a4] sm:$0xf]
  %v139 = vld [vmem:[%s1 + $0x1a8] sm:$0xf]
  %v140 = vld [vmem:[%s1 + $0x1ac] sm:$0xf]
  %v141 = vld [vmem:[%s1 + $0x1b0] sm:$0xf]
  %v142 = vld [vmem:[%s1 + $0x1b4] sm:$0xf]
  %v143 = vld [vmem:[%s1 + $0x1b8] sm:$0xf]
  %v144 = vld [vmem:[%s1 + $0x1bc] sm:$0xf]
  %v145 = vld [vmem:[%s1 + $0x1c0] sm:$0xf]
  %v146 = vld [vmem:[%s1 + $0x1c4] sm:$0xf]
  %v147 = vld [vmem:[%s1 + $0x1c8] sm:$0xf]
  %v148 = vld [vmem:[%s1 + $0x1cc] sm:$0xf]
  %v149 = vld [vmem:[%s1 + $0x1d0] sm:$0xf]
  %v150 = vld [vmem:[%s1 + $0x1d4] sm:$0xf]
  %v151 = vld [vmem:[%s1 + $0x1d8] sm:$0xf]
  %v152 = vld [vmem:[%s1 + $0x1dc] sm:$0xf]
  %v153 = vld [vmem:[%s1 + $0x1e0] sm:$0xf]
  %v154 = vld [vmem:[%s1 + $0x1e4] sm:$0xf]
  %v155 = vld [vmem:[%s1 + $0x1e8] sm:$0xf]
  %v156 = vld [vmem:[%s1 + $0x1ec] sm:$0xf]
  %v157 = vld [vmem:[%s1 + $0x1f0] sm:$0xf]
  %v158 = vld [vmem:[%s1 + $0x1f4] sm:$0xf]
  %v159 = vld [vmem:[%s1 + $0x1f8] sm:$0xf]
  %v160 = vld [vmem:[%s1 + $0x1fc] sm:$0xf]
  %v161 = vld [vmem:[%s2] sm:$0x1]
  %v163 = vperm.slane %v161, 0
  %v181 = vunpack.c.l.b16 %v17
  %v182 = vunpack.c.h.b16 %v17
  %v183 = vunpack.c.l.b16 %v18
  %v184 = vunpack.c.h.b16 %v18
  %v185 = vunpack.c.l.b16 %v19
  %v186 = vunpack.c.h.b16 %v19
  %v187 = vunpack.c.l.b16 %v20
  %v188 = vunpack.c.h.b16 %v20
  %v189 = vunpack.c.l.b16 %v21
  %v190 = vunpack.c.h.b16 %v21
  %v191 = vunpack.c.l.b16 %v22
  %v192 = vunpack.c.h.b16 %v22
  %v193 = vunpack.c.l.b16 %v23
  %v194 = vunpack.c.h.b16 %v23
  %v195 = vunpack.c.l.b16 %v24
  %v196 = vunpack.c.h.b16 %v24
  %v197 = vunpack.c.l.b16 %v25
  %v198 = vunpack.c.h.b16 %v25
  %v199 = vunpack.c.l.b16 %v26
  %v200 = vunpack.c.h.b16 %v26
  %v201 = vunpack.c.l.b16 %v27
  %v202 = vunpack.c.h.b16 %v27
  %v203 = vunpack.c.l.b16 %v28
  %v204 = vunpack.c.h.b16 %v28
  %v205 = vunpack.c.l.b16 %v29
  %v206 = vunpack.c.h.b16 %v29
  %v207 = vunpack.c.l.b16 %v30
  %v208 = vunpack.c.h.b16 %v30
  %v209 = vunpack.c.l.b16 %v31
  %v210 = vunpack.c.h.b16 %v31
  %v211 = vunpack.c.l.b16 %v32
  %v212 = vunpack.c.h.b16 %v32
  %v213 = vpack.c.b16 %v189, %v181
  %v214 = vpack.c.b16 %v190, %v182
  %v215 = vpack.c.b16 %v191, %v183
  %v216 = vpack.c.b16 %v192, %v184
  %v217 = vpack.c.b16 %v193, %v185
  %v218 = vpack.c.b16 %v194, %v186
  %v219 = vpack.c.b16 %v195, %v187
  %v220 = vpack.c.b16 %v196, %v188
  %v221 = vpack.c.b16 %v205, %v197
  %v222 = vpack.c.b16 %v206, %v198
  %v223 = vpack.c.b16 %v207, %v199
  %v224 = vpack.c.b16 %v208, %v200
  %v225 = vpack.c.b16 %v209, %v201
  %v226 = vpack.c.b16 %v210, %v202
  %v227 = vpack.c.b16 %v211, %v203
  %v228 = vpack.c.b16 %v212, %v204
  %v373 = vunpack.c.l.b16 %v33
  %v374 = vunpack.c.l.b16 %v34
  %v375 = vunpack.c.l.b16 %v35
  %v376 = vunpack.c.l.b16 %v36
  %v377 = vunpack.c.l.b16 %v37
  %v378 = vunpack.c.l.b16 %v38
  %v379 = vunpack.c.l.b16 %v39
  %v380 = vunpack.c.l.b16 %v40
  %v381 = vunpack.c.l.b16 %v41
  %v382 = vunpack.c.l.b16 %v42
  %v383 = vunpack.c.l.b16 %v43
  %v384 = vunpack.c.l.b16 %v44
  %v385 = vunpack.c.l.b16 %v45
  %v386 = vunpack.c.l.b16 %v46
  %v387 = vunpack.c.l.b16 %v47
  %v388 = vunpack.c.l.b16 %v48
  %v389 = vunpack.c.l.b16 %v49
  %v390 = vunpack.c.l.b16 %v50
  %v391 = vunpack.c.l.b16 %v51
  %v392 = vunpack.c.l.b16 %v52
  %v393 = vunpack.c.l.b16 %v53
  %v394 = vunpack.c.l.b16 %v54
  %v395 = vunpack.c.l.b16 %v55
  %v396 = vunpack.c.l.b16 %v56
  %v397 = vunpack.c.l.b16 %v57
  %v398 = vunpack.c.l.b16 %v58
  %v399 = vunpack.c.l.b16 %v59
  %v400 = vunpack.c.l.b16 %v60
  %v401 = vunpack.c.l.b16 %v61
  %v402 = vunpack.c.l.b16 %v62
  %v403 = vunpack.c.l.b16 %v63
  %v404 = vunpack.c.l.b16 %v64
  %v405 = vunpack.c.l.b16 %v65
  %v406 = vunpack.c.l.b16 %v66
  %v407 = vunpack.c.l.b16 %v67
  %v408 = vunpack.c.l.b16 %v68
  %v409 = vunpack.c.l.b16 %v69
  %v410 = vunpack.c.l.b16 %v70
  %v411 = vunpack.c.l.b16 %v71
  %v412 = vunpack.c.l.b16 %v72
  %v413 = vunpack.c.l.b16 %v73
  %v414 = vunpack.c.l.b16 %v74
  %v415 = vunpack.c.l.b16 %v75
  %v416 = vunpack.c.l.b16 %v76
  %v417 = vunpack.c.l.b16 %v77
  %v418 = vunpack.c.l.b16 %v78
  %v419 = vunpack.c.l.b16 %v79
  %v420 = vunpack.c.l.b16 %v80
  %v421 = vunpack.c.l.b16 %v81
  %v422 = vunpack.c.l.b16 %v82
  %v423 = vunpack.c.l.b16 %v83
  %v424 = vunpack.c.l.b16 %v84
  %v425 = vunpack.c.l.b16 %v85
  %v426 = vunpack.c.l.b16 %v86
  %v427 = vunpack.c.l.b16 %v87
  %v428 = vunpack.c.l.b16 %v88
  %v429 = vunpack.c.l.b16 %v89
  %v430 = vunpack.c.l.b16 %v90
  %v431 = vunpack.c.l.b16 %v91
  %v432 = vunpack.c.l.b16 %v92
  %v433 = vunpack.c.l.b16 %v93
  %v434 = vunpack.c.l.b16 %v94
  %v435 = vunpack.c.l.b16 %v95
  %v436 = vunpack.c.l.b16 %v96
  %v437 = vunpack.c.l.b16 %v97
  %v438 = vunpack.c.l.b16 %v98
  %v439 = vunpack.c.l.b16 %v99
  %v440 = vunpack.c.l.b16 %v100
  %v441 = vunpack.c.l.b16 %v101
  %v442 = vunpack.c.l.b16 %v102
  %v443 = vunpack.c.l.b16 %v103
  %v444 = vunpack.c.l.b16 %v104
  %v445 = vunpack.c.l.b16 %v105
  %v446 = vunpack.c.l.b16 %v106
  %v447 = vunpack.c.l.b16 %v107
  %v448 = vunpack.c.l.b16 %v108
  %v449 = vunpack.c.l.b16 %v109
  %v450 = vunpack.c.l.b16 %v110
  %v451 = vunpack.c.l.b16 %v111
  %v452 = vunpack.c.l.b16 %v112
  %v453 = vunpack.c.l.b16 %v113
  %v454 = vunpack.c.l.b16 %v114
  %v455 = vunpack.c.l.b16 %v115
  %v456 = vunpack.c.l.b16 %v116
  %v457 = vunpack.c.l.b16 %v117
  %v458 = vunpack.c.l.b16 %v118
  %v459 = vunpack.c.l.b16 %v119
  %v460 = vunpack.c.l.b16 %v120
  %v461 = vunpack.c.l.b16 %v121
  %v462 = vunpack.c.l.b16 %v122
  %v463 = vunpack.c.l.b16 %v123
  %v464 = vunpack.c.l.b16 %v124
  %v465 = vunpack.c.l.b16 %v125
  %v466 = vunpack.c.l.b16 %v126
  %v467 = vunpack.c.l.b16 %v127
  %v468 = vunpack.c.l.b16 %v128
  %v469 = vunpack.c.l.b16 %v129
  %v470 = vunpack.c.l.b16 %v130
  %v471 = vunpack.c.l.b16 %v131
  %v472 = vunpack.c.l.b16 %v132
  %v473 = vunpack.c.l.b16 %v133
  %v474 = vunpack.c.l.b16 %v134
  %v475 = vunpack.c.l.b16 %v135
  %v476 = vunpack.c.l.b16 %v136
  %v477 = vunpack.c.l.b16 %v137
  %v478 = vunpack.c.l.b16 %v138
  %v479 = vunpack.c.l.b16 %v139
  %v480 = vunpack.c.l.b16 %v140
  %v481 = vunpack.c.l.b16 %v141
  %v482 = vunpack.c.l.b16 %v142
  %v483 = vunpack.c.l.b16 %v143
  %v484 = vunpack.c.l.b16 %v144
  %v485 = vunpack.c.l.b16 %v145
  %v486 = vunpack.c.l.b16 %v146
  %v487 = vunpack.c.l.b16 %v147
  %v488 = vunpack.c.l.b16 %v148
  %v489 = vunpack.c.l.b16 %v149
  %v490 = vunpack.c.l.b16 %v150
  %v491 = vunpack.c.l.b16 %v151
  %v492 = vunpack.c.l.b16 %v152
  %v493 = vunpack.c.l.b16 %v153
  %v494 = vunpack.c.l.b16 %v154
  %v495 = vunpack.c.l.b16 %v155
  %v496 = vunpack.c.l.b16 %v156
  %v497 = vunpack.c.l.b16 %v157
  %v498 = vunpack.c.l.b16 %v158
  %v499 = vunpack.c.l.b16 %v159
  %v500 = vunpack.c.l.b16 %v160
  %v501 = vpack.c.b16 %v374, %v373
  %v502 = vpack.c.b16 %v376, %v375
  %v503 = vpack.c.b16 %v378, %v377
  %v504 = vpack.c.b16 %v380, %v379
  %v505 = vpack.c.b16 %v382, %v381
  %v506 = vpack.c.b16 %v384, %v383
  %v507 = vpack.c.b16 %v386, %v385
  %v508 = vpack.c.b16 %v388, %v387
  %v509 = vpack.c.b16 %v390, %v389
  %v510 = vpack.c.b16 %v392, %v391
  %v511 = vpack.c.b16 %v394, %v393
  %v512 = vpack.c.b16 %v396, %v395
  %v513 = vpack.c.b16 %v398, %v397
  %v514 = vpack.c.b16 %v400, %v399
  %v515 = vpack.c.b16 %v402, %v401
  %v516 = vpack.c.b16 %v404, %v403
  %v517 = vpack.c.b16 %v406, %v405
  %v518 = vpack.c.b16 %v408, %v407
  %v519 = vpack.c.b16 %v410, %v409
  %v520 = vpack.c.b16 %v412, %v411
  %v521 = vpack.c.b16 %v414, %v413
  %v522 = vpack.c.b16 %v416, %v415
  %v523 = vpack.c.b16 %v418, %v417
  %v524 = vpack.c.b16 %v420, %v419
  %v525 = vpack.c.b16 %v422, %v421
  %v526 = vpack.c.b16 %v424, %v423
  %v527 = vpack.c.b16 %v426, %v425
  %v528 = vpack.c.b16 %v428, %v427
  %v529 = vpack.c.b16 %v430, %v429
  %v530 = vpack.c.b16 %v432, %v431
  %v531 = vpack.c.b16 %v434, %v433
  %v532 = vpack.c.b16 %v436, %v435
  %v533 = vpack.c.b16 %v438, %v437
  %v534 = vpack.c.b16 %v440, %v439
  %v535 = vpack.c.b16 %v442, %v441
  %v536 = vpack.c.b16 %v444, %v443
  %v537 = vpack.c.b16 %v446, %v445
  %v538 = vpack.c.b16 %v448, %v447
  %v539 = vpack.c.b16 %v450, %v449
  %v540 = vpack.c.b16 %v452, %v451
  %v541 = vpack.c.b16 %v454, %v453
  %v542 = vpack.c.b16 %v456, %v455
  %v543 = vpack.c.b16 %v458, %v457
  %v544 = vpack.c.b16 %v460, %v459
  %v545 = vpack.c.b16 %v462, %v461
  %v546 = vpack.c.b16 %v464, %v463
  %v547 = vpack.c.b16 %v466, %v465
  %v548 = vpack.c.b16 %v468, %v467
  %v549 = vpack.c.b16 %v470, %v469
  %v550 = vpack.c.b16 %v472, %v471
  %v551 = vpack.c.b16 %v474, %v473
  %v552 = vpack.c.b16 %v476, %v475
  %v553 = vpack.c.b16 %v478, %v477
  %v554 = vpack.c.b16 %v480, %v479
  %v555 = vpack.c.b16 %v482, %v481
  %v556 = vpack.c.b16 %v484, %v483
  %v557 = vpack.c.b16 %v486, %v485
  %v558 = vpack.c.b16 %v488, %v487
  %v559 = vpack.c.b16 %v490, %v489
  %v560 = vpack.c.b16 %v492, %v491
  %v561 = vpack.c.b16 %v494, %v493
  %v562 = vpack.c.b16 %v496, %v495
  %v563 = vpack.c.b16 %v498, %v497
  %v564 = vpack.c.b16 %v500, %v499
  %629 = vmatpush.bf16.msra.mxu0 %v508
  %630 = vmatpush.bf16.msra.mxu0 %v507
  %631 = vmatpush.bf16.msra.mxu0 %v506
  %632 = vmatpush.bf16.msra.mxu0 %v505
  %633 = vmatpush.bf16.msra.mxu0 %v504
  %634 = vmatpush.bf16.msra.mxu0 %v503
  %635 = vmatpush.bf16.msra.mxu0 %v502
  %636 = vmatpush.bf16.msra.mxu0 %v501
  %637 = vmatmul.bf16.gmra.mxu0 %v213
  %v638 = vpop.f32.mrf.mxu0
  %v639 = vadd.f32 %v163, %v638
  %v640 = vpop.f32.mrf.mxu0
  %v641 = vadd.f32 %v163, %v640
  %642 = vmatmul.bf16.gmra.mxu0 %v221
  %v643 = vpop.f32.mrf.mxu0
  %v644 = vadd.f32 %v163, %v643
  %v645 = vpop.f32.mrf.mxu0
  %v646 = vadd.f32 %v163, %v645
  %647 = vdwg.mxu0
  %648 = vmatpush.bf16.msra.mxu0 %v516
  %649 = vmatpush.bf16.msra.mxu0 %v515
  %650 = vmatpush.bf16.msra.mxu0 %v514
  %651 = vmatpush.bf16.msra.mxu0 %v513
  %652 = vmatpush.bf16.msra.mxu0 %v512
  %653 = vmatpush.bf16.msra.mxu0 %v511
  %654 = vmatpush.bf16.msra.mxu0 %v510
  %655 = vmatpush.bf16.msra.mxu0 %v509
  %656 = vmatmul.bf16.gmra.mxu0 %v214
  %v657 = vpop.f32.mrf.mxu0
  %v658 = vadd.f32 %v639, %v657
  %v659 = vpop.f32.mrf.mxu0
  %v660 = vadd.f32 %v641, %v659
  %661 = vmatmul.bf16.gmra.mxu0 %v222
  %v662 = vpop.f32.mrf.mxu0
  %v663 = vadd.f32 %v644, %v662
  %v664 = vpop.f32.mrf.mxu0
  %v665 = vadd.f32 %v646, %v664
  %666 = vdwg.mxu0
  %667 = vmatpush.bf16.msra.mxu0 %v524
  %668 = vmatpush.bf16.msra.mxu0 %v523
  %669 = vmatpush.bf16.msra.mxu0 %v522
  %670 = vmatpush.bf16.msra.mxu0 %v521
  %671 = vmatpush.bf16.msra.mxu0 %v520
  %672 = vmatpush.bf16.msra.mxu0 %v519
  %673 = vmatpush.bf16.msra.mxu0 %v518
  %674 = vmatpush.bf16.msra.mxu0 %v517
  %675 = vmatmul.bf16.gmra.mxu0 %v215
  %v676 = vpop.f32.mrf.mxu0
  %v677 = vadd.f32 %v658, %v676
  %v678 = vpop.f32.mrf.mxu0
  %v679 = vadd.f32 %v660, %v678
  %680 = vmatmul.bf16.gmra.mxu0 %v223
  %v681 = vpop.f32.mrf.mxu0
  %v682 = vadd.f32 %v663, %v681
  %v683 = vpop.f32.mrf.mxu0
  %v684 = vadd.f32 %v665, %v683
  %685 = vdwg.mxu0
  %686 = vmatpush.bf16.msra.mxu0 %v532
  %687 = vmatpush.bf16.msra.mxu0 %v531
  %688 = vmatpush.bf16.msra.mxu0 %v530
  %689 = vmatpush.bf16.msra.mxu0 %v529
  %690 = vmatpush.bf16.msra.mxu0 %v528
  %691 = vmatpush.bf16.msra.mxu0 %v527
  %692 = vmatpush.bf16.msra.mxu0 %v526
  %693 = vmatpush.bf16.msra.mxu0 %v525
  %694 = vmatmul.bf16.gmra.mxu0 %v216
  %v695 = vpop.f32.mrf.mxu0
  %v696 = vadd.f32 %v677, %v695
  %v697 = vpop.f32.mrf.mxu0
  %v698 = vadd.f32 %v679, %v697
  %699 = vmatmul.bf16.gmra.mxu0 %v224
  %v700 = vpop.f32.mrf.mxu0
  %v701 = vadd.f32 %v682, %v700
  %v702 = vpop.f32.mrf.mxu0
  %v703 = vadd.f32 %v684, %v702
  %704 = vdwg.mxu0
  %705 = vmatpush.bf16.msra.mxu0 %v540
  %706 = vmatpush.bf16.msra.mxu0 %v539
  %707 = vmatpush.bf16.msra.mxu0 %v538
  %708 = vmatpush.bf16.msra.mxu0 %v537
  %709 = vmatpush.bf16.msra.mxu0 %v536
  %710 = vmatpush.bf16.msra.mxu0 %v535
  %711 = vmatpush.bf16.msra.mxu0 %v534
  %712 = vmatpush.bf16.msra.mxu0 %v533
  %713 = vmatmul.bf16.gmra.mxu0 %v217
  %v714 = vpop.f32.mrf.mxu0
  %v715 = vadd.f32 %v696, %v714
  %v716 = vpop.f32.mrf.mxu0
  %v717 = vadd.f32 %v698, %v716
  %718 = vmatmul.bf16.gmra.mxu0 %v225
  %v719 = vpop.f32.mrf.mxu0
  %v720 = vadd.f32 %v701, %v719
  %v721 = vpop.f32.mrf.mxu0
  %v722 = vadd.f32 %v703, %v721
  %723 = vdwg.mxu0
  %724 = vmatpush.bf16.msra.mxu0 %v548
  %725 = vmatpush.bf16.msra.mxu0 %v547
  %726 = vmatpush.bf16.msra.mxu0 %v546
  %727 = vmatpush.bf16.msra.mxu0 %v545
  %728 = vmatpush.bf16.msra.mxu0 %v544
  %729 = vmatpush.bf16.msra.mxu0 %v543
  %730 = vmatpush.bf16.msra.mxu0 %v542
  %731 = vmatpush.bf16.msra.mxu0 %v541
  %732 = vmatmul.bf16.gmra.mxu0 %v218
  %v733 = vpop.f32.mrf.mxu0
  %v734 = vadd.f32 %v715, %v733
  %v735 = vpop.f32.mrf.mxu0
  %v736 = vadd.f32 %v717, %v735
  %737 = vmatmul.bf16.gmra.mxu0 %v226
  %v738 = vpop.f32.mrf.mxu0
  %v739 = vadd.f32 %v720, %v738
  %v740 = vpop.f32.mrf.mxu0
  %v741 = vadd.f32 %v722, %v740
  %742 = vdwg.mxu0
  %743 = vmatpush.bf16.msra.mxu0 %v556
  %744 = vmatpush.bf16.msra.mxu0 %v555
  %745 = vmatpush.bf16.msra.mxu0 %v554
  %746 = vmatpush.bf16.msra.mxu0 %v553
  %747 = vmatpush.bf16.msra.mxu0 %v552
  %748 = vmatpush.bf16.msra.mxu0 %v551
  %749 = vmatpush.bf16.msra.mxu0 %v550
  %750 = vmatpush.bf16.msra.mxu0 %v549
  %751 = vmatmul.bf16.gmra.mxu0 %v219
  %v752 = vpop.f32.mrf.mxu0
  %v753 = vadd.f32 %v734, %v752
  %v754 = vpop.f32.mrf.mxu0
  %v755 = vadd.f32 %v736, %v754
  %756 = vmatmul.bf16.gmra.mxu0 %v227
  %v757 = vpop.f32.mrf.mxu0
  %v758 = vadd.f32 %v739, %v757
  %v759 = vpop.f32.mrf.mxu0
  %v760 = vadd.f32 %v741, %v759
  %761 = vdwg.mxu0
  %762 = vmatpush.bf16.msra.mxu0 %v564
  %763 = vmatpush.bf16.msra.mxu0 %v563
  %764 = vmatpush.bf16.msra.mxu0 %v562
  %765 = vmatpush.bf16.msra.mxu0 %v561
  %766 = vmatpush.bf16.msra.mxu0 %v560
  %767 = vmatpush.bf16.msra.mxu0 %v559
  %768 = vmatpush.bf16.msra.mxu0 %v558
  %769 = vmatpush.bf16.msra.mxu0 %v557
  %770 = vmatmul.bf16.gmra.mxu0 %v220
  %v771 = vpop.f32.mrf.mxu0
  %v772 = vadd.f32 %v753, %v771
  %v773 = vpop.f32.mrf.mxu0
  %v774 = vadd.f32 %v755, %v773
  %775 = vmatmul.bf16.gmra.mxu0 %v228
  %v776 = vpop.f32.mrf.mxu0
  %v777 = vadd.f32 %v758, %v776
  %v778 = vpop.f32.mrf.mxu0
  %v779 = vadd.f32 %v760, %v778
  %780 = vdwg.mxu0
  %781 = vst [vmem:[%s3] sm:$0xff] %v772
  %782 = vst [vmem:[%s3 + $0x8] sm:$0xff] %v774
  %783 = vst [vmem:[%s3 + $0x10] sm:$0xff] %v777
  %784 = vst [vmem:[%s3 + $0x18] sm:$0xff] %v779
  %v785 = vadd.f32 %v772, %v774
  %v786 = vadd.f32 %v785, %v777
  %v787 = vadd.f32 %v786, %v779
  %v788 = vrot.slane %v787, 4
  %v789 = vadd.f32 %v787, %v788
  %v790 = vrot.slane %v789, 2
  %v791 = vadd.f32 %v789, %v790
  %v792 = vrot.slane %v791, 1
  %v793 = vadd.f32 %v791, %v792
  %v794 = vmul.f32 %v772, %v772
  %v795 = vmul.f32 %v774, %v774
  %v796 = vmul.f32 %v777, %v777
  %v797 = vmul.f32 %v779, %v779
  %v798 = vadd.f32 %v794, %v795
  %v799 = vadd.f32 %v798, %v796
  %v800 = vadd.f32 %v799, %v797
  %v801 = vrot.slane %v800, 4
  %v802 = vadd.f32 %v800, %v801
  %v803 = vrot.slane %v802, 2
  %v804 = vadd.f32 %v802, %v803
  %v805 = vrot.slane %v804, 1
  %v806 = vadd.f32 %v804, %v805
  %p807 = scmp.eq.s32.totalorder 0, 0
  // Predicated region
  $region14: #{discriminator_forward.7} parent=0 // pred_check
    %p808 = pneg %p807
  $region15: #{discriminator_forward.7} parent=0 // pred_check_branch
    %810 = sbr.rel (%p808) target = $region17
  $region16: #{discriminator_forward.7} parent=0 // pred_region
    %811 = vst [vmem:[%s4] sm:$0x1] %v793
    %812 = vst [vmem:[%s5] sm:$0x1] %v806
  $region17: #{discriminator_forward.7} parent=0 // pred_fallthru
    _
  %p813 = scmp.gt.s32.totalorder 0, 0
  // Predicated region
  $region18: #{discriminator_forward.7} parent=0 // pred_check
    %p814 = pneg %p813
  $region19: #{discriminator_forward.7} parent=0 // pred_check_branch
    %816 = sbr.rel (%p814) target = $region21
  $region20: #{discriminator_forward.7} parent=0 // pred_region
    %v817 = vld [vmem:[%s4] sm:$0x1]
    %v818 = vadd.f32 %v817, %v793
    %819 = vst [vmem:[%s4] sm:$0x1] %v818
    %v820 = vld [vmem:[%s5] sm:$0x1]
    %v821 = vadd.f32 %v820, %v806
    %822 = vst [vmem:[%s5] sm:$0x1] %v821
  $region21: #{discriminator_forward.7} parent=0 // pred_fallthru
    _
  // Predicated region
  $region22: #{discriminator_forward.7} parent=0 // pred_check
    _
  $region23: #{discriminator_forward.7} parent=0 // pred_check_branch
    %824 = sbr.rel (0) target = $region25
  $region24: #{discriminator_forward.7} parent=0 // pred_region
    _
  $region25: #{discriminator_forward.7} parent=0 // pred_fallthru
    _
  // Predicated region
  $region26: #{discriminator_forward.7} parent=0 // pred_check
    _
  $region27: #{discriminator_forward.7} parent=0 // pred_check_branch
    %826 = sbr.rel (0) target = $region29
  $region28: #{discriminator_forward.7} parent=0 // pred_region
    _
  $region29: #{discriminator_forward.7} parent=0 // pred_fallthru
    _
  // Predicated region
  $region30: #{discriminator_forward.7} parent=0 // pred_check
    _
  $region31: #{discriminator_forward.7} parent=0 // pred_check_branch
    %828 = sbr.rel (0) target = $region33
  $region32: #{discriminator_forward.7} parent=0 // pred_region
    _
  $region33: #{discriminator_forward.7} parent=0 // pred_fallthru
    _
  // Predicated region
  $region34: #{discriminator_forward.7} parent=0 // pred_check
    _
  $region35: #{discriminator_forward.7} parent=0 // pred_check_branch
    %830 = sbr.rel (0) target = $region37
  $region36: #{discriminator_forward.7} parent=0 // pred_region
    _
  $region37: #{discriminator_forward.7} parent=0 // pred_fallthru
    _
  // Predicated region
  $region38: #{discriminator_forward.7} parent=0 // pred_check
    _
  $region39: #{discriminator_forward.7} parent=0 // pred_check_branch
    %832 = sbr.rel (0) target = $region41
  $region40: #{discriminator_forward.7} parent=0 // pred_region
    _
  $region41: #{discriminator_forward.7} parent=0 // pred_fallthru
    _
  // Predicated region
  $region42: #{discriminator_forward.7} parent=0 // pred_check
    _
  $region43: #{discriminator_forward.7} parent=0 // pred_check_branch
    %834 = sbr.rel (0) target = $region45
  $region44: #{discriminator_forward.7} parent=0 // pred_region
    _
  $region45: #{discriminator_forward.7} parent=0 // pred_fallthru
    _

// kernel: discriminator_forward.10
$region0: #{discriminator_forward.10}
  #allocation0 [shape = 'u32[]', space=smem, size = 0x4, offset = 0x4, fixed_abs, tag = 'smem constant byte address 0x4 - core index']
  #allocation1 [shape = 'u32[72,128]{1,0:T(1,128)}', space=vmem, size = 0x9000, scoped, tag = 'internal scratch']
  %s0 = inlined_call_operand.vmem [shape: f32[8,256], index: 0, kind: input, shape index: {}]
  %s1 = inlined_call_operand.vmem [shape: f32[1,256], index: 1, kind: input, shape index: {}]
  %s2 = inlined_call_operand.vmem [shape: f32[1,256], index: 2, kind: input, shape index: {}]
  %s3 = inlined_call_operand.vmem [shape: bf16[8,256], index: 3, kind: output, shape index: {}]
  %s4 = sld [smem:[#allocation0]]
  $region22: #{discriminator_forward.10} parent=0
    _
  %s6 = ssub.s32 1, %s4
  %s7 = scalar_select 0, %s6, %s4
  // Predicated region
  $region2: #{discriminator_forward.10} parent=0 // pred_check
    _
  $region3: #{discriminator_forward.10} parent=0 // pred_check_branch
    %9 = sbr.rel (0) target = $region5
  $region4: #{discriminator_forward.10} parent=0 // pred_region
    _
  $region5: #{discriminator_forward.10} parent=0 // pred_fallthru
    _
  // Predicated region
  $region6: #{discriminator_forward.10} parent=0 // pred_check
    _
  $region7: #{discriminator_forward.10} parent=0 // pred_check_branch
    %11 = sbr.rel (0) target = $region9
  $region8: #{discriminator_forward.10} parent=0 // pred_region
    _
  $region9: #{discriminator_forward.10} parent=0 // pred_fallthru
    _
  // Predicated region
  $region10: #{discriminator_forward.10} parent=0 // pred_check
    _
  $region11: #{discriminator_forward.10} parent=0 // pred_check_branch
    %13 = sbr.rel (0) target = $region13
  $region12: #{discriminator_forward.10} parent=0 // pred_region
    _
  $region13: #{discriminator_forward.10} parent=0 // pred_fallthru
    _
  %v14 = vld [vmem:[%s0] sm:$0xff]
  %v15 = vld [vmem:[%s0 + $0x8] sm:$0xff]
  %v16 = vld [vmem:[%s1] sm:$0x3]
  %v18 = vperm.slane %v16, 0
  %v19 = vperm.slane %v16, 1
  %v22 = vmul.f32 %v14, %v18
  %v23 = vmul.f32 %v15, %v19
  %v24 = vld [vmem:[%s2] sm:$0x3]
  %v26 = vperm.slane %v24, 0
  %v27 = vperm.slane %v24, 1
  %v30 = vadd.f32 %v22, %v26
  %v31 = vadd.f32 %v23, %v27
  %vm32 = vcmp.ge.f32.partialorder %v30, 0.0
  %vm33 = vcmp.ge.f32.partialorder %v31, 0.0
  %v34 = vmul.f32 %v30, 0.2
  %v35 = vmul.f32 %v31, 0.2
  %v36 = vsel %vm32, %v30, %v34
  %v37 = vsel %vm33, %v31, %v35
  %v38 = vpack.c.bf16 %v37, %v36
  %39 = vst [vmem:[%s3] sm:$0xff] %v38
  // Predicated region
  $region14: #{discriminator_forward.10} parent=0 // pred_check
    _
  $region15: #{discriminator_forward.10} parent=0 // pred_check_branch
    %41 = sbr.rel (0) target = $region17
  $region16: #{discriminator_forward.10} parent=0 // pred_region
    _
  $region17: #{discriminator_forward.10} parent=0 // pred_fallthru
    _
  // Predicated region
  $region18: #{discriminator_forward.10} parent=0 // pred_check
    _
  $region19: #{discriminator_forward.10} parent=0 // pred_check_branch
    %43 = sbr.rel (0) target = $region21
  $region20: #{discriminator_forward.10} parent=0 // pred_region
    _
  $region21: #{discriminator_forward.10} parent=0 // pred_fallthru
    _

// kernel: discriminator_forward.9
$region0: #{discriminator_forward.9}
  #allocation0 [shape = 'u32[]', space=smem, size = 0x4, offset = 0x4, fixed_abs, tag = 'smem constant byte address 0x4 - core index']
  #allocation1 [shape = 'u32[72,128]{1,0:T(1,128)}', space=vmem, size = 0x9000, scoped, tag = 'internal scratch']
  %s0 = inlined_call_operand.vmem [shape: bf16[8,2048], index: 0, kind: input, shape index: {}]
  %s1 = inlined_call_operand.vmem [shape: bf16[2048,256], index: 1, kind: input, shape index: {}]
  %s2 = inlined_call_operand.vmem [shape: f32[1,256], index: 2, kind: input, shape index: {}]
  %s3 = inlined_call_operand.vmem [shape: f32[8,256], index: 3, kind: output, shape index: {0}]
  %s4 = inlined_call_operand.vmem [shape: f32[1,256], index: 4, kind: output, shape index: {1}]
  %s5 = inlined_call_operand.vmem [shape: f32[1,256], index: 5, kind: output, shape index: {2}]
  %6 = xla_tuple %s3, %s4, %s5
  %s7 = sld [smem:[#allocation0]]
  $region46: #{discriminator_forward.9} parent=0
    _
  %s9 = ssub.s32 1, %s7
  %s10 = scalar_select 0, %s9, %s7
  // Predicated region
  $region2: #{discriminator_forward.9} parent=0 // pred_check
    _
  $region3: #{discriminator_forward.9} parent=0 // pred_check_branch
    %12 = sbr.rel (0) target = $region5
  $region4: #{discriminator_forward.9} parent=0 // pred_region
    _
  $region5: #{discriminator_forward.9} parent=0 // pred_fallthru
    _
  // Predicated region
  $region6: #{discriminator_forward.9} parent=0 // pred_check
    _
  $region7: #{discriminator_forward.9} parent=0 // pred_check_branch
    %14 = sbr.rel (0) target = $region9
  $region8: #{discriminator_forward.9} parent=0 // pred_region
    _
  $region9: #{discriminator_forward.9} parent=0 // pred_fallthru
    _
  // Predicated region
  $region10: #{discriminator_forward.9} parent=0 // pred_check
    _
  $region11: #{discriminator_forward.9} parent=0 // pred_check_branch
    %16 = sbr.rel (0) target = $region13
  $region12: #{discriminator_forward.9} parent=0 // pred_region
    _
  $region13: #{discriminator_forward.9} parent=0 // pred_fallthru
    _
  %v17 = vld [vmem:[%s0] sm:$0xff]
  %v18 = vld [vmem:[%s0 + $0x8] sm:$0xff]
  %v19 = vld [vmem:[%s0 + $0x10] sm:$0xff]
  %v20 = vld [vmem:[%s0 + $0x18] sm:$0xff]
  %v21 = vld [vmem:[%s0 + $0x20] sm:$0xff]
  %v22 = vld [vmem:[%s0 + $0x28] sm:$0xff]
  %v23 = vld [vmem:[%s0 + $0x30] sm:$0xff]
  %v24 = vld [vmem:[%s0 + $0x38] sm:$0xff]
  %v25 = vld [vmem:[%s1] sm:$0xff]
  %v26 = vld [vmem:[%s1 + $0x8] sm:$0xff]
  %v27 = vld [vmem:[%s1 + $0x10] sm:$0xff]
  %v28 = vld [vmem:[%s1 + $0x18] sm:$0xff]
  %v29 = vld [vmem:[%s1 + $0x20] sm:$0xff]
  %v30 = vld [vmem:[%s1 + $0x28] sm:$0xff]
  %v31 = vld [vmem:[%s1 + $0x30] sm:$0xff]
  %v32 = vld [vmem:[%s1 + $0x38] sm:$0xff]
  %v33 = vld [vmem:[%s1 + $0x40] sm:$0xff]
  %v34 = vld [vmem:[%s1 + $0x48] sm:$0xff]
  %v35 = vld [vmem:[%s1 + $0x50] sm:$0xff]
  %v36 = vld [vmem:[%s1 + $0x58] sm:$0xff]
  %v37 = vld [vmem:[%s1 + $0x60] sm:$0xff]
  %v38 = vld [vmem:[%s1 + $0x68] sm:$0xff]
  %v39 = vld [vmem:[%s1 + $0x70] sm:$0xff]
  %v40 = vld [vmem:[%s1 + $0x78] sm:$0xff]
  %v41 = vld [vmem:[%s1 + $0x80] sm:$0xff]
  %v42 = vld [vmem:[%s1 + $0x88] sm:$0xff]
  %v43 = vld [vmem:[%s1 + $0x90] sm:$0xff]
  %v44 = vld [vmem:[%s1 + $0x98] sm:$0xff]
  %v45 = vld [vmem:[%s1 + $0xa0] sm:$0xff]
  %v46 = vld [vmem:[%s1 + $0xa8] sm:$0xff]
  %v47 = vld [vmem:[%s1 + $0xb0] sm:$0xff]
  %v48 = vld [vmem:[%s1 + $0xb8] sm:$0xff]
  %v49 = vld [vmem:[%s1 + $0xc0] sm:$0xff]
  %v50 = vld [vmem:[%s1 + $0xc8] sm:$0xff]
  %v51 = vld [vmem:[%s1 + $0xd0] sm:$0xff]
  %v52 = vld [vmem:[%s1 + $0xd8] sm:$0xff]
  %v53 = vld [vmem:[%s1 + $0xe0] sm:$0xff]
  %v54 = vld [vmem:[%s1 + $0xe8] sm:$0xff]
  %v55 = vld [vmem:[%s1 + $0xf0] sm:$0xff]
  %v56 = vld [vmem:[%s1 + $0xf8] sm:$0xff]
  %v57 = vld [vmem:[%s1 + $0x100] sm:$0xff]
  %v58 = vld [vmem:[%s1 + $0x108] sm:$0xff]
  %v59 = vld [vmem:[%s1 + $0x110] sm:$0xff]
  %v60 = vld [vmem:[%s1 + $0x118] sm:$0xff]
  %v61 = vld [vmem:[%s1 + $0x120] sm:$0xff]
  %v62 = vld [vmem:[%s1 + $0x128] sm:$0xff]
  %v63 = vld [vmem:[%s1 + $0x130] sm:$0xff]
  %v64 = vld [vmem:[%s1 + $0x138] sm:$0xff]
  %v65 = vld [vmem:[%s1 + $0x140] sm:$0xff]
  %v66 = vld [vmem:[%s1 + $0x148] sm:$0xff]
  %v67 = vld [vmem:[%s1 + $0x150] sm:$0xff]
  %v68 = vld [vmem:[%s1 + $0x158] sm:$0xff]
  %v69 = vld [vmem:[%s1 + $0x160] sm:$0xff]
  %v70 = vld [vmem:[%s1 + $0x168] sm:$0xff]
  %v71 = vld [vmem:[%s1 + $0x170] sm:$0xff]
  %v72 = vld [vmem:[%s1 + $0x178] sm:$0xff]
  %v73 = vld [vmem:[%s1 + $0x180] sm:$0xff]
  %v74 = vld [vmem:[%s1 + $0x188] sm:$0xff]
  %v75 = vld [vmem:[%s1 + $0x190] sm:$0xff]
  %v76 = vld [vmem:[%s1 + $0x198] sm:$0xff]
  %v77 = vld [vmem:[%s1 + $0x1a0] sm:$0xff]
  %v78 = vld [vmem:[%s1 + $0x1a8] sm:$0xff]
  %v79 = vld [vmem:[%s1 + $0x1b0] sm:$0xff]
  %v80 = vld [vmem:[%s1 + $0x1b8] sm:$0xff]
  %v81 = vld [vmem:[%s1 + $0x1c0] sm:$0xff]
  %v82 = vld [vmem:[%s1 + $0x1c8] sm:$0xff]
  %v83 = vld [vmem:[%s1 + $0x1d0] sm:$0xff]
  %v84 = vld [vmem:[%s1 + $0x1d8] sm:$0xff]
  %v85 = vld [vmem:[%s1 + $0x1e0] sm:$0xff]
  %v86 = vld [vmem:[%s1 + $0x1e8] sm:$0xff]
  %v87 = vld [vmem:[%s1 + $0x1f0] sm:$0xff]
  %v88 = vld [vmem:[%s1 + $0x1f8] sm:$0xff]
  %v89 = vld [vmem:[%s1 + $0x200] sm:$0xff]
  %v90 = vld [vmem:[%s1 + $0x208] sm:$0xff]
  %v91 = vld [vmem:[%s1 + $0x210] sm:$0xff]
  %v92 = vld [vmem:[%s1 + $0x218] sm:$0xff]
  %v93 = vld [vmem:[%s1 + $0x220] sm:$0xff]
  %v94 = vld [vmem:[%s1 + $0x228] sm:$0xff]
  %v95 = vld [vmem:[%s1 + $0x230] sm:$0xff]
  %v96 = vld [vmem:[%s1 + $0x238] sm:$0xff]
  %v97 = vld [vmem:[%s1 + $0x240] sm:$0xff]
  %v98 = vld [vmem:[%s1 + $0x248] sm:$0xff]
  %v99 = vld [vmem:[%s1 + $0x250] sm:$0xff]
  %v100 = vld [vmem:[%s1 + $0x258] sm:$0xff]
  %v101 = vld [vmem:[%s1 + $0x260] sm:$0xff]
  %v102 = vld [vmem:[%s1 + $0x268] sm:$0xff]
  %v103 = vld [vmem:[%s1 + $0x270] sm:$0xff]
  %v104 = vld [vmem:[%s1 + $0x278] sm:$0xff]
  %v105 = vld [vmem:[%s1 + $0x280] sm:$0xff]
  %v106 = vld [vmem:[%s1 + $0x288] sm:$0xff]
  %v107 = vld [vmem:[%s1 + $0x290] sm:$0xff]
  %v108 = vld [vmem:[%s1 + $0x298] sm:$0xff]
  %v109 = vld [vmem:[%s1 + $0x2a0] sm:$0xff]
  %v110 = vld [vmem:[%s1 + $0x2a8] sm:$0xff]
  %v111 = vld [vmem:[%s1 + $0x2b0] sm:$0xff]
  %v112 = vld [vmem:[%s1 + $0x2b8] sm:$0xff]
  %v113 = vld [vmem:[%s1 + $0x2c0] sm:$0xff]
  %v114 = vld [vmem:[%s1 + $0x2c8] sm:$0xff]
  %v115 = vld [vmem:[%s1 + $0x2d0] sm:$0xff]
  %v116 = vld [vmem:[%s1 + $0x2d8] sm:$0xff]
  %v117 = vld [vmem:[%s1 + $0x2e0] sm:$0xff]
  %v118 = vld [vmem:[%s1 + $0x2e8] sm:$0xff]
  %v119 = vld [vmem:[%s1 + $0x2f0] sm:$0xff]
  %v120 = vld [vmem:[%s1 + $0x2f8] sm:$0xff]
  %v121 = vld [vmem:[%s1 + $0x300] sm:$0xff]
  %v122 = vld [vmem:[%s1 + $0x308] sm:$0xff]
  %v123 = vld [vmem:[%s1 + $0x310] sm:$0xff]
  %v124 = vld [vmem:[%s1 + $0x318] sm:$0xff]
  %v125 = vld [vmem:[%s1 + $0x320] sm:$0xff]
  %v126 = vld [vmem:[%s1 + $0x328] sm:$0xff]
  %v127 = vld [vmem:[%s1 + $0x330] sm:$0xff]
  %v128 = vld [vmem:[%s1 + $0x338] sm:$0xff]
  %v129 = vld [vmem:[%s1 + $0x340] sm:$0xff]
  %v130 = vld [vmem:[%s1 + $0x348] sm:$0xff]
  %v131 = vld [vmem:[%s1 + $0x350] sm:$0xff]
  %v132 = vld [vmem:[%s1 + $0x358] sm:$0xff]
  %v133 = vld [vmem:[%s1 + $0x360] sm:$0xff]
  %v134 = vld [vmem:[%s1 + $0x368] sm:$0xff]
  %v135 = vld [vmem:[%s1 + $0x370] sm:$0xff]
  %v136 = vld [vmem:[%s1 + $0x378] sm:$0xff]
  %v137 = vld [vmem:[%s1 + $0x380] sm:$0xff]
  %v138 = vld [vmem:[%s1 + $0x388] sm:$0xff]
  %v139 = vld [vmem:[%s1 + $0x390] sm:$0xff]
  %v140 = vld [vmem:[%s1 + $0x398] sm:$0xff]
  %v141 = vld [vmem:[%s1 + $0x3a0] sm:$0xff]
  %v142 = vld [vmem:[%s1 + $0x3a8] sm:$0xff]
  %v143 = vld [vmem:[%s1 + $0x3b0] sm:$0xff]
  %v144 = vld [vmem:[%s1 + $0x3b8] sm:$0xff]
  %v145 = vld [vmem:[%s1 + $0x3c0] sm:$0xff]
  %v146 = vld [vmem:[%s1 + $0x3c8] sm:$0xff]
  %v147 = vld [vmem:[%s1 + $0x3d0] sm:$0xff]
  %v148 = vld [vmem:[%s1 + $0x3d8] sm:$0xff]
  %v149 = vld [vmem:[%s1 + $0x3e0] sm:$0xff]
  %v150 = vld [vmem:[%s1 + $0x3e8] sm:$0xff]
  %v151 = vld [vmem:[%s1 + $0x3f0] sm:$0xff]
  %v152 = vld [vmem:[%s1 + $0x3f8] sm:$0xff]
  %v153 = vld [vmem:[%s1 + $0x400] sm:$0xff]
  %v154 = vld [vmem:[%s1 + $0x408] sm:$0xff]
  %v155 = vld [vmem:[%s1 + $0x410] sm:$0xff]
  %v156 = vld [vmem:[%s1 + $0x418] sm:$0xff]
  %v157 = vld [vmem:[%s1 + $0x420] sm:$0xff]
  %v158 = vld [vmem:[%s1 + $0x428] sm:$0xff]
  %v159 = vld [vmem:[%s1 + $0x430] sm:$0xff]
  %v160 = vld [vmem:[%s1 + $0x438] sm:$0xff]
  %v161 = vld [vmem:[%s1 + $0x440] sm:$0xff]
  %v162 = vld [vmem:[%s1 + $0x448] sm:$0xff]
  %v163 = vld [vmem:[%s1 + $0x450] sm:$0xff]
  %v164 = vld [vmem:[%s1 + $0x458] sm:$0xff]
  %v165 = vld [vmem:[%s1 + $0x460] sm:$0xff]
  %v166 = vld [vmem:[%s1 + $0x468] sm:$0xff]
  %v167 = vld [vmem:[%s1 + $0x470] sm:$0xff]
  %v168 = vld [vmem:[%s1 + $0x478] sm:$0xff]
  %v169 = vld [vmem:[%s1 + $0x480] sm:$0xff]
  %v170 = vld [vmem:[%s1 + $0x488] sm:$0xff]
  %v171 = vld [vmem:[%s1 + $0x490] sm:$0xff]
  %v172 = vld [vmem:[%s1 + $0x498] sm:$0xff]
  %v173 = vld [vmem:[%s1 + $0x4a0] sm:$0xff]
  %v174 = vld [vmem:[%s1 + $0x4a8] sm:$0xff]
  %v175 = vld [vmem:[%s1 + $0x4b0] sm:$0xff]
  %v176 = vld [vmem:[%s1 + $0x4b8] sm:$0xff]
  %v177 = vld [vmem:[%s1 + $0x4c0] sm:$0xff]
  %v178 = vld [vmem:[%s1 + $0x4c8] sm:$0xff]
  %v179 = vld [vmem:[%s1 + $0x4d0] sm:$0xff]
  %v180 = vld [vmem:[%s1 + $0x4d8] sm:$0xff]
  %v181 = vld [vmem:[%s1 + $0x4e0] sm:$0xff]
  %v182 = vld [vmem:[%s1 + $0x4e8] sm:$0xff]
  %v183 = vld [vmem:[%s1 + $0x4f0] sm:$0xff]
  %v184 = vld [vmem:[%s1 + $0x4f8] sm:$0xff]
  %v185 = vld [vmem:[%s1 + $0x500] sm:$0xff]
  %v186 = vld [vmem:[%s1 + $0x508] sm:$0xff]
  %v187 = vld [vmem:[%s1 + $0x510] sm:$0xff]
  %v188 = vld [vmem:[%s1 + $0x518] sm:$0xff]
  %v189 = vld [vmem:[%s1 + $0x520] sm:$0xff]
  %v190 = vld [vmem:[%s1 + $0x528] sm:$0xff]
  %v191 = vld [vmem:[%s1 + $0x530] sm:$0xff]
  %v192 = vld [vmem:[%s1 + $0x538] sm:$0xff]
  %v193 = vld [vmem:[%s1 + $0x540] sm:$0xff]
  %v194 = vld [vmem:[%s1 + $0x548] sm:$0xff]
  %v195 = vld [vmem:[%s1 + $0x550] sm:$0xff]
  %v196 = vld [vmem:[%s1 + $0x558] sm:$0xff]
  %v197 = vld [vmem:[%s1 + $0x560] sm:$0xff]
  %v198 = vld [vmem:[%s1 + $0x568] sm:$0xff]
  %v199 = vld [vmem:[%s1 + $0x570] sm:$0xff]
  %v200 = vld [vmem:[%s1 + $0x578] sm:$0xff]
  %v201 = vld [vmem:[%s1 + $0x580] sm:$0xff]
  %v202 = vld [vmem:[%s1 + $0x588] sm:$0xff]
  %v203 = vld [vmem:[%s1 + $0x590] sm:$0xff]
  %v204 = vld [vmem:[%s1 + $0x598] sm:$0xff]
  %v205 = vld [vmem:[%s1 + $0x5a0] sm:$0xff]
  %v206 = vld [vmem:[%s1 + $0x5a8] sm:$0xff]
  %v207 = vld [vmem:[%s1 + $0x5b0] sm:$0xff]
  %v208 = vld [vmem:[%s1 + $0x5b8] sm:$0xff]
  %v209 = vld [vmem:[%s1 + $0x5c0] sm:$0xff]
  %v210 = vld [vmem:[%s1 + $0x5c8] sm:$0xff]
  %v211 = vld [vmem:[%s1 + $0x5d0] sm:$0xff]
  %v212 = vld [vmem:[%s1 + $0x5d8] sm:$0xff]
  %v213 = vld [vmem:[%s1 + $0x5e0] sm:$0xff]
  %v214 = vld [vmem:[%s1 + $0x5e8] sm:$0xff]
  %v215 = vld [vmem:[%s1 + $0x5f0] sm:$0xff]
  %v216 = vld [vmem:[%s1 + $0x5f8] sm:$0xff]
  %v217 = vld [vmem:[%s1 + $0x600] sm:$0xff]
  %v218 = vld [vmem:[%s1 + $0x608] sm:$0xff]
  %v219 = vld [vmem:[%s1 + $0x610] sm:$0xff]
  %v220 = vld [vmem:[%s1 + $0x618] sm:$0xff]
  %v221 = vld [vmem:[%s1 + $0x620] sm:$0xff]
  %v222 = vld [vmem:[%s1 + $0x628] sm:$0xff]
  %v223 = vld [vmem:[%s1 + $0x630] sm:$0xff]
  %v224 = vld [vmem:[%s1 + $0x638] sm:$0xff]
  %v225 = vld [vmem:[%s1 + $0x640] sm:$0xff]
  %v226 = vld [vmem:[%s1 + $0x648] sm:$0xff]
  %v227 = vld [vmem:[%s1 + $0x650] sm:$0xff]
  %v228 = vld [vmem:[%s1 + $0x658] sm:$0xff]
  %v229 = vld [vmem:[%s1 + $0x660] sm:$0xff]
  %v230 = vld [vmem:[%s1 + $0x668] sm:$0xff]
  %v231 = vld [vmem:[%s1 + $0x670] sm:$0xff]
  %v232 = vld [vmem:[%s1 + $0x678] sm:$0xff]
  %v233 = vld [vmem:[%s1 + $0x680] sm:$0xff]
  %v234 = vld [vmem:[%s1 + $0x688] sm:$0xff]
  %v235 = vld [vmem:[%s1 + $0x690] sm:$0xff]
  %v236 = vld [vmem:[%s1 + $0x698] sm:$0xff]
  %v237 = vld [vmem:[%s1 + $0x6a0] sm:$0xff]
  %v238 = vld [vmem:[%s1 + $0x6a8] sm:$0xff]
  %v239 = vld [vmem:[%s1 + $0x6b0] sm:$0xff]
  %v240 = vld [vmem:[%s1 + $0x6b8] sm:$0xff]
  %v241 = vld [vmem:[%s1 + $0x6c0] sm:$0xff]
  %v242 = vld [vmem:[%s1 + $0x6c8] sm:$0xff]
  %v243 = vld [vmem:[%s1 + $0x6d0] sm:$0xff]
  %v244 = vld [vmem:[%s1 + $0x6d8] sm:$0xff]
  %v245 = vld [vmem:[%s1 + $0x6e0] sm:$0xff]
  %v246 = vld [vmem:[%s1 + $0x6e8] sm:$0xff]
  %v247 = vld [vmem:[%s1 + $0x6f0] sm:$0xff]
  %v248 = vld [vmem:[%s1 + $0x6f8] sm:$0xff]
  %v249 = vld [vmem:[%s1 + $0x700] sm:$0xff]
  %v250 = vld [vmem:[%s1 + $0x708] sm:$0xff]
  %v251 = vld [vmem:[%s1 + $0x710] sm:$0xff]
  %v252 = vld [vmem:[%s1 + $0x718] sm:$0xff]
  %v253 = vld [vmem:[%s1 + $0x720] sm:$0xff]
  %v254 = vld [vmem:[%s1 + $0x728] sm:$0xff]
  %v255 = vld [vmem:[%s1 + $0x730] sm:$0xff]
  %v256 = vld [vmem:[%s1 + $0x738] sm:$0xff]
  %v257 = vld [vmem:[%s1 + $0x740] sm:$0xff]
  %v258 = vld [vmem:[%s1 + $0x748] sm:$0xff]
  %v259 = vld [vmem:[%s1 + $0x750] sm:$0xff]
  %v260 = vld [vmem:[%s1 + $0x758] sm:$0xff]
  %v261 = vld [vmem:[%s1 + $0x760] sm:$0xff]
  %v262 = vld [vmem:[%s1 + $0x768] sm:$0xff]
  %v263 = vld [vmem:[%s1 + $0x770] sm:$0xff]
  %v264 = vld [vmem:[%s1 + $0x778] sm:$0xff]
  %v265 = vld [vmem:[%s1 + $0x780] sm:$0xff]
  %v266 = vld [vmem:[%s1 + $0x788] sm:$0xff]
  %v267 = vld [vmem:[%s1 + $0x790] sm:$0xff]
  %v268 = vld [vmem:[%s1 + $0x798] sm:$0xff]
  %v269 = vld [vmem:[%s1 + $0x7a0] sm:$0xff]
  %v270 = vld [vmem:[%s1 + $0x7a8] sm:$0xff]
  %v271 = vld [vmem:[%s1 + $0x7b0] sm:$0xff]
  %v272 = vld [vmem:[%s1 + $0x7b8] sm:$0xff]
  %v273 = vld [vmem:[%s1 + $0x7c0] sm:$0xff]
  %v274 = vld [vmem:[%s1 + $0x7c8] sm:$0xff]
  %v275 = vld [vmem:[%s1 + $0x7d0] sm:$0xff]
  %v276 = vld [vmem:[%s1 + $0x7d8] sm:$0xff]
  %v277 = vld [vmem:[%s1 + $0x7e0] sm:$0xff]
  %v278 = vld [vmem:[%s1 + $0x7e8] sm:$0xff]
  %v279 = vld [vmem:[%s1 + $0x7f0] sm:$0xff]
  %v280 = vld [vmem:[%s1 + $0x7f8] sm:$0xff]
  %v281 = vld [vmem:[%s2] sm:$0x3]
  %v283 = vperm.slane %v281, 0
  %v284 = vperm.slane %v281, 1
  %v295 = vunpack.c.l.b16 %v17
  %v296 = vunpack.c.h.b16 %v17
  %v297 = vunpack.c.l.b16 %v18
  %v298 = vunpack.c.h.b16 %v18
  %v299 = vunpack.c.l.b16 %v19
  %v300 = vunpack.c.h.b16 %v19
  %v301 = vunpack.c.l.b16 %v20
  %v302 = vunpack.c.h.b16 %v20
  %v303 = vunpack.c.l.b16 %v21
  %v304 = vunpack.c.h.b16 %v21
  %v305 = vunpack.c.l.b16 %v22
  %v306 = vunpack.c.h.b16 %v22
  %v307 = vunpack.c.l.b16 %v23
  %v308 = vunpack.c.h.b16 %v23
  %v309 = vunpack.c.l.b16 %v24
  %v310 = vunpack.c.h.b16 %v24
  %v311 = vpack.c.b16 %v295, %v295
  %v312 = vpack.c.b16 %v296, %v296
  %v313 = vpack.c.b16 %v297, %v297
  %v314 = vpack.c.b16 %v298, %v298
  %v315 = vpack.c.b16 %v299, %v299
  %v316 = vpack.c.b16 %v300, %v300
  %v317 = vpack.c.b16 %v301, %v301
  %v318 = vpack.c.b16 %v302, %v302
  %v319 = vpack.c.b16 %v303, %v303
  %v320 = vpack.c.b16 %v304, %v304
  %v321 = vpack.c.b16 %v305, %v305
  %v322 = vpack.c.b16 %v306, %v306
  %v323 = vpack.c.b16 %v307, %v307
  %v324 = vpack.c.b16 %v308, %v308
  %v325 = vpack.c.b16 %v309, %v309
  %v326 = vpack.c.b16 %v310, %v310
  %v599 = vunpack.c.l.b16 %v25
  %v600 = vunpack.c.h.b16 %v25
  %v601 = vunpack.c.l.b16 %v26
  %v602 = vunpack.c.h.b16 %v26
  %v603 = vunpack.c.l.b16 %v27
  %v604 = vunpack.c.h.b16 %v27
  %v605 = vunpack.c.l.b16 %v28
  %v606 = vunpack.c.h.b16 %v28
  %v607 = vunpack.c.l.b16 %v29
  %v608 = vunpack.c.h.b16 %v29
  %v609 = vunpack.c.l.b16 %v30
  %v610 = vunpack.c.h.b16 %v30
  %v611 = vunpack.c.l.b16 %v31
  %v612 = vunpack.c.h.b16 %v31
  %v613 = vunpack.c.l.b16 %v32
  %v614 = vunpack.c.h.b16 %v32
  %v615 = vunpack.c.l.b16 %v33
  %v616 = vunpack.c.h.b16 %v33
  %v617 = vunpack.c.l.b16 %v34
  %v618 = vunpack.c.h.b16 %v34
  %v619 = vunpack.c.l.b16 %v35
  %v620 = vunpack.c.h.b16 %v35
  %v621 = vunpack.c.l.b16 %v36
  %v622 = vunpack.c.h.b16 %v36
  %v623 = vunpack.c.l.b16 %v37
  %v624 = vunpack.c.h.b16 %v37
  %v625 = vunpack.c.l.b16 %v38
  %v626 = vunpack.c.h.b16 %v38
  %v627 = vunpack.c.l.b16 %v39
  %v628 = vunpack.c.h.b16 %v39
  %v629 = vunpack.c.l.b16 %v40
  %v630 = vunpack.c.h.b16 %v40
  %v631 = vunpack.c.l.b16 %v41
  %v632 = vunpack.c.h.b16 %v41
  %v633 = vunpack.c.l.b16 %v42
  %v634 = vunpack.c.h.b16 %v42
  %v635 = vunpack.c.l.b16 %v43
  %v636 = vunpack.c.h.b16 %v43
  %v637 = vunpack.c.l.b16 %v44
  %v638 = vunpack.c.h.b16 %v44
  %v639 = vunpack.c.l.b16 %v45
  %v640 = vunpack.c.h.b16 %v45
  %v641 = vunpack.c.l.b16 %v46
  %v642 = vunpack.c.h.b16 %v46
  %v643 = vunpack.c.l.b16 %v47
  %v644 = vunpack.c.h.b16 %v47
  %v645 = vunpack.c.l.b16 %v48
  %v646 = vunpack.c.h.b16 %v48
  %v647 = vunpack.c.l.b16 %v49
  %v648 = vunpack.c.h.b16 %v49
  %v649 = vunpack.c.l.b16 %v50
  %v650 = vunpack.c.h.b16 %v50
  %v651 = vunpack.c.l.b16 %v51
  %v652 = vunpack.c.h.b16 %v51
  %v653 = vunpack.c.l.b16 %v52
  %v654 = vunpack.c.h.b16 %v52
  %v655 = vunpack.c.l.b16 %v53
  %v656 = vunpack.c.h.b16 %v53
  %v657 = vunpack.c.l.b16 %v54
  %v658 = vunpack.c.h.b16 %v54
  %v659 = vunpack.c.l.b16 %v55
  %v660 = vunpack.c.h.b16 %v55
  %v661 = vunpack.c.l.b16 %v56
  %v662 = vunpack.c.h.b16 %v56
  %v663 = vunpack.c.l.b16 %v57
  %v664 = vunpack.c.h.b16 %v57
  %v665 = vunpack.c.l.b16 %v58
  %v666 = vunpack.c.h.b16 %v58
  %v667 = vunpack.c.l.b16 %v59
  %v668 = vunpack.c.h.b16 %v59
  %v669 = vunpack.c.l.b16 %v60
  %v670 = vunpack.c.h.b16 %v60
  %v671 = vunpack.c.l.b16 %v61
  %v672 = vunpack.c.h.b16 %v61
  %v673 = vunpack.c.l.b16 %v62
  %v674 = vunpack.c.h.b16 %v62
  %v675 = vunpack.c.l.b16 %v63
  %v676 = vunpack.c.h.b16 %v63
  %v677 = vunpack.c.l.b16 %v64
  %v678 = vunpack.c.h.b16 %v64
  %v679 = vunpack.c.l.b16 %v65
  %v680 = vunpack.c.h.b16 %v65
  %v681 = vunpack.c.l.b16 %v66
  %v682 = vunpack.c.h.b16 %v66
  %v683 = vunpack.c.l.b16 %v67
  %v684 = vunpack.c.h.b16 %v67
  %v685 = vunpack.c.l.b16 %v68
  %v686 = vunpack.c.h.b16 %v68
  %v687 = vunpack.c.l.b16 %v69
  %v688 = vunpack.c.h.b16 %v69
  %v689 = vunpack.c.l.b16 %v70
  %v690 = vunpack.c.h.b16 %v70
  %v691 = vunpack.c.l.b16 %v71
  %v692 = vunpack.c.h.b16 %v71
  %v693 = vunpack.c.l.b16 %v72
  %v694 = vunpack.c.h.b16 %v72
  %v695 = vunpack.c.l.b16 %v73
  %v696 = vunpack.c.h.b16 %v73
  %v697 = vunpack.c.l.b16 %v74
  %v698 = vunpack.c.h.b16 %v74
  %v699 = vunpack.c.l.b16 %v75
  %v700 = vunpack.c.h.b16 %v75
  %v701 = vunpack.c.l.b16 %v76
  %v702 = vunpack.c.h.b16 %v76
  %v703 = vunpack.c.l.b16 %v77
  %v704 = vunpack.c.h.b16 %v77
  %v705 = vunpack.c.l.b16 %v78
  %v706 = vunpack.c.h.b16 %v78
  %v707 = vunpack.c.l.b16 %v79
  %v708 = vunpack.c.h.b16 %v79
  %v709 = vunpack.c.l.b16 %v80
  %v710 = vunpack.c.h.b16 %v80
  %v711 = vunpack.c.l.b16 %v81
  %v712 = vunpack.c.h.b16 %v81
  %v713 = vunpack.c.l.b16 %v82
  %v714 = vunpack.c.h.b16 %v82
  %v715 = vunpack.c.l.b16 %v83
  %v716 = vunpack.c.h.b16 %v83
  %v717 = vunpack.c.l.b16 %v84
  %v718 = vunpack.c.h.b16 %v84
  %v719 = vunpack.c.l.b16 %v85
  %v720 = vunpack.c.h.b16 %v85
  %v721 = vunpack.c.l.b16 %v86
  %v722 = vunpack.c.h.b16 %v86
  %v723 = vunpack.c.l.b16 %v87
  %v724 = vunpack.c.h.b16 %v87
  %v725 = vunpack.c.l.b16 %v88
  %v726 = vunpack.c.h.b16 %v88
  %v727 = vunpack.c.l.b16 %v89
  %v728 = vunpack.c.h.b16 %v89
  %v729 = vunpack.c.l.b16 %v90
  %v730 = vunpack.c.h.b16 %v90
  %v731 = vunpack.c.l.b16 %v91
  %v732 = vunpack.c.h.b16 %v91
  %v733 = vunpack.c.l.b16 %v92
  %v734 = vunpack.c.h.b16 %v92
  %v735 = vunpack.c.l.b16 %v93
  %v736 = vunpack.c.h.b16 %v93
  %v737 = vunpack.c.l.b16 %v94
  %v738 = vunpack.c.h.b16 %v94
  %v739 = vunpack.c.l.b16 %v95
  %v740 = vunpack.c.h.b16 %v95
  %v741 = vunpack.c.l.b16 %v96
  %v742 = vunpack.c.h.b16 %v96
  %v743 = vunpack.c.l.b16 %v97
  %v744 = vunpack.c.h.b16 %v97
  %v745 = vunpack.c.l.b16 %v98
  %v746 = vunpack.c.h.b16 %v98
  %v747 = vunpack.c.l.b16 %v99
  %v748 = vunpack.c.h.b16 %v99
  %v749 = vunpack.c.l.b16 %v100
  %v750 = vunpack.c.h.b16 %v100
  %v751 = vunpack.c.l.b16 %v101
  %v752 = vunpack.c.h.b16 %v101
  %v753 = vunpack.c.l.b16 %v102
  %v754 = vunpack.c.h.b16 %v102
  %v755 = vunpack.c.l.b16 %v103
  %v756 = vunpack.c.h.b16 %v103
  %v757 = vunpack.c.l.b16 %v104
  %v758 = vunpack.c.h.b16 %v104
  %v759 = vunpack.c.l.b16 %v105
  %v760 = vunpack.c.h.b16 %v105
  %v761 = vunpack.c.l.b16 %v106
  %v762 = vunpack.c.h.b16 %v106
  %v763 = vunpack.c.l.b16 %v107
  %v764 = vunpack.c.h.b16 %v107
  %v765 = vunpack.c.l.b16 %v108
  %v766 = vunpack.c.h.b16 %v108
  %v767 = vunpack.c.l.b16 %v109
  %v768 = vunpack.c.h.b16 %v109
  %v769 = vunpack.c.l.b16 %v110
  %v770 = vunpack.c.h.b16 %v110
  %v771 = vunpack.c.l.b16 %v111
  %v772 = vunpack.c.h.b16 %v111
  %v773 = vunpack.c.l.b16 %v112
  %v774 = vunpack.c.h.b16 %v112
  %v775 = vunpack.c.l.b16 %v113
  %v776 = vunpack.c.h.b16 %v113
  %v777 = vunpack.c.l.b16 %v114
  %v778 = vunpack.c.h.b16 %v114
  %v779 = vunpack.c.l.b16 %v115
  %v780 = vunpack.c.h.b16 %v115
  %v781 = vunpack.c.l.b16 %v116
  %v782 = vunpack.c.h.b16 %v116
  %v783 = vunpack.c.l.b16 %v117
  %v784 = vunpack.c.h.b16 %v117
  %v785 = vunpack.c.l.b16 %v118
  %v786 = vunpack.c.h.b16 %v118
  %v787 = vunpack.c.l.b16 %v119
  %v788 = vunpack.c.h.b16 %v119
  %v789 = vunpack.c.l.b16 %v120
  %v790 = vunpack.c.h.b16 %v120
  %v791 = vunpack.c.l.b16 %v121
  %v792 = vunpack.c.h.b16 %v121
  %v793 = vunpack.c.l.b16 %v122
  %v794 = vunpack.c.h.b16 %v122
  %v795 = vunpack.c.l.b16 %v123
  %v796 = vunpack.c.h.b16 %v123
  %v797 = vunpack.c.l.b16 %v124
  %v798 = vunpack.c.h.b16 %v124
  %v799 = vunpack.c.l.b16 %v125
  %v800 = vunpack.c.h.b16 %v125
  %v801 = vunpack.c.l.b16 %v126
  %v802 = vunpack.c.h.b16 %v126
  %v803 = vunpack.c.l.b16 %v127
  %v804 = vunpack.c.h.b16 %v127
  %v805 = vunpack.c.l.b16 %v128
  %v806 = vunpack.c.h.b16 %v128
  %v807 = vunpack.c.l.b16 %v129
  %v808 = vunpack.c.h.b16 %v129
  %v809 = vunpack.c.l.b16 %v130
  %v810 = vunpack.c.h.b16 %v130
  %v811 = vunpack.c.l.b16 %v131
  %v812 = vunpack.c.h.b16 %v131
  %v813 = vunpack.c.l.b16 %v132
  %v814 = vunpack.c.h.b16 %v132
  %v815 = vunpack.c.l.b16 %v133
  %v816 = vunpack.c.h.b16 %v133
  %v817 = vunpack.c.l.b16 %v134
  %v818 = vunpack.c.h.b16 %v134
  %v819 = vunpack.c.l.b16 %v135
  %v820 = vunpack.c.h.b16 %v135
  %v821 = vunpack.c.l.b16 %v136
  %v822 = vunpack.c.h.b16 %v136
  %v823 = vunpack.c.l.b16 %v137
  %v824 = vunpack.c.h.b16 %v137
  %v825 = vunpack.c.l.b16 %v138
  %v826 = vunpack.c.h.b16 %v138
  %v827 = vunpack.c.l.b16 %v139
  %v828 = vunpack.c.h.b16 %v139
  %v829 = vunpack.c.l.b16 %v140
  %v830 = vunpack.c.h.b16 %v140
  %v831 = vunpack.c.l.b16 %v141
  %v832 = vunpack.c.h.b16 %v141
  %v833 = vunpack.c.l.b16 %v142
  %v834 = vunpack.c.h.b16 %v142
  %v835 = vunpack.c.l.b16 %v143
  %v836 = vunpack.c.h.b16 %v143
  %v837 = vunpack.c.l.b16 %v144
  %v838 = vunpack.c.h.b16 %v144
  %v839 = vunpack.c.l.b16 %v145
  %v840 = vunpack.c.h.b16 %v145
  %v841 = vunpack.c.l.b16 %v146
  %v842 = vunpack.c.h.b16 %v146
  %v843 = vunpack.c.l.b16 %v147
  %v844 = vunpack.c.h.b16 %v147
  %v845 = vunpack.c.l.b16 %v148
  %v846 = vunpack.c.h.b16 %v148
  %v847 = vunpack.c.l.b16 %v149
  %v848 = vunpack.c.h.b16 %v149
  %v849 = vunpack.c.l.b16 %v150
  %v850 = vunpack.c.h.b16 %v150
  %v851 = vunpack.c.l.b16 %v151
  %v852 = vunpack.c.h.b16 %v151
  %v853 = vunpack.c.l.b16 %v152
  %v854 = vunpack.c.h.b16 %v152
  %v855 = vunpack.c.l.b16 %v153
  %v856 = vunpack.c.h.b16 %v153
  %v857 = vunpack.c.l.b16 %v154
  %v858 = vunpack.c.h.b16 %v154
  %v859 = vunpack.c.l.b16 %v155
  %v860 = vunpack.c.h.b16 %v155
  %v861 = vunpack.c.l.b16 %v156
  %v862 = vunpack.c.h.b16 %v156
  %v863 = vunpack.c.l.b16 %v157
  %v864 = vunpack.c.h.b16 %v157
  %v865 = vunpack.c.l.b16 %v158
  %v866 = vunpack.c.h.b16 %v158
  %v867 = vunpack.c.l.b16 %v159
  %v868 = vunpack.c.h.b16 %v159
  %v869 = vunpack.c.l.b16 %v160
  %v870 = vunpack.c.h.b16 %v160
  %v871 = vunpack.c.l.b16 %v161
  %v872 = vunpack.c.h.b16 %v161
  %v873 = vunpack.c.l.b16 %v162
  %v874 = vunpack.c.h.b16 %v162
  %v875 = vunpack.c.l.b16 %v163
  %v876 = vunpack.c.h.b16 %v163
  %v877 = vunpack.c.l.b16 %v164
  %v878 = vunpack.c.h.b16 %v164
  %v879 = vunpack.c.l.b16 %v165
  %v880 = vunpack.c.h.b16 %v165
  %v881 = vunpack.c.l.b16 %v166
  %v882 = vunpack.c.h.b16 %v166
  %v883 = vunpack.c.l.b16 %v167
  %v884 = vunpack.c.h.b16 %v167
  %v885 = vunpack.c.l.b16 %v168
  %v886 = vunpack.c.h.b16 %v168
  %v887 = vunpack.c.l.b16 %v169
  %v888 = vunpack.c.h.b16 %v169
  %v889 = vunpack.c.l.b16 %v170
  %v890 = vunpack.c.h.b16 %v170
  %v891 = vunpack.c.l.b16 %v171
  %v892 = vunpack.c.h.b16 %v171
  %v893 = vunpack.c.l.b16 %v172
  %v894 = vunpack.c.h.b16 %v172
  %v895 = vunpack.c.l.b16 %v173
  %v896 = vunpack.c.h.b16 %v173
  %v897 = vunpack.c.l.b16 %v174
  %v898 = vunpack.c.h.b16 %v174
  %v899 = vunpack.c.l.b16 %v175
  %v900 = vunpack.c.h.b16 %v175
  %v901 = vunpack.c.l.b16 %v176
  %v902 = vunpack.c.h.b16 %v176
  %v903 = vunpack.c.l.b16 %v177
  %v904 = vunpack.c.h.b16 %v177
  %v905 = vunpack.c.l.b16 %v178
  %v906 = vunpack.c.h.b16 %v178
  %v907 = vunpack.c.l.b16 %v179
  %v908 = vunpack.c.h.b16 %v179
  %v909 = vunpack.c.l.b16 %v180
  %v910 = vunpack.c.h.b16 %v180
  %v911 = vunpack.c.l.b16 %v181
  %v912 = vunpack.c.h.b16 %v181
  %v913 = vunpack.c.l.b16 %v182
  %v914 = vunpack.c.h.b16 %v182
  %v915 = vunpack.c.l.b16 %v183
  %v916 = vunpack.c.h.b16 %v183
  %v917 = vunpack.c.l.b16 %v184
  %v918 = vunpack.c.h.b16 %v184
  %v919 = vunpack.c.l.b16 %v185
  %v920 = vunpack.c.h.b16 %v185
  %v921 = vunpack.c.l.b16 %v186
  %v922 = vunpack.c.h.b16 %v186
  %v923 = vunpack.c.l.b16 %v187
  %v924 = vunpack.c.h.b16 %v187
  %v925 = vunpack.c.l.b16 %v188
  %v926 = vunpack.c.h.b16 %v188
  %v927 = vunpack.c.l.b16 %v189
  %v928 = vunpack.c.h.b16 %v189
  %v929 = vunpack.c.l.b16 %v190
  %v930 = vunpack.c.h.b16 %v190
  %v931 = vunpack.c.l.b16 %v191
  %v932 = vunpack.c.h.b16 %v191
  %v933 = vunpack.c.l.b16 %v192
  %v934 = vunpack.c.h.b16 %v192
  %v935 = vunpack.c.l.b16 %v193
  %v936 = vunpack.c.h.b16 %v193
  %v937 = vunpack.c.l.b16 %v194
  %v938 = vunpack.c.h.b16 %v194
  %v939 = vunpack.c.l.b16 %v195
  %v940 = vunpack.c.h.b16 %v195
  %v941 = vunpack.c.l.b16 %v196
  %v942 = vunpack.c.h.b16 %v196
  %v943 = vunpack.c.l.b16 %v197
  %v944 = vunpack.c.h.b16 %v197
  %v945 = vunpack.c.l.b16 %v198
  %v946 = vunpack.c.h.b16 %v198
  %v947 = vunpack.c.l.b16 %v199
  %v948 = vunpack.c.h.b16 %v199
  %v949 = vunpack.c.l.b16 %v200
  %v950 = vunpack.c.h.b16 %v200
  %v951 = vunpack.c.l.b16 %v201
  %v952 = vunpack.c.h.b16 %v201
  %v953 = vunpack.c.l.b16 %v202
  %v954 = vunpack.c.h.b16 %v202
  %v955 = vunpack.c.l.b16 %v203
  %v956 = vunpack.c.h.b16 %v203
  %v957 = vunpack.c.l.b16 %v204
  %v958 = vunpack.c.h.b16 %v204
  %v959 = vunpack.c.l.b16 %v205
  %v960 = vunpack.c.h.b16 %v205
  %v961 = vunpack.c.l.b16 %v206
  %v962 = vunpack.c.h.b16 %v206
  %v963 = vunpack.c.l.b16 %v207
  %v964 = vunpack.c.h.b16 %v207
  %v965 = vunpack.c.l.b16 %v208
  %v966 = vunpack.c.h.b16 %v208
  %v967 = vunpack.c.l.b16 %v209
  %v968 = vunpack.c.h.b16 %v209
  %v969 = vunpack.c.l.b16 %v210
  %v970 = vunpack.c.h.b16 %v210
  %v971 = vunpack.c.l.b16 %v211
  %v972 = vunpack.c.h.b16 %v211
  %v973 = vunpack.c.l.b16 %v212
  %v974 = vunpack.c.h.b16 %v212
  %v975 = vunpack.c.l.b16 %v213
  %v976 = vunpack.c.h.b16 %v213
  %v977 = vunpack.c.l.b16 %v214
  %v978 = vunpack.c.h.b16 %v214
  %v979 = vunpack.c.l.b16 %v215
  %v980 = vunpack.c.h.b16 %v215
  %v981 = vunpack.c.l.b16 %v216
  %v982 = vunpack.c.h.b16 %v216
  %v983 = vunpack.c.l.b16 %v217
  %v984 = vunpack.c.h.b16 %v217
  %v985 = vunpack.c.l.b16 %v218
  %v986 = vunpack.c.h.b16 %v218
  %v987 = vunpack.c.l.b16 %v219
  %v988 = vunpack.c.h.b16 %v219
  %v989 = vunpack.c.l.b16 %v220
  %v990 = vunpack.c.h.b16 %v220
  %v991 = vunpack.c.l.b16 %v221
  %v992 = vunpack.c.h.b16 %v221
  %v993 = vunpack.c.l.b16 %v222
  %v994 = vunpack.c.h.b16 %v222
  %v995 = vunpack.c.l.b16 %v223
  %v996 = vunpack.c.h.b16 %v223
  %v997 = vunpack.c.l.b16 %v224
  %v998 = vunpack.c.h.b16 %v224
  %v999 = vunpack.c.l.b16 %v225
  %v1000 = vunpack.c.h.b16 %v225
  %v1001 = vunpack.c.l.b16 %v226
  %v1002 = vunpack.c.h.b16 %v226
  %v1003 = vunpack.c.l.b16 %v227
  %v1004 = vunpack.c.h.b16 %v227
  %v1005 = vunpack.c.l.b16 %v228
  %v1006 = vunpack.c.h.b16 %v228
  %v1007 = vunpack.c.l.b16 %v229
  %v1008 = vunpack.c.h.b16 %v229
  %v1009 = vunpack.c.l.b16 %v230
  %v1010 = vunpack.c.h.b16 %v230
  %v1011 = vunpack.c.l.b16 %v231
  %v1012 = vunpack.c.h.b16 %v231
  %v1013 = vunpack.c.l.b16 %v232
  %v1014 = vunpack.c.h.b16 %v232
  %v1015 = vunpack.c.l.b16 %v233
  %v1016 = vunpack.c.h.b16 %v233
  %v1017 = vunpack.c.l.b16 %v234
  %v1018 = vunpack.c.h.b16 %v234
  %v1019 = vunpack.c.l.b16 %v235
  %v1020 = vunpack.c.h.b16 %v235
  %v1021 = vunpack.c.l.b16 %v236
  %v1022 = vunpack.c.h.b16 %v236
  %v1023 = vunpack.c.l.b16 %v237
  %v1024 = vunpack.c.h.b16 %v237
  %v1025 = vunpack.c.l.b16 %v238
  %v1026 = vunpack.c.h.b16 %v238
  %v1027 = vunpack.c.l.b16 %v239
  %v1028 = vunpack.c.h.b16 %v239
  %v1029 = vunpack.c.l.b16 %v240
  %v1030 = vunpack.c.h.b16 %v240
  %v1031 = vunpack.c.l.b16 %v241
  %v1032 = vunpack.c.h.b16 %v241
  %v1033 = vunpack.c.l.b16 %v242
  %v1034 = vunpack.c.h.b16 %v242
  %v1035 = vunpack.c.l.b16 %v243
  %v1036 = vunpack.c.h.b16 %v243
  %v1037 = vunpack.c.l.b16 %v244
  %v1038 = vunpack.c.h.b16 %v244
  %v1039 = vunpack.c.l.b16 %v245
  %v1040 = vunpack.c.h.b16 %v245
  %v1041 = vunpack.c.l.b16 %v246
  %v1042 = vunpack.c.h.b16 %v246
  %v1043 = vunpack.c.l.b16 %v247
  %v1044 = vunpack.c.h.b16 %v247
  %v1045 = vunpack.c.l.b16 %v248
  %v1046 = vunpack.c.h.b16 %v248
  %v1047 = vunpack.c.l.b16 %v249
  %v1048 = vunpack.c.h.b16 %v249
  %v1049 = vunpack.c.l.b16 %v250
  %v1050 = vunpack.c.h.b16 %v250
  %v1051 = vunpack.c.l.b16 %v251
  %v1052 = vunpack.c.h.b16 %v251
  %v1053 = vunpack.c.l.b16 %v252
  %v1054 = vunpack.c.h.b16 %v252
  %v1055 = vunpack.c.l.b16 %v253
  %v1056 = vunpack.c.h.b16 %v253
  %v1057 = vunpack.c.l.b16 %v254
  %v1058 = vunpack.c.h.b16 %v254
  %v1059 = vunpack.c.l.b16 %v255
  %v1060 = vunpack.c.h.b16 %v255
  %v1061 = vunpack.c.l.b16 %v256
  %v1062 = vunpack.c.h.b16 %v256
  %v1063 = vunpack.c.l.b16 %v257
  %v1064 = vunpack.c.h.b16 %v257
  %v1065 = vunpack.c.l.b16 %v258
  %v1066 = vunpack.c.h.b16 %v258
  %v1067 = vunpack.c.l.b16 %v259
  %v1068 = vunpack.c.h.b16 %v259
  %v1069 = vunpack.c.l.b16 %v260
  %v1070 = vunpack.c.h.b16 %v260
  %v1071 = vunpack.c.l.b16 %v261
  %v1072 = vunpack.c.h.b16 %v261
  %v1073 = vunpack.c.l.b16 %v262
  %v1074 = vunpack.c.h.b16 %v262
  %v1075 = vunpack.c.l.b16 %v263
  %v1076 = vunpack.c.h.b16 %v263
  %v1077 = vunpack.c.l.b16 %v264
  %v1078 = vunpack.c.h.b16 %v264
  %v1079 = vunpack.c.l.b16 %v265
  %v1080 = vunpack.c.h.b16 %v265
  %v1081 = vunpack.c.l.b16 %v266
  %v1082 = vunpack.c.h.b16 %v266
  %v1083 = vunpack.c.l.b16 %v267
  %v1084 = vunpack.c.h.b16 %v267
  %v1085 = vunpack.c.l.b16 %v268
  %v1086 = vunpack.c.h.b16 %v268
  %v1087 = vunpack.c.l.b16 %v269
  %v1088 = vunpack.c.h.b16 %v269
  %v1089 = vunpack.c.l.b16 %v270
  %v1090 = vunpack.c.h.b16 %v270
  %v1091 = vunpack.c.l.b16 %v271
  %v1092 = vunpack.c.h.b16 %v271
  %v1093 = vunpack.c.l.b16 %v272
  %v1094 = vunpack.c.h.b16 %v272
  %v1095 = vunpack.c.l.b16 %v273
  %v1096 = vunpack.c.h.b16 %v273
  %v1097 = vunpack.c.l.b16 %v274
  %v1098 = vunpack.c.h.b16 %v274
  %v1099 = vunpack.c.l.b16 %v275
  %v1100 = vunpack.c.h.b16 %v275
  %v1101 = vunpack.c.l.b16 %v276
  %v1102 = vunpack.c.h.b16 %v276
  %v1103 = vunpack.c.l.b16 %v277
  %v1104 = vunpack.c.h.b16 %v277
  %v1105 = vunpack.c.l.b16 %v278
  %v1106 = vunpack.c.h.b16 %v278
  %v1107 = vunpack.c.l.b16 %v279
  %v1108 = vunpack.c.h.b16 %v279
  %v1109 = vunpack.c.l.b16 %v280
  %v1110 = vunpack.c.h.b16 %v280
  %v1111 = vpack.c.b16 %v601, %v599
  %v1112 = vpack.c.b16 %v602, %v600
  %v1113 = vpack.c.b16 %v605, %v603
  %v1114 = vpack.c.b16 %v606, %v604
  %v1115 = vpack.c.b16 %v609, %v607
  %v1116 = vpack.c.b16 %v610, %v608
  %v1117 = vpack.c.b16 %v613, %v611
  %v1118 = vpack.c.b16 %v614, %v612
  %v1119 = vpack.c.b16 %v617, %v615
  %v1120 = vpack.c.b16 %v618, %v616
  %v1121 = vpack.c.b16 %v621, %v619
  %v1122 = vpack.c.b16 %v622, %v620
  %v1123 = vpack.c.b16 %v625, %v623
  %v1124 = vpack.c.b16 %v626, %v624
  %v1125 = vpack.c.b16 %v629, %v627
  %v1126 = vpack.c.b16 %v630, %v628
  %v1127 = vpack.c.b16 %v633, %v631
  %v1128 = vpack.c.b16 %v634, %v632
  %v1129 = vpack.c.b16 %v637, %v635
  %v1130 = vpack.c.b16 %v638, %v636
  %v1131 = vpack.c.b16 %v641, %v639
  %v1132 = vpack.c.b16 %v642, %v640
  %v1133 = vpack.c.b16 %v645, %v643
  %v1134 = vpack.c.b16 %v646, %v644
  %v1135 = vpack.c.b16 %v649, %v647
  %v1136 = vpack.c.b16 %v650, %v648
  %v1137 = vpack.c.b16 %v653, %v651
  %v1138 = vpack.c.b16 %v654, %v652
  %v1139 = vpack.c.b16 %v657, %v655
  %v1140 = vpack.c.b16 %v658, %v656
  %v1141 = vpack.c.b16 %v661, %v659
  %v1142 = vpack.c.b16 %v662, %v660
  %v1143 = vpack.c.b16 %v665, %v663
  %v1144 = vpack.c.b16 %v666, %v664
  %v1145 = vpack.c.b16 %v669, %v667
  %v1146 = vpack.c.b16 %v670, %v668
  %v1147 = vpack.c.b16 %v673, %v671
  %v1148 = vpack.c.b16 %v674, %v672
  %v1149 = vpack.c.b16 %v677, %v675
  %v1150 = vpack.c.b16 %v678, %v676
  %v1151 = vpack.c.b16 %v681, %v679
  %v1152 = vpack.c.b16 %v682, %v680
  %v1153 = vpack.c.b16 %v685, %v683
  %v1154 = vpack.c.b16 %v686, %v684
  %v1155 = vpack.c.b16 %v689, %v687
  %v1156 = vpack.c.b16 %v690, %v688
  %v1157 = vpack.c.b16 %v693, %v691
  %v1158 = vpack.c.b16 %v694, %v692
  %v1159 = vpack.c.b16 %v697, %v695
  %v1160 = vpack.c.b16 %v698, %v696
  %v1161 = vpack.c.b16 %v701, %v699
  %v1162 = vpack.c.b16 %v702, %v700
  %v1163 = vpack.c.b16 %v705, %v703
  %v1164 = vpack.c.b16 %v706, %v704
  %v1165 = vpack.c.b16 %v709, %v707
  %v1166 = vpack.c.b16 %v710, %v708
  %v1167 = vpack.c.b16 %v713, %v711
  %v1168 = vpack.c.b16 %v714, %v712
  %v1169 = vpack.c.b16 %v717, %v715
  %v1170 = vpack.c.b16 %v718, %v716
  %v1171 = vpack.c.b16 %v721, %v719
  %v1172 = vpack.c.b16 %v722, %v720
  %v1173 = vpack.c.b16 %v725, %v723
  %v1174 = vpack.c.b16 %v726, %v724
  %v1175 = vpack.c.b16 %v729, %v727
  %v1176 = vpack.c.b16 %v730, %v728
  %v1177 = vpack.c.b16 %v733, %v731
  %v1178 = vpack.c.b16 %v734, %v732
  %v1179 = vpack.c.b16 %v737, %v735
  %v1180 = vpack.c.b16 %v738, %v736
  %v1181 = vpack.c.b16 %v741, %v739
  %v1182 = vpack.c.b16 %v742, %v740
  %v1183 = vpack.c.b16 %v745, %v743
  %v1184 = vpack.c.b16 %v746, %v744
  %v1185 = vpack.c.b16 %v749, %v747
  %v1186 = vpack.c.b16 %v750, %v748
  %v1187 = vpack.c.b16 %v753, %v751
  %v1188 = vpack.c.b16 %v754, %v752
  %v1189 = vpack.c.b16 %v757, %v755
  %v1190 = vpack.c.b16 %v758, %v756
  %v1191 = vpack.c.b16 %v761, %v759
  %v1192 = vpack.c.b16 %v762, %v760
  %v1193 = vpack.c.b16 %v765, %v763
  %v1194 = vpack.c.b16 %v766, %v764
  %v1195 = vpack.c.b16 %v769, %v767
  %v1196 = vpack.c.b16 %v770, %v768
  %v1197 = vpack.c.b16 %v773, %v771
  %v1198 = vpack.c.b16 %v774, %v772
  %v1199 = vpack.c.b16 %v777, %v775
  %v1200 = vpack.c.b16 %v778, %v776
  %v1201 = vpack.c.b16 %v781, %v779
  %v1202 = vpack.c.b16 %v782, %v780
  %v1203 = vpack.c.b16 %v785, %v783
  %v1204 = vpack.c.b16 %v786, %v784
  %v1205 = vpack.c.b16 %v789, %v787
  %v1206 = vpack.c.b16 %v790, %v788
  %v1207 = vpack.c.b16 %v793, %v791
  %v1208 = vpack.c.b16 %v794, %v792
  %v1209 = vpack.c.b16 %v797, %v795
  %v1210 = vpack.c.b16 %v798, %v796
  %v1211 = vpack.c.b16 %v801, %v799
  %v1212 = vpack.c.b16 %v802, %v800
  %v1213 = vpack.c.b16 %v805, %v803
  %v1214 = vpack.c.b16 %v806, %v804
  %v1215 = vpack.c.b16 %v809, %v807
  %v1216 = vpack.c.b16 %v810, %v808
  %v1217 = vpack.c.b16 %v813, %v811
  %v1218 = vpack.c.b16 %v814, %v812
  %v1219 = vpack.c.b16 %v817, %v815
  %v1220 = vpack.c.b16 %v818, %v816
  %v1221 = vpack.c.b16 %v821, %v819
  %v1222 = vpack.c.b16 %v822, %v820
  %v1223 = vpack.c.b16 %v825, %v823
  %v1224 = vpack.c.b16 %v826, %v824
  %v1225 = vpack.c.b16 %v829, %v827
  %v1226 = vpack.c.b16 %v830, %v828
  %v1227 = vpack.c.b16 %v833, %v831
  %v1228 = vpack.c.b16 %v834, %v832
  %v1229 = vpack.c.b16 %v837, %v835
  %v1230 = vpack.c.b16 %v838, %v836
  %v1231 = vpack.c.b16 %v841, %v839
  %v1232 = vpack.c.b16 %v842, %v840
  %v1233 = vpack.c.b16 %v845, %v843
  %v1234 = vpack.c.b16 %v846, %v844
  %v1235 = vpack.c.b16 %v849, %v847
  %v1236 = vpack.c.b16 %v850, %v848
  %v1237 = vpack.c.b16 %v853, %v851
  %v1238 = vpack.c.b16 %v854, %v852
  %v1239 = vpack.c.b16 %v857, %v855
  %v1240 = vpack.c.b16 %v858, %v856
  %v1241 = vpack.c.b16 %v861, %v859
  %v1242 = vpack.c.b16 %v862, %v860
  %v1243 = vpack.c.b16 %v865, %v863
  %v1244 = vpack.c.b16 %v866, %v864
  %v1245 = vpack.c.b16 %v869, %v867
  %v1246 = vpack.c.b16 %v870, %v868
  %v1247 = vpack.c.b16 %v873, %v871
  %v1248 = vpack.c.b16 %v874, %v872
  %v1249 = vpack.c.b16 %v877, %v875
  %v1250 = vpack.c.b16 %v878, %v876
  %v1251 = vpack.c.b16 %v881, %v879
  %v1252 = vpack.c.b16 %v882, %v880
  %v1253 = vpack.c.b16 %v885, %v883
  %v1254 = vpack.c.b16 %v886, %v884
  %v1255 = vpack.c.b16 %v889, %v887
  %v1256 = vpack.c.b16 %v890, %v888
  %v1257 = vpack.c.b16 %v893, %v891
  %v1258 = vpack.c.b16 %v894, %v892
  %v1259 = vpack.c.b16 %v897, %v895
  %v1260 = vpack.c.b16 %v898, %v896
  %v1261 = vpack.c.b16 %v901, %v899
  %v1262 = vpack.c.b16 %v902, %v900
  %v1263 = vpack.c.b16 %v905, %v903
  %v1264 = vpack.c.b16 %v906, %v904
  %v1265 = vpack.c.b16 %v909, %v907
  %v1266 = vpack.c.b16 %v910, %v908
  %v1267 = vpack.c.b16 %v913, %v911
  %v1268 = vpack.c.b16 %v914, %v912
  %v1269 = vpack.c.b16 %v917, %v915
  %v1270 = vpack.c.b16 %v918, %v916
  %v1271 = vpack.c.b16 %v921, %v919
  %v1272 = vpack.c.b16 %v922, %v920
  %v1273 = vpack.c.b16 %v925, %v923
  %v1274 = vpack.c.b16 %v926, %v924
  %v1275 = vpack.c.b16 %v929, %v927
  %v1276 = vpack.c.b16 %v930, %v928
  %v1277 = vpack.c.b16 %v933, %v931
  %v1278 = vpack.c.b16 %v934, %v932
  %v1279 = vpack.c.b16 %v937, %v935
  %v1280 = vpack.c.b16 %v938, %v936
  %v1281 = vpack.c.b16 %v941, %v939
  %v1282 = vpack.c.b16 %v942, %v940
  %v1283 = vpack.c.b16 %v945, %v943
  %v1284 = vpack.c.b16 %v946, %v944
  %v1285 = vpack.c.b16 %v949, %v947
  %v1286 = vpack.c.b16 %v950, %v948
  %v1287 = vpack.c.b16 %v953, %v951
  %v1288 = vpack.c.b16 %v954, %v952
  %v1289 = vpack.c.b16 %v957, %v955
  %v1290 = vpack.c.b16 %v958, %v956
  %v1291 = vpack.c.b16 %v961, %v959
  %v1292 = vpack.c.b16 %v962, %v960
  %v1293 = vpack.c.b16 %v965, %v963
  %v1294 = vpack.c.b16 %v966, %v964
  %v1295 = vpack.c.b16 %v969, %v967
  %v1296 = vpack.c.b16 %v970, %v968
  %v1297 = vpack.c.b16 %v973, %v971
  %v1298 = vpack.c.b16 %v974, %v972
  %v1299 = vpack.c.b16 %v977, %v975
  %v1300 = vpack.c.b16 %v978, %v976
  %v1301 = vpack.c.b16 %v981, %v979
  %v1302 = vpack.c.b16 %v982, %v980
  %v1303 = vpack.c.b16 %v985, %v983
  %v1304 = vpack.c.b16 %v986, %v984
  %v1305 = vpack.c.b16 %v989, %v987
  %v1306 = vpack.c.b16 %v990, %v988
  %v1307 = vpack.c.b16 %v993, %v991
  %v1308 = vpack.c.b16 %v994, %v992
  %v1309 = vpack.c.b16 %v997, %v995
  %v1310 = vpack.c.b16 %v998, %v996
  %v1311 = vpack.c.b16 %v1001, %v999
  %v1312 = vpack.c.b16 %v1002, %v1000
  %v1313 = vpack.c.b16 %v1005, %v1003
  %v1314 = vpack.c.b16 %v1006, %v1004
  %v1315 = vpack.c.b16 %v1009, %v1007
  %v1316 = vpack.c.b16 %v1010, %v1008
  %v1317 = vpack.c.b16 %v1013, %v1011
  %v1318 = vpack.c.b16 %v1014, %v1012
  %v1319 = vpack.c.b16 %v1017, %v1015
  %v1320 = vpack.c.b16 %v1018, %v1016
  %v1321 = vpack.c.b16 %v1021, %v1019
  %v1322 = vpack.c.b16 %v1022, %v1020
  %v1323 = vpack.c.b16 %v1025, %v1023
  %v1324 = vpack.c.b16 %v1026, %v1024
  %v1325 = vpack.c.b16 %v1029, %v1027
  %v1326 = vpack.c.b16 %v1030, %v1028
  %v1327 = vpack.c.b16 %v1033, %v1031
  %v1328 = vpack.c.b16 %v1034, %v1032
  %v1329 = vpack.c.b16 %v1037, %v1035
  %v1330 = vpack.c.b16 %v1038, %v1036
  %v1331 = vpack.c.b16 %v1041, %v1039
  %v1332 = vpack.c.b16 %v1042, %v1040
  %v1333 = vpack.c.b16 %v1045, %v1043
  %v1334 = vpack.c.b16 %v1046, %v1044
  %v1335 = vpack.c.b16 %v1049, %v1047
  %v1336 = vpack.c.b16 %v1050, %v1048
  %v1337 = vpack.c.b16 %v1053, %v1051
  %v1338 = vpack.c.b16 %v1054, %v1052
  %v1339 = vpack.c.b16 %v1057, %v1055
  %v1340 = vpack.c.b16 %v1058, %v1056
  %v1341 = vpack.c.b16 %v1061, %v1059
  %v1342 = vpack.c.b16 %v1062, %v1060
  %v1343 = vpack.c.b16 %v1065, %v1063
  %v1344 = vpack.c.b16 %v1066, %v1064
  %v1345 = vpack.c.b16 %v1069, %v1067
  %v1346 = vpack.c.b16 %v1070, %v1068
  %v1347 = vpack.c.b16 %v1073, %v1071
  %v1348 = vpack.c.b16 %v1074, %v1072
  %v1349 = vpack.c.b16 %v1077, %v1075
  %v1350 = vpack.c.b16 %v1078, %v1076
  %v1351 = vpack.c.b16 %v1081, %v1079
  %v1352 = vpack.c.b16 %v1082, %v1080
  %v1353 = vpack.c.b16 %v1085, %v1083
  %v1354 = vpack.c.b16 %v1086, %v1084
  %v1355 = vpack.c.b16 %v1089, %v1087
  %v1356 = vpack.c.b16 %v1090, %v1088
  %v1357 = vpack.c.b16 %v1093, %v1091
  %v1358 = vpack.c.b16 %v1094, %v1092
  %v1359 = vpack.c.b16 %v1097, %v1095
  %v1360 = vpack.c.b16 %v1098, %v1096
  %v1361 = vpack.c.b16 %v1101, %v1099
  %v1362 = vpack.c.b16 %v1102, %v1100
  %v1363 = vpack.c.b16 %v1105, %v1103
  %v1364 = vpack.c.b16 %v1106, %v1104
  %v1365 = vpack.c.b16 %v1109, %v1107
  %v1366 = vpack.c.b16 %v1110, %v1108
  %1623 = vmatpush.bf16.msra.mxu0 %v1125
  %1624 = vmatpush.bf16.msra.mxu0 %v1123
  %1625 = vmatpush.bf16.msra.mxu0 %v1121
  %1626 = vmatpush.bf16.msra.mxu0 %v1119
  %1627 = vmatpush.bf16.msra.mxu0 %v1117
  %1628 = vmatpush.bf16.msra.mxu0 %v1115
  %1629 = vmatpush.bf16.msra.mxu0 %v1113
  %1630 = vmatpush.bf16.msra.mxu0 %v1111
  %1631 = vmatmul.bf16.gmra.mxu0 %v311
  %v1632 = vpop.f32.mrf.mxu0
  %v1633 = vadd.f32 %v283, %v1632
  %v1634 = vpop.f32.mrf.mxu0
  %1635 = vdwg.mxu0
  %1636 = vmatpush.bf16.msra.mxu0 %v1141
  %1637 = vmatpush.bf16.msra.mxu0 %v1139
  %1638 = vmatpush.bf16.msra.mxu0 %v1137
  %1639 = vmatpush.bf16.msra.mxu0 %v1135
  %1640 = vmatpush.bf16.msra.mxu0 %v1133
  %1641 = vmatpush.bf16.msra.mxu0 %v1131
  %1642 = vmatpush.bf16.msra.mxu0 %v1129
  %1643 = vmatpush.bf16.msra.mxu0 %v1127
  %1644 = vmatmul.bf16.gmra.mxu0 %v312
  %v1645 = vpop.f32.mrf.mxu0
  %v1646 = vadd.f32 %v1633, %v1645
  %v1647 = vpop.f32.mrf.mxu0
  %1648 = vdwg.mxu0
  %1649 = vmatpush.bf16.msra.mxu0 %v1157
  %1650 = vmatpush.bf16.msra.mxu0 %v1155
  %1651 = vmatpush.bf16.msra.mxu0 %v1153
  %1652 = vmatpush.bf16.msra.mxu0 %v1151
  %1653 = vmatpush.bf16.msra.mxu0 %v1149
  %1654 = vmatpush.bf16.msra.mxu0 %v1147
  %1655 = vmatpush.bf16.msra.mxu0 %v1145
  %1656 = vmatpush.bf16.msra.mxu0 %v1143
  %1657 = vmatmul.bf16.gmra.mxu0 %v313
  %v1658 = vpop.f32.mrf.mxu0
  %v1659 = vadd.f32 %v1646, %v1658
  %v1660 = vpop.f32.mrf.mxu0
  %1661 = vdwg.mxu0
  %1662 = vmatpush.bf16.msra.mxu0 %v1173
  %1663 = vmatpush.bf16.msra.mxu0 %v1171
  %1664 = vmatpush.bf16.msra.mxu0 %v1169
  %1665 = vmatpush.bf16.msra.mxu0 %v1167
  %1666 = vmatpush.bf16.msra.mxu0 %v1165
  %1667 = vmatpush.bf16.msra.mxu0 %v1163
  %1668 = vmatpush.bf16.msra.mxu0 %v1161
  %1669 = vmatpush.bf16.msra.mxu0 %v1159
  %1670 = vmatmul.bf16.gmra.mxu0 %v314
  %v1671 = vpop.f32.mrf.mxu0
  %v1672 = vadd.f32 %v1659, %v1671
  %v1673 = vpop.f32.mrf.mxu0
  %1674 = vdwg.mxu0
  %1675 = vmatpush.bf16.msra.mxu0 %v1189
  %1676 = vmatpush.bf16.msra.mxu0 %v1187
  %1677 = vmatpush.bf16.msra.mxu0 %v1185
  %1678 = vmatpush.bf16.msra.mxu0 %v1183
  %1679 = vmatpush.bf16.msra.mxu0 %v1181
  %1680 = vmatpush.bf16.msra.mxu0 %v1179
  %1681 = vmatpush.bf16.msra.mxu0 %v1177
  %1682 = vmatpush.bf16.msra.mxu0 %v1175
  %1683 = vmatmul.bf16.gmra.mxu0 %v315
  %v1684 = vpop.f32.mrf.mxu0
  %v1685 = vadd.f32 %v1672, %v1684
  %v1686 = vpop.f32.mrf.mxu0
  %1687 = vdwg.mxu0
  %1688 = vmatpush.bf16.msra.mxu0 %v1205
  %1689 = vmatpush.bf16.msra.mxu0 %v1203
  %1690 = vmatpush.bf16.msra.mxu0 %v1201
  %1691 = vmatpush.bf16.msra.mxu0 %v1199
  %1692 = vmatpush.bf16.msra.mxu0 %v1197
  %1693 = vmatpush.bf16.msra.mxu0 %v1195
  %1694 = vmatpush.bf16.msra.mxu0 %v1193
  %1695 = vmatpush.bf16.msra.mxu0 %v1191
  %1696 = vmatmul.bf16.gmra.mxu0 %v316
  %v1697 = vpop.f32.mrf.mxu0
  %v1698 = vadd.f32 %v1685, %v1697
  %v1699 = vpop.f32.mrf.mxu0
  %1700 = vdwg.mxu0
  %1701 = vmatpush.bf16.msra.mxu0 %v1221
  %1702 = vmatpush.bf16.msra.mxu0 %v1219
  %1703 = vmatpush.bf16.msra.mxu0 %v1217
  %1704 = vmatpush.bf16.msra.mxu0 %v1215
  %1705 = vmatpush.bf16.msra.mxu0 %v1213
  %1706 = vmatpush.bf16.msra.mxu0 %v1211
  %1707 = vmatpush.bf16.msra.mxu0 %v1209
  %1708 = vmatpush.bf16.msra.mxu0 %v1207
  %1709 = vmatmul.bf16.gmra.mxu0 %v317
  %v1710 = vpop.f32.mrf.mxu0
  %v1711 = vadd.f32 %v1698, %v1710
  %v1712 = vpop.f32.mrf.mxu0
  %1713 = vdwg.mxu0
  %1714 = vmatpush.bf16.msra.mxu0 %v1237
  %1715 = vmatpush.bf16.msra.mxu0 %v1235
  %1716 = vmatpush.bf16.msra.mxu0 %v1233
  %1717 = vmatpush.bf16.msra.mxu0 %v1231
  %1718 = vmatpush.bf16.msra.mxu0 %v1229
  %1719 = vmatpush.bf16.msra.mxu0 %v1227
  %1720 = vmatpush.bf16.msra.mxu0 %v1225
  %1721 = vmatpush.bf16.msra.mxu0 %v1223
  %1722 = vmatmul.bf16.gmra.mxu0 %v318
  %v1723 = vpop.f32.mrf.mxu0
  %v1724 = vadd.f32 %v1711, %v1723
  %v1725 = vpop.f32.mrf.mxu0
  %1726 = vdwg.mxu0
  %1727 = vmatpush.bf16.msra.mxu0 %v1253
  %1728 = vmatpush.bf16.msra.mxu0 %v1251
  %1729 = vmatpush.bf16.msra.mxu0 %v1249
  %1730 = vmatpush.bf16.msra.mxu0 %v1247
  %1731 = vmatpush.bf16.msra.mxu0 %v1245
  %1732 = vmatpush.bf16.msra.mxu0 %v1243
  %1733 = vmatpush.bf16.msra.mxu0 %v1241
  %1734 = vmatpush.bf16.msra.mxu0 %v1239
  %1735 = vmatmul.bf16.gmra.mxu0 %v319
  %v1736 = vpop.f32.mrf.mxu0
  %v1737 = vadd.f32 %v1724, %v1736
  %v1738 = vpop.f32.mrf.mxu0
  %1739 = vdwg.mxu0
  %1740 = vmatpush.bf16.msra.mxu0 %v1269
  %1741 = vmatpush.bf16.msra.mxu0 %v1267
  %1742 = vmatpush.bf16.msra.mxu0 %v1265
  %1743 = vmatpush.bf16.msra.mxu0 %v1263
  %1744 = vmatpush.bf16.msra.mxu0 %v1261
  %1745 = vmatpush.bf16.msra.mxu0 %v1259
  %1746 = vmatpush.bf16.msra.mxu0 %v1257
  %1747 = vmatpush.bf16.msra.mxu0 %v1255
  %1748 = vmatmul.bf16.gmra.mxu0 %v320
  %v1749 = vpop.f32.mrf.mxu0
  %v1750 = vadd.f32 %v1737, %v1749
  %v1751 = vpop.f32.mrf.mxu0
  %1752 = vdwg.mxu0
  %1753 = vmatpush.bf16.msra.mxu0 %v1285
  %1754 = vmatpush.bf16.msra.mxu0 %v1283
  %1755 = vmatpush.bf16.msra.mxu0 %v1281
  %1756 = vmatpush.bf16.msra.mxu0 %v1279
  %1757 = vmatpush.bf16.msra.mxu0 %v1277
  %1758 = vmatpush.bf16.msra.mxu0 %v1275
  %1759 = vmatpush.bf16.msra.mxu0 %v1273
  %1760 = vmatpush.bf16.msra.mxu0 %v1271
  %1761 = vmatmul.bf16.gmra.mxu0 %v321
  %v1762 = vpop.f32.mrf.mxu0
  %v1763 = vadd.f32 %v1750, %v1762
  %v1764 = vpop.f32.mrf.mxu0
  %1765 = vdwg.mxu0
  %1766 = vmatpush.bf16.msra.mxu0 %v1301
  %1767 = vmatpush.bf16.msra.mxu0 %v1299
  %1768 = vmatpush.bf16.msra.mxu0 %v1297
  %1769 = vmatpush.bf16.msra.mxu0 %v1295
  %1770 = vmatpush.bf16.msra.mxu0 %v1293
  %1771 = vmatpush.bf16.msra.mxu0 %v1291
  %1772 = vmatpush.bf16.msra.mxu0 %v1289
  %1773 = vmatpush.bf16.msra.mxu0 %v1287
  %1774 = vmatmul.bf16.gmra.mxu0 %v322
  %v1775 = vpop.f32.mrf.mxu0
  %v1776 = vadd.f32 %v1763, %v1775
  %v1777 = vpop.f32.mrf.mxu0
  %1778 = vdwg.mxu0
  %1779 = vmatpush.bf16.msra.mxu0 %v1317
  %1780 = vmatpush.bf16.msra.mxu0 %v1315
  %1781 = vmatpush.bf16.msra.mxu0 %v1313
  %1782 = vmatpush.bf16.msra.mxu0 %v1311
  %1783 = vmatpush.bf16.msra.mxu0 %v1309
  %1784 = vmatpush.bf16.msra.mxu0 %v1307
  %1785 = vmatpush.bf16.msra.mxu0 %v1305
  %1786 = vmatpush.bf16.msra.mxu0 %v1303
  %1787 = vmatmul.bf16.gmra.mxu0 %v323
  %v1788 = vpop.f32.mrf.mxu0
  %v1789 = vadd.f32 %v1776, %v1788
  %v1790 = vpop.f32.mrf.mxu0
  %1791 = vdwg.mxu0
  %1792 = vmatpush.bf16.msra.mxu0 %v1333
  %1793 = vmatpush.bf16.msra.mxu0 %v1331
  %1794 = vmatpush.bf16.msra.mxu0 %v1329
  %1795 = vmatpush.bf16.msra.mxu0 %v1327
  %1796 = vmatpush.bf16.msra.mxu0 %v1325
  %1797 = vmatpush.bf16.msra.mxu0 %v1323
  %1798 = vmatpush.bf16.msra.mxu0 %v1321
  %1799 = vmatpush.bf16.msra.mxu0 %v1319
  %1800 = vmatmul.bf16.gmra.mxu0 %v324
  %v1801 = vpop.f32.mrf.mxu0
  %v1802 = vadd.f32 %v1789, %v1801
  %v1803 = vpop.f32.mrf.mxu0
  %1804 = vdwg.mxu0
  %1805 = vmatpush.bf16.msra.mxu0 %v1349
  %1806 = vmatpush.bf16.msra.mxu0 %v1347
  %1807 = vmatpush.bf16.msra.mxu0 %v1345
  %1808 = vmatpush.bf16.msra.mxu0 %v1343
  %1809 = vmatpush.bf16.msra.mxu0 %v1341
  %1810 = vmatpush.bf16.msra.mxu0 %v1339
  %1811 = vmatpush.bf16.msra.mxu0 %v1337
  %1812 = vmatpush.bf16.msra.mxu0 %v1335
  %1813 = vmatmul.bf16.gmra.mxu0 %v325
  %v1814 = vpop.f32.mrf.mxu0
  %v1815 = vadd.f32 %v1802, %v1814
  %v1816 = vpop.f32.mrf.mxu0
  %1817 = vdwg.mxu0
  %1818 = vmatpush.bf16.msra.mxu0 %v1365
  %1819 = vmatpush.bf16.msra.mxu0 %v1363
  %1820 = vmatpush.bf16.msra.mxu0 %v1361
  %1821 = vmatpush.bf16.msra.mxu0 %v1359
  %1822 = vmatpush.bf16.msra.mxu0 %v1357
  %1823 = vmatpush.bf16.msra.mxu0 %v1355
  %1824 = vmatpush.bf16.msra.mxu0 %v1353
  %1825 = vmatpush.bf16.msra.mxu0 %v1351
  %1826 = vmatmul.bf16.gmra.mxu0 %v326
  %v1827 = vpop.f32.mrf.mxu0
  %v1828 = vadd.f32 %v1815, %v1827
  %v1829 = vpop.f32.mrf.mxu0
  %1830 = vdwg.mxu0
  %1831 = vmatpush.bf16.msra.mxu0 %v1126
  %1832 = vmatpush.bf16.msra.mxu0 %v1124
  %1833 = vmatpush.bf16.msra.mxu0 %v1122
  %1834 = vmatpush.bf16.msra.mxu0 %v1120
  %1835 = vmatpush.bf16.msra.mxu0 %v1118
  %1836 = vmatpush.bf16.msra.mxu0 %v1116
  %1837 = vmatpush.bf16.msra.mxu0 %v1114
  %1838 = vmatpush.bf16.msra.mxu0 %v1112
  %1839 = vmatmul.bf16.gmra.mxu0 %v311
  %v1840 = vpop.f32.mrf.mxu0
  %v1841 = vadd.f32 %v284, %v1840
  %v1842 = vpop.f32.mrf.mxu0
  %1843 = vdwg.mxu0
  %1844 = vmatpush.bf16.msra.mxu0 %v1142
  %1845 = vmatpush.bf16.msra.mxu0 %v1140
  %1846 = vmatpush.bf16.msra.mxu0 %v1138
  %1847 = vmatpush.bf16.msra.mxu0 %v1136
  %1848 = vmatpush.bf16.msra.mxu0 %v1134
  %1849 = vmatpush.bf16.msra.mxu0 %v1132
  %1850 = vmatpush.bf16.msra.mxu0 %v1130
  %1851 = vmatpush.bf16.msra.mxu0 %v1128
  %1852 = vmatmul.bf16.gmra.mxu0 %v312
  %v1853 = vpop.f32.mrf.mxu0
  %v1854 = vadd.f32 %v1841, %v1853
  %v1855 = vpop.f32.mrf.mxu0
  %1856 = vdwg.mxu0
  %1857 = vmatpush.bf16.msra.mxu0 %v1158
  %1858 = vmatpush.bf16.msra.mxu0 %v1156
  %1859 = vmatpush.bf16.msra.mxu0 %v1154
  %1860 = vmatpush.bf16.msra.mxu0 %v1152
  %1861 = vmatpush.bf16.msra.mxu0 %v1150
  %1862 = vmatpush.bf16.msra.mxu0 %v1148
  %1863 = vmatpush.bf16.msra.mxu0 %v1146
  %1864 = vmatpush.bf16.msra.mxu0 %v1144
  %1865 = vmatmul.bf16.gmra.mxu0 %v313
  %v1866 = vpop.f32.mrf.mxu0
  %v1867 = vadd.f32 %v1854, %v1866
  %v1868 = vpop.f32.mrf.mxu0
  %1869 = vdwg.mxu0
  %1870 = vmatpush.bf16.msra.mxu0 %v1174
  %1871 = vmatpush.bf16.msra.mxu0 %v1172
  %1872 = vmatpush.bf16.msra.mxu0 %v1170
  %1873 = vmatpush.bf16.msra.mxu0 %v1168
  %1874 = vmatpush.bf16.msra.mxu0 %v1166
  %1875 = vmatpush.bf16.msra.mxu0 %v1164
  %1876 = vmatpush.bf16.msra.mxu0 %v1162
  %1877 = vmatpush.bf16.msra.mxu0 %v1160
  %1878 = vmatmul.bf16.gmra.mxu0 %v314
  %v1879 = vpop.f32.mrf.mxu0
  %v1880 = vadd.f32 %v1867, %v1879
  %v1881 = vpop.f32.mrf.mxu0
  %1882 = vdwg.mxu0
  %1883 = vmatpush.bf16.msra.mxu0 %v1190
  %1884 = vmatpush.bf16.msra.mxu0 %v1188
  %1885 = vmatpush.bf16.msra.mxu0 %v1186
  %1886 = vmatpush.bf16.msra.mxu0 %v1184
  %1887 = vmatpush.bf16.msra.mxu0 %v1182
  %1888 = vmatpush.bf16.msra.mxu0 %v1180
  %1889 = vmatpush.bf16.msra.mxu0 %v1178
  %1890 = vmatpush.bf16.msra.mxu0 %v1176
  %1891 = vmatmul.bf16.gmra.mxu0 %v315
  %v1892 = vpop.f32.mrf.mxu0
  %v1893 = vadd.f32 %v1880, %v1892
  %v1894 = vpop.f32.mrf.mxu0
  %1895 = vdwg.mxu0
  %1896 = vmatpush.bf16.msra.mxu0 %v1206
  %1897 = vmatpush.bf16.msra.mxu0 %v1204
  %1898 = vmatpush.bf16.msra.mxu0 %v1202
  %1899 = vmatpush.bf16.msra.mxu0 %v1200
  %1900 = vmatpush.bf16.msra.mxu0 %v1198
  %1901 = vmatpush.bf16.msra.mxu0 %v1196
  %1902 = vmatpush.bf16.msra.mxu0 %v1194
  %1903 = vmatpush.bf16.msra.mxu0 %v1192
  %1904 = vmatmul.bf16.gmra.mxu0 %v316
  %v1905 = vpop.f32.mrf.mxu0
  %v1906 = vadd.f32 %v1893, %v1905
  %v1907 = vpop.f32.mrf.mxu0
  %1908 = vdwg.mxu0
  %1909 = vmatpush.bf16.msra.mxu0 %v1222
  %1910 = vmatpush.bf16.msra.mxu0 %v1220
  %1911 = vmatpush.bf16.msra.mxu0 %v1218
  %1912 = vmatpush.bf16.msra.mxu0 %v1216
  %1913 = vmatpush.bf16.msra.mxu0 %v1214
  %1914 = vmatpush.bf16.msra.mxu0 %v1212
  %1915 = vmatpush.bf16.msra.mxu0 %v1210
  %1916 = vmatpush.bf16.msra.mxu0 %v1208
  %1917 = vmatmul.bf16.gmra.mxu0 %v317
  %v1918 = vpop.f32.mrf.mxu0
  %v1919 = vadd.f32 %v1906, %v1918
  %v1920 = vpop.f32.mrf.mxu0
  %1921 = vdwg.mxu0
  %1922 = vmatpush.bf16.msra.mxu0 %v1238
  %1923 = vmatpush.bf16.msra.mxu0 %v1236
  %1924 = vmatpush.bf16.msra.mxu0 %v1234
  %1925 = vmatpush.bf16.msra.mxu0 %v1232
  %1926 = vmatpush.bf16.msra.mxu0 %v1230
  %1927 = vmatpush.bf16.msra.mxu0 %v1228
  %1928 = vmatpush.bf16.msra.mxu0 %v1226
  %1929 = vmatpush.bf16.msra.mxu0 %v1224
  %1930 = vmatmul.bf16.gmra.mxu0 %v318
  %v1931 = vpop.f32.mrf.mxu0
  %v1932 = vadd.f32 %v1919, %v1931
  %v1933 = vpop.f32.mrf.mxu0
  %1934 = vdwg.mxu0
  %1935 = vmatpush.bf16.msra.mxu0 %v1254
  %1936 = vmatpush.bf16.msra.mxu0 %v1252
  %1937 = vmatpush.bf16.msra.mxu0 %v1250
  %1938 = vmatpush.bf16.msra.mxu0 %v1248
  %1939 = vmatpush.bf16.msra.mxu0 %v1246
  %1940 = vmatpush.bf16.msra.mxu0 %v1244
  %1941 = vmatpush.bf16.msra.mxu0 %v1242
  %1942 = vmatpush.bf16.msra.mxu0 %v1240
  %1943 = vmatmul.bf16.gmra.mxu0 %v319
  %v1944 = vpop.f32.mrf.mxu0
  %v1945 = vadd.f32 %v1932, %v1944
  %v1946 = vpop.f32.mrf.mxu0
  %1947 = vdwg.mxu0
  %1948 = vmatpush.bf16.msra.mxu0 %v1270
  %1949 = vmatpush.bf16.msra.mxu0 %v1268
  %1950 = vmatpush.bf16.msra.mxu0 %v1266
  %1951 = vmatpush.bf16.msra.mxu0 %v1264
  %1952 = vmatpush.bf16.msra.mxu0 %v1262
  %1953 = vmatpush.bf16.msra.mxu0 %v1260
  %1954 = vmatpush.bf16.msra.mxu0 %v1258
  %1955 = vmatpush.bf16.msra.mxu0 %v1256
  %1956 = vmatmul.bf16.gmra.mxu0 %v320
  %v1957 = vpop.f32.mrf.mxu0
  %v1958 = vadd.f32 %v1945, %v1957
  %v1959 = vpop.f32.mrf.mxu0
  %1960 = vdwg.mxu0
  %1961 = vmatpush.bf16.msra.mxu0 %v1286
  %1962 = vmatpush.bf16.msra.mxu0 %v1284
  %1963 = vmatpush.bf16.msra.mxu0 %v1282
  %1964 = vmatpush.bf16.msra.mxu0 %v1280
  %1965 = vmatpush.bf16.msra.mxu0 %v1278
  %1966 = vmatpush.bf16.msra.mxu0 %v1276
  %1967 = vmatpush.bf16.msra.mxu0 %v1274
  %1968 = vmatpush.bf16.msra.mxu0 %v1272
  %1969 = vmatmul.bf16.gmra.mxu0 %v321
  %v1970 = vpop.f32.mrf.mxu0
  %v1971 = vadd.f32 %v1958, %v1970
  %v1972 = vpop.f32.mrf.mxu0
  %1973 = vdwg.mxu0
  %1974 = vmatpush.bf16.msra.mxu0 %v1302
  %1975 = vmatpush.bf16.msra.mxu0 %v1300
  %1976 = vmatpush.bf16.msra.mxu0 %v1298
  %1977 = vmatpush.bf16.msra.mxu0 %v1296
  %1978 = vmatpush.bf16.msra.mxu0 %v1294
  %1979 = vmatpush.bf16.msra.mxu0 %v1292
  %1980 = vmatpush.bf16.msra.mxu0 %v1290
  %1981 = vmatpush.bf16.msra.mxu0 %v1288
  %1982 = vmatmul.bf16.gmra.mxu0 %v322
  %v1983 = vpop.f32.mrf.mxu0
  %v1984 = vadd.f32 %v1971, %v1983
  %v1985 = vpop.f32.mrf.mxu0
  %1986 = vdwg.mxu0
  %1987 = vmatpush.bf16.msra.mxu0 %v1318
  %1988 = vmatpush.bf16.msra.mxu0 %v1316
  %1989 = vmatpush.bf16.msra.mxu0 %v1314
  %1990 = vmatpush.bf16.msra.mxu0 %v1312
  %1991 = vmatpush.bf16.msra.mxu0 %v1310
  %1992 = vmatpush.bf16.msra.mxu0 %v1308
  %1993 = vmatpush.bf16.msra.mxu0 %v1306
  %1994 = vmatpush.bf16.msra.mxu0 %v1304
  %1995 = vmatmul.bf16.gmra.mxu0 %v323
  %v1996 = vpop.f32.mrf.mxu0
  %v1997 = vadd.f32 %v1984, %v1996
  %v1998 = vpop.f32.mrf.mxu0
  %1999 = vdwg.mxu0
  %2000 = vmatpush.bf16.msra.mxu0 %v1334
  %2001 = vmatpush.bf16.msra.mxu0 %v1332
  %2002 = vmatpush.bf16.msra.mxu0 %v1330
  %2003 = vmatpush.bf16.msra.mxu0 %v1328
  %2004 = vmatpush.bf16.msra.mxu0 %v1326
  %2005 = vmatpush.bf16.msra.mxu0 %v1324
  %2006 = vmatpush.bf16.msra.mxu0 %v1322
  %2007 = vmatpush.bf16.msra.mxu0 %v1320
  %2008 = vmatmul.bf16.gmra.mxu0 %v324
  %v2009 = vpop.f32.mrf.mxu0
  %v2010 = vadd.f32 %v1997, %v2009
  %v2011 = vpop.f32.mrf.mxu0
  %2012 = vdwg.mxu0
  %2013 = vmatpush.bf16.msra.mxu0 %v1350
  %2014 = vmatpush.bf16.msra.mxu0 %v1348
  %2015 = vmatpush.bf16.msra.mxu0 %v1346
  %2016 = vmatpush.bf16.msra.mxu0 %v1344
  %2017 = vmatpush.bf16.msra.mxu0 %v1342
  %2018 = vmatpush.bf16.msra.mxu0 %v1340
  %2019 = vmatpush.bf16.msra.mxu0 %v1338
  %2020 = vmatpush.bf16.msra.mxu0 %v1336
  %2021 = vmatmul.bf16.gmra.mxu0 %v325
  %v2022 = vpop.f32.mrf.mxu0
  %v2023 = vadd.f32 %v2010, %v2022
  %v2024 = vpop.f32.mrf.mxu0
  %2025 = vdwg.mxu0
  %2026 = vmatpush.bf16.msra.mxu0 %v1366
  %2027 = vmatpush.bf16.msra.mxu0 %v1364
  %2028 = vmatpush.bf16.msra.mxu0 %v1362
  %2029 = vmatpush.bf16.msra.mxu0 %v1360
  %2030 = vmatpush.bf16.msra.mxu0 %v1358
  %2031 = vmatpush.bf16.msra.mxu0 %v1356
  %2032 = vmatpush.bf16.msra.mxu0 %v1354
  %2033 = vmatpush.bf16.msra.mxu0 %v1352
  %2034 = vmatmul.bf16.gmra.mxu0 %v326
  %v2035 = vpop.f32.mrf.mxu0
  %v2036 = vadd.f32 %v2023, %v2035
  %v2037 = vpop.f32.mrf.mxu0
  %2038 = vdwg.mxu0
  %2039 = vst [vmem:[%s3] sm:$0xff] %v1828
  %2040 = vst [vmem:[%s3 + $0x8] sm:$0xff] %v2036
  %v2041 = vrot.slane %v1828, 4
  %v2042 = vadd.f32 %v1828, %v2041
  %v2043 = vrot.slane %v2042, 2
  %v2044 = vadd.f32 %v2042, %v2043
  %v2045 = vrot.slane %v2044, 1
  %v2046 = vadd.f32 %v2044, %v2045
  %v2047 = vrot.slane %v2036, 4
  %v2048 = vadd.f32 %v2036, %v2047
  %v2049 = vrot.slane %v2048, 2
  %v2050 = vadd.f32 %v2048, %v2049
  %v2051 = vrot.slane %v2050, 1
  %v2052 = vadd.f32 %v2050, %v2051
  %v2053 = vmul.f32 %v1828, %v1828
  %v2054 = vmul.f32 %v2036, %v2036
  %v2055 = vrot.slane %v2053, 4
  %v2056 = vadd.f32 %v2053, %v2055
  %v2057 = vrot.slane %v2056, 2
  %v2058 = vadd.f32 %v2056, %v2057
  %v2059 = vrot.slane %v2058, 1
  %v2060 = vadd.f32 %v2058, %v2059
  %v2061 = vrot.slane %v2054, 4
  %v2062 = vadd.f32 %v2054, %v2061
  %v2063 = vrot.slane %v2062, 2
  %v2064 = vadd.f32 %v2062, %v2063
  %v2065 = vrot.slane %v2064, 1
  %v2066 = vadd.f32 %v2064, %v2065
  %p2067 = scmp.eq.s32.totalorder 0, 0
  // Predicated region
  $region14: #{discriminator_forward.9} parent=0 // pred_check
    %p2068 = pneg %p2067
  $region15: #{discriminator_forward.9} parent=0 // pred_check_branch
    %2070 = sbr.rel (%p2068) target = $region17
  $region16: #{discriminator_forward.9} parent=0 // pred_region
    %v2073 = vrot.slane %v2052, 7
    %vm2074 = vcmask 1040384
    %v2075 = vsel %vm2074, %v2046, %v2073
    %v2077 = vlaneseq
    %vm2078 = vcmp.ge.s32.totalorder %v2077, 0
    %vm2079 = vcmp.lt.s32.totalorder %v2077, 256
    %vm2080 = vmand %vm2078, %vm2079
    %2081 = vst.msk [vmem:[%s4] sm:$0x3] %vm2080, %v2075
    %v2084 = vrot.slane %v2066, 7
    %v2085 = vsel %vm2074, %v2060, %v2084
    %2087 = vst.msk [vmem:[%s5] sm:$0x3] %vm2080, %v2085
  $region17: #{discriminator_forward.9} parent=0 // pred_fallthru
    _
  %p2088 = scmp.gt.s32.totalorder 0, 0
  // Predicated region
  $region18: #{discriminator_forward.9} parent=0 // pred_check
    %p2089 = pneg %p2088
  $region19: #{discriminator_forward.9} parent=0 // pred_check_branch
    %2091 = sbr.rel (%p2089) target = $region21
  $region20: #{discriminator_forward.9} parent=0 // pred_region
    %v2092 = vld [vmem:[%s4] sm:$0x3]
    %v2095 = vrot.slane %v2052, 7
    %vm2096 = vcmask 1040384
    %v2097 = vsel %vm2096, %v2046, %v2095
    %v2099 = vadd.f32 %v2092, %v2097
    %v2100 = vlaneseq
    %vm2101 = vcmp.ge.s32.totalorder %v2100, 0
    %vm2102 = vcmp.lt.s32.totalorder %v2100, 256
    %vm2103 = vmand %vm2101, %vm2102
    %2104 = vst.msk [vmem:[%s4] sm:$0x3] %vm2103, %v2099
    %v2105 = vld [vmem:[%s5] sm:$0x3]
    %v2108 = vrot.slane %v2066, 7
    %v2109 = vsel %vm2096, %v2060, %v2108
    %v2111 = vadd.f32 %v2105, %v2109
    %2112 = vst.msk [vmem:[%s5] sm:$0x3] %vm2103, %v2111
  $region21: #{discriminator_forward.9} parent=0 // pred_fallthru
    _
  // Predicated region
  $region22: #{discriminator_forward.9} parent=0 // pred_check
    _
  $region23: #{discriminator_forward.9} parent=0 // pred_check_branch
    %2114 = sbr.rel (0) target = $region25
  $region24: #{discriminator_forward.9} parent=0 // pred_region
    _
  $region25: #{discriminator_forward.9} parent=0 // pred_fallthru
    _
  // Predicated region
  $region26: #{discriminator_forward.9} parent=0 // pred_check
    _
  $region27: #{discriminator_forward.9} parent=0 // pred_check_branch
    %2116 = sbr.rel (0) target = $region29
  $region28: #{discriminator_forward.9} parent=0 // pred_region
    _
  $region29: #{discriminator_forward.9} parent=0 // pred_fallthru
    _
  // Predicated region
  $region30: #{discriminator_forward.9} parent=0 // pred_check
    _
  $region31: #{discriminator_forward.9} parent=0 // pred_check_branch
    %2118 = sbr.rel (0) target = $region33
  $region32: #{discriminator_forward.9} parent=0 // pred_region
    _
  $region33: #{discriminator_forward.9} parent=0 // pred_fallthru
    _
  // Predicated region
  $region34: #{discriminator_forward.9} parent=0 // pred_check
    _
  $region35: #{discriminator_forward.9} parent=0 // pred_check_branch
    %2120 = sbr.rel (0) target = $region37
  $region36: #{discriminator_forward.9} parent=0 // pred_region
    _
  $region37: #{discriminator_forward.9} parent=0 // pred_fallthru
    _
  // Predicated region
  $region38: #{discriminator_forward.9} parent=0 // pred_check
    _
  $region39: #{discriminator_forward.9} parent=0 // pred_check_branch
    %2122 = sbr.rel (0) target = $region41
  $region40: #{discriminator_forward.9} parent=0 // pred_region
    _
  $region41: #{discriminator_forward.9} parent=0 // pred_fallthru
    _
  // Predicated region
  $region42: #{discriminator_forward.9} parent=0 // pred_check
    _
  $region43: #{discriminator_forward.9} parent=0 // pred_check_branch
    %2124 = sbr.rel (0) target = $region45
  $region44: #{discriminator_forward.9} parent=0 // pred_region
    _
  $region45: #{discriminator_forward.9} parent=0 // pred_fallthru
    _

// kernel: discriminator_forward.11
$region0: #{discriminator_forward.11}
  #allocation0 [shape = 'u32[]', space=smem, size = 0x4, offset = 0x4, fixed_abs, tag = 'smem constant byte address 0x4 - core index']
  #allocation1 [shape = 'u32[72,128]{1,0:T(1,128)}', space=vmem, size = 0x9000, scoped, tag = 'internal scratch']
  %s0 = inlined_call_operand.vmem [shape: bf16[2,8,4096], index: 0, kind: input, shape index: {}]
  %s1 = inlined_call_operand.vmem [shape: bf16[1,4096], index: 1, kind: input, shape index: {}]
  %s2 = inlined_call_operand.vmem [shape: f32[1,128], index: 2, kind: input, shape index: {}]
  %s3 = inlined_call_operand.vmem [shape: f32[8,128], index: 3, kind: output, shape index: {}]
  %s4 = sld [smem:[#allocation0]]
  $region53: #{discriminator_forward.11} parent=0
    _
  %s6 = ssub.s32 1, %s4
  %s7 = scalar_select 0, %s6, %s4
  loop: start=0, step=1, limit=4
  $region2: #{discriminator_forward.11} parent=0 // loop_pre_header
    _
  $region3: #{discriminator_forward.11} parent=0 // loop_header
    %s9 = sphi 0, %s13
    %p10 = scmp.ge.s32.totalorder %s9, 4
    %s16 = sphi 0, %s28
    %s17 = sphi 0, %s24
    %s18 = sphi 0, %s16
    %s19 = sphi 0, %s17
    %s20 = sphi 0, %s18
    %s21 = sphi 0, %s19
    %s33 = sphi 0, %s35
    %s36 = sphi 0, %s33
    %s37 = sphi 0, %s36
    %s53 = sphi 0, %s37
    %s57 = sphi 0, %s57
    %s59 = sphi 0, %s57
    %s60 = sphi 0, %s59
    %s74 = sphi 0, %s60
    %s78 = sphi 0, %s78
    %s80 = sphi 0, %s78
    %s81 = sphi 0, %s80
    %s95 = sphi 0, %s81
    %s99 = sphi 0, %s99
    %s101 = sphi 0, %s99
    %s102 = sphi 0, %s101
    %s116 = sphi 0, %s102
  $region4: #{discriminator_forward.11} parent=0 // loop_header_branch
    %12 = sbr.rel (%p10) target = $region8
  $region5: #{discriminator_forward.11} parent=0 // loop_body
    %s14 = ssub.s32 %s9, 1
    %s15 = ssub.s32 %s9, 2
    %s22 = sadd.s32 1, %s17
    %p23 = scmp.ge.s32.totalorder %s22, 1
    %s24 = scalar_select %p23, 0, %s22
    %s25 = sadd.s32 1, %s16
    %s26 = scalar_select %p23, %s25, %s16
    %p27 = scmp.ge.s32.totalorder %s26, 2
    %s28 = scalar_select %p27, 0, %s26
    %s29 = ssub.s32 %s16, %s28
    %s30 = ssub.s32 %s17, %s24
    %s31 = sor.u32 %s29, %s30
    %p32 = scmp.eq.s32.totalorder %s31, 0
    %s34 = sadd.s32 %s33, 1
    %s35 = scalar_select %p32, %s33, %s34
    %p38 = pneg %p32
    %p39 = scmp.eq.s32.totalorder %s9, 1
    %p40 = por %p38, %p39
    %p41 = scmp.ne.s32.totalorder %s33, %s36
    %p42 = scmp.eq.s32.totalorder %s9, 0
    %p43 = por %p41, %p42
    %p44 = scmp.ne.s32.totalorder %s33, %s36
    %p45 = scmp.eq.s32.totalorder %s14, 1
    %p46 = por %p44, %p45
    %p47 = scmp.ne.s32.totalorder %s36, %s37
    %p48 = scmp.eq.s32.totalorder %s14, 0
    %p49 = por %p47, %p48
    %p50 = scmp.ne.s32.totalorder %s36, %s37
    %p51 = scmp.eq.s32.totalorder %s15, 1
    %p52 = por %p50, %p51
    %p54 = scmp.ne.s32.totalorder %s37, %s53
    %p55 = scmp.eq.s32.totalorder %s15, 0
    %p56 = por %p54, %p55
    %s58 = sadd.s32 %s57, 1
    %p61 = scmp.eq.s32.totalorder %s9, 1
    %p62 = scmp.ne.s32.totalorder %s57, %s59
    %p63 = scmp.eq.s32.totalorder %s9, 0
    %p64 = por %p62, %p63
    %p65 = scmp.ne.s32.totalorder %s57, %s59
    %p66 = scmp.eq.s32.totalorder %s14, 1
    %p67 = por %p65, %p66
    %p68 = scmp.ne.s32.totalorder %s59, %s60
    %p69 = scmp.eq.s32.totalorder %s14, 0
    %p70 = por %p68, %p69
    %p71 = scmp.ne.s32.totalorder %s59, %s60
    %p72 = scmp.eq.s32.totalorder %s15, 1
    %p73 = por %p71, %p72
    %p75 = scmp.ne.s32.totalorder %s60, %s74
    %p76 = scmp.eq.s32.totalorder %s15, 0
    %p77 = por %p75, %p76
    %s79 = sadd.s32 %s78, 1
    %p82 = scmp.eq.s32.totalorder %s9, 1
    %p83 = scmp.ne.s32.totalorder %s78, %s80
    %p84 = scmp.eq.s32.totalorder %s9, 0
    %p85 = por %p83, %p84
    %p86 = scmp.ne.s32.totalorder %s78, %s80
    %p87 = scmp.eq.s32.totalorder %s14, 1
    %p88 = por %p86, %p87
    %p89 = scmp.ne.s32.totalorder %s80, %s81
    %p90 = scmp.eq.s32.totalorder %s14, 0
    %p91 = por %p89, %p90
    %p92 = scmp.ne.s32.totalorder %s80, %s81
    %p93 = scmp.eq.s32.totalorder %s15, 1
    %p94 = por %p92, %p93
    %p96 = scmp.ne.s32.totalorder %s81, %s95
    %p97 = scmp.eq.s32.totalorder %s15, 0
    %p98 = por %p96, %p97
    %s100 = sadd.s32 %s99, 1
    %p103 = scmp.eq.s32.totalorder %s9, 1
    %p104 = scmp.ne.s32.totalorder %s99, %s101
    %p105 = scmp.eq.s32.totalorder %s9, 0
    %p106 = por %p104, %p105
    %p107 = scmp.ne.s32.totalorder %s99, %s101
    %p108 = scmp.eq.s32.totalorder %s14, 1
    %p109 = por %p107, %p108
    %p110 = scmp.ne.s32.totalorder %s101, %s102
    %p111 = scmp.eq.s32.totalorder %s14, 0
    %p112 = por %p110, %p111
    %p113 = scmp.ne.s32.totalorder %s101, %s102
    %p114 = scmp.eq.s32.totalorder %s15, 1
    %p115 = por %p113, %p114
    %p117 = scmp.ne.s32.totalorder %s102, %s116
    %p118 = scmp.eq.s32.totalorder %s15, 0
    %p119 = por %p117, %p118
    %p120 = scmp.le.s32.totalorder 1, %s9
    %p121 = scmp.lt.s32.totalorder %s9, 3
    %p122 = pnand %p120, %p121
    %p123 = pneg %p122
    // Predicated region
    $region9: #{discriminator_forward.11} parent=5 // pred_check
      _
    $region10: #{discriminator_forward.11} parent=5 // pred_check_branch
      %125 = sbr.rel (%p122) target = $region12
    $region11: #{discriminator_forward.11} parent=5 // pred_region
      %s126 = ssub.s32 %s9, 1
      // Predicated region
      $region13: #{discriminator_forward.11} parent=11 // pred_check
        %p127 = pneg %p70
      $region14: #{discriminator_forward.11} parent=11 // pred_check_branch
        %129 = sbr.rel (%p127) target = $region16
      $region15: #{discriminator_forward.11} parent=11 // pred_region
        _
      $region16: #{discriminator_forward.11} parent=11 // pred_fallthru
        _
      // Predicated region
      $region17: #{discriminator_forward.11} parent=11 // pred_check
        %p130 = pneg %p91
      $region18: #{discriminator_forward.11} parent=11 // pred_check_branch
        %132 = sbr.rel (%p130) target = $region20
      $region19: #{discriminator_forward.11} parent=11 // pred_region
        _
      $region20: #{discriminator_forward.11} parent=11 // pred_fallthru
        _
    $region12: #{discriminator_forward.11} parent=5 // pred_fallthru
      _
    %p133 = scmp.lt.s32.totalorder %s9, 2
    // Predicated region
    $region21: #{discriminator_forward.11} parent=5 // pred_check
      %p134 = pneg %p133
    $region22: #{discriminator_forward.11} parent=5 // pred_check_branch
      %136 = sbr.rel (%p134) target = $region24
    $region23: #{discriminator_forward.11} parent=5 // pred_region
      // Predicated region
      $region25: #{discriminator_forward.11} parent=23 // pred_check
        %p137 = pneg %p43
      $region26: #{discriminator_forward.11} parent=23 // pred_check_branch
        %139 = sbr.rel (%p137) target = $region28
      $region27: #{discriminator_forward.11} parent=23 // pred_region
        %p140 = scmp.lt.s32.totalorder %s16, 1
        %s141 = scalar_select %p140, %s16, 1
        %p142 = scmp.lt.s32.totalorder %s17, 0
        %s143 = scalar_select %p142, %s17, 0
        %s144 = smul.addr %s143, 32
        %s145 = smul.addr %s141, 32
        %s146 = sadd.s32 %s144, %s145
        %s147 = smul.addr %s146, 4
        %s148 = scalar_lea.vmem %s0, %s147
      $region28: #{discriminator_forward.11} parent=23 // pred_fallthru
        _
    $region24: #{discriminator_forward.11} parent=5 // pred_fallthru
      _
    %p149 = scmp.le.s32.totalorder 1, %s9
    %p150 = scmp.lt.s32.totalorder %s9, 3
    %p151 = pnand %p149, %p150
    %p152 = pneg %p151
    // Predicated region
    $region29: #{discriminator_forward.11} parent=5 // pred_check
      _
    $region30: #{discriminator_forward.11} parent=5 // pred_check_branch
      %154 = sbr.rel (%p151) target = $region32
    $region31: #{discriminator_forward.11} parent=5 // pred_region
      %s155 = ssub.s32 %s9, 1
      %p156 = scmp.lt.s32.totalorder %s18, 1
      %s157 = scalar_select %p156, %s18, 1
      %p158 = scmp.lt.s32.totalorder %s19, 0
      %s159 = scalar_select %p158, %s19, 0
      %s160 = smul.addr %s159, 32
      %s161 = smul.addr %s157, 32
      %s162 = sadd.s32 %s160, %s161
      %s163 = smul.addr %s162, 4
      %s164 = scalar_lea.vmem %s0, %s163
      %p165 = pneg %p49
      %p166 = pneg %p46
      %p167 = pneg %p70
      %p168 = pneg %p67
      %p169 = pneg %p91
      %p170 = pneg %p88
      %p171 = pneg %p112
      %p172 = pneg %p109
      %p173 = scmp.lt.s32.totalorder %s18, 1
      %s174 = scalar_select %p173, %s18, 1
      %p175 = scmp.lt.s32.totalorder %s19, 0
      %s176 = scalar_select %p175, %s19, 0
      %s177 = smul.addr %s176, 32
      %s178 = smul.addr %s174, 32
      %s179 = sadd.s32 %s177, %s178
      %s180 = smul.addr %s179, 4
      %s181 = scalar_lea.vmem %s0, %s180
      %p182 = scmp.eq.s32.totalorder %s18, 0
      %p183 = scmp.eq.s32.totalorder %s19, 0
      %p184 = pnand %p182, %p183
      %p185 = pneg %p184
      // Predicated region
      $region33: #{discriminator_forward.11} parent=31 // pred_check
        _
      $region34: #{discriminator_forward.11} parent=31 // pred_check_branch
        %187 = sbr.rel (%p184) target = $region36
      $region35: #{discriminator_forward.11} parent=31 // pred_region
        %188 = vst [vmem:[%s3] sm:$0xff] 0.0
      $region36: #{discriminator_forward.11} parent=31 // pred_fallthru
        _
      %v189 = vld [vmem:[%s181] sm:$0xff]
      %v190 = vld [vmem:[%s181 + $0x8] sm:$0xff]
      %v191 = vld [vmem:[%s181 + $0x10] sm:$0xff]
      %v192 = vld [vmem:[%s181 + $0x18] sm:$0xff]
      %v193 = vld [vmem:[%s181 + $0x20] sm:$0xff]
      %v194 = vld [vmem:[%s181 + $0x28] sm:$0xff]
      %v195 = vld [vmem:[%s181 + $0x30] sm:$0xff]
      %v196 = vld [vmem:[%s181 + $0x38] sm:$0xff]
      %v197 = vld [vmem:[%s181 + $0x40] sm:$0xff]
      %v198 = vld [vmem:[%s181 + $0x48] sm:$0xff]
      %v199 = vld [vmem:[%s181 + $0x50] sm:$0xff]
      %v200 = vld [vmem:[%s181 + $0x58] sm:$0xff]
      %v201 = vld [vmem:[%s181 + $0x60] sm:$0xff]
      %v202 = vld [vmem:[%s181 + $0x68] sm:$0xff]
      %v203 = vld [vmem:[%s181 + $0x70] sm:$0xff]
      %v204 = vld [vmem:[%s181 + $0x78] sm:$0xff]
      %v205 = vunpack.c.l.bf16 %v189
      %v206 = vunpack.c.h.bf16 %v189
      %v207 = vunpack.c.l.bf16 %v190
      %v208 = vunpack.c.h.bf16 %v190
      %v209 = vunpack.c.l.bf16 %v191
      %v210 = vunpack.c.h.bf16 %v191
      %v211 = vunpack.c.l.bf16 %v192
      %v212 = vunpack.c.h.bf16 %v192
      %v213 = vunpack.c.l.bf16 %v193
      %v214 = vunpack.c.h.bf16 %v193
      %v215 = vunpack.c.l.bf16 %v194
      %v216 = vunpack.c.h.bf16 %v194
      %v217 = vunpack.c.l.bf16 %v195
      %v218 = vunpack.c.h.bf16 %v195
      %v219 = vunpack.c.l.bf16 %v196
      %v220 = vunpack.c.h.bf16 %v196
      %v221 = vunpack.c.l.bf16 %v197
      %v222 = vunpack.c.h.bf16 %v197
      %v223 = vunpack.c.l.bf16 %v198
      %v224 = vunpack.c.h.bf16 %v198
      %v225 = vunpack.c.l.bf16 %v199
      %v226 = vunpack.c.h.bf16 %v199
      %v227 = vunpack.c.l.bf16 %v200
      %v228 = vunpack.c.h.bf16 %v200
      %v229 = vunpack.c.l.bf16 %v201
      %v230 = vunpack.c.h.bf16 %v201
      %v231 = vunpack.c.l.bf16 %v202
      %v232 = vunpack.c.h.bf16 %v202
      %v233 = vunpack.c.l.bf16 %v203
      %v234 = vunpack.c.h.bf16 %v203
      %v235 = vunpack.c.l.bf16 %v204
      %v236 = vunpack.c.h.bf16 %v204
      %v237 = vld [vmem:[%s1] sm:$0xff]
      %v238 = vld [vmem:[%s1 + $0x8] sm:$0xff]
      %v239 = vld [vmem:[%s1 + $0x10] sm:$0xff]
      %v240 = vld [vmem:[%s1 + $0x18] sm:$0xff]
      %v241 = vunpack.c.l.bf16 %v237
      %v242 = vunpack.c.h.bf16 %v237
      %v243 = vunpack.c.l.bf16 %v238
      %v244 = vunpack.c.h.bf16 %v238
      %v245 = vunpack.c.l.bf16 %v239
      %v246 = vunpack.c.h.bf16 %v239
      %v247 = vunpack.c.l.bf16 %v240
      %v248 = vunpack.c.h.bf16 %v240
      %v257 = vperm.slane %v241, 0
      %v258 = vperm.slane %v241, 2
      %v259 = vperm.slane %v241, 4
      %v260 = vperm.slane %v241, 6
      %v261 = vperm.slane %v242, 0
      %v262 = vperm.slane %v242, 2
      %v263 = vperm.slane %v242, 4
      %v264 = vperm.slane %v242, 6
      %v265 = vperm.slane %v243, 0
      %v266 = vperm.slane %v243, 2
      %v267 = vperm.slane %v243, 4
      %v268 = vperm.slane %v243, 6
      %v269 = vperm.slane %v244, 0
      %v270 = vperm.slane %v244, 2
      %v271 = vperm.slane %v244, 4
      %v272 = vperm.slane %v244, 6
      %v273 = vperm.slane %v245, 0
      %v274 = vperm.slane %v245, 2
      %v275 = vperm.slane %v245, 4
      %v276 = vperm.slane %v245, 6
      %v277 = vperm.slane %v246, 0
      %v278 = vperm.slane %v246, 2
      %v279 = vperm.slane %v246, 4
      %v280 = vperm.slane %v246, 6
      %v281 = vperm.slane %v247, 0
      %v282 = vperm.slane %v247, 2
      %v283 = vperm.slane %v247, 4
      %v284 = vperm.slane %v247, 6
      %v285 = vperm.slane %v248, 0
      %v286 = vperm.slane %v248, 2
      %v287 = vperm.slane %v248, 4
      %v288 = vperm.slane %v248, 6
      %v321 = vperm.slane %v257, 0
      %v322 = vperm.slane %v258, 0
      %v323 = vperm.slane %v259, 0
      %v324 = vperm.slane %v260, 0
      %v325 = vperm.slane %v261, 0
      %v326 = vperm.slane %v262, 0
      %v327 = vperm.slane %v263, 0
      %v328 = vperm.slane %v264, 0
      %v329 = vperm.slane %v265, 0
      %v330 = vperm.slane %v266, 0
      %v331 = vperm.slane %v267, 0
      %v332 = vperm.slane %v268, 0
      %v333 = vperm.slane %v269, 0
      %v334 = vperm.slane %v270, 0
      %v335 = vperm.slane %v271, 0
      %v336 = vperm.slane %v272, 0
      %v337 = vperm.slane %v273, 0
      %v338 = vperm.slane %v274, 0
      %v339 = vperm.slane %v275, 0
      %v340 = vperm.slane %v276, 0
      %v341 = vperm.slane %v277, 0
      %v342 = vperm.slane %v278, 0
      %v343 = vperm.slane %v279, 0
      %v344 = vperm.slane %v280, 0
      %v345 = vperm.slane %v281, 0
      %v346 = vperm.slane %v282, 0
      %v347 = vperm.slane %v283, 0
      %v348 = vperm.slane %v284, 0
      %v349 = vperm.slane %v285, 0
      %v350 = vperm.slane %v286, 0
      %v351 = vperm.slane %v287, 0
      %v352 = vperm.slane %v288, 0
      %v353 = vmul.f32 %v205, %v321
      %v354 = vmul.f32 %v206, %v322
      %v355 = vmul.f32 %v207, %v323
      %v356 = vmul.f32 %v208, %v324
      %v357 = vmul.f32 %v209, %v325
      %v358 = vmul.f32 %v210, %v326
      %v359 = vmul.f32 %v211, %v327
      %v360 = vmul.f32 %v212, %v328
      %v361 = vmul.f32 %v213, %v329
      %v362 = vmul.f32 %v214, %v330
      %v363 = vmul.f32 %v215, %v331
      %v364 = vmul.f32 %v216, %v332
      %v365 = vmul.f32 %v217, %v333
      %v366 = vmul.f32 %v218, %v334
      %v367 = vmul.f32 %v219, %v335
      %v368 = vmul.f32 %v220, %v336
      %v369 = vmul.f32 %v221, %v337
      %v370 = vmul.f32 %v222, %v338
      %v371 = vmul.f32 %v223, %v339
      %v372 = vmul.f32 %v224, %v340
      %v373 = vmul.f32 %v225, %v341
      %v374 = vmul.f32 %v226, %v342
      %v375 = vmul.f32 %v227, %v343
      %v376 = vmul.f32 %v228, %v344
      %v377 = vmul.f32 %v229, %v345
      %v378 = vmul.f32 %v230, %v346
      %v379 = vmul.f32 %v231, %v347
      %v380 = vmul.f32 %v232, %v348
      %v381 = vmul.f32 %v233, %v349
      %v382 = vmul.f32 %v234, %v350
      %v383 = vmul.f32 %v235, %v351
      %v384 = vmul.f32 %v236, %v352
      %v385 = vadd.f32 %v353, %v354
      %v386 = vadd.f32 %v385, %v355
      %v387 = vadd.f32 %v386, %v356
      %v388 = vadd.f32 %v387, %v357
      %v389 = vadd.f32 %v388, %v358
      %v390 = vadd.f32 %v389, %v359
      %v391 = vadd.f32 %v390, %v360
      %v392 = vadd.f32 %v391, %v361
      %v393 = vadd.f32 %v392, %v362
      %v394 = vadd.f32 %v393, %v363
      %v395 = vadd.f32 %v394, %v364
      %v396 = vadd.f32 %v395, %v365
      %v397 = vadd.f32 %v396, %v366
      %v398 = vadd.f32 %v397, %v367
      %v399 = vadd.f32 %v398, %v368
      %v400 = vadd.f32 %v399, %v369
      %v401 = vadd.f32 %v400, %v370
      %v402 = vadd.f32 %v401, %v371
      %v403 = vadd.f32 %v402, %v372
      %v404 = vadd.f32 %v403, %v373
      %v405 = vadd.f32 %v404, %v374
      %v406 = vadd.f32 %v405, %v375
      %v407 = vadd.f32 %v406, %v376
      %v408 = vadd.f32 %v407, %v377
      %v409 = vadd.f32 %v408, %v378
      %v410 = vadd.f32 %v409, %v379
      %v411 = vadd.f32 %v410, %v380
      %v412 = vadd.f32 %v411, %v381
      %v413 = vadd.f32 %v412, %v382
      %v414 = vadd.f32 %v413, %v383
      %v415 = vadd.f32 %v414, %v384
      %416 = vadd.xlane.f32.xlu0 %v415
      %v417 = vpop.xlane.xlu0 %416
      %v418 = vrot.slane %v417, 4
      %v419 = vadd.f32 %v417, %v418
      %v420 = vrot.slane %v419, 2
      %v421 = vadd.f32 %v419, %v420
      %v422 = vrot.slane %v421, 1
      %v423 = vadd.f32 %v421, %v422
      %s424 = vtos %v423
      %v425 = vlaneseq
      %v426 = vshrl.u32 %v425, 7
      %v427 = vld [vmem:[%s3] sm:$0xff]
      %v428 = vstv %s18
      %vm429 = vcmp.eq.s32.totalorder %v426, %v428
      %v430 = vstv %s424
      %v431 = vsel %vm429, %v430, 0.0
      %v432 = vadd.f32 %v427, %v431
      %433 = vst [vmem:[%s3] sm:$0xff] %v432
      %p434 = scmp.eq.s32.totalorder %s18, 1
      %p435 = pnand %p434, %p183
      %p436 = pneg %p435
      // Predicated region
      $region37: #{discriminator_forward.11} parent=31 // pred_check
        _
      $region38: #{discriminator_forward.11} parent=31 // pred_check_branch
        %438 = sbr.rel (%p435) target = $region40
      $region39: #{discriminator_forward.11} parent=31 // pred_region
        %v439 = vld [vmem:[%s3] sm:$0xff]
        %v440 = vld [vmem:[%s2] sm:$0x1]
        %v442 = vperm.slane %v440, 0
        %v444 = vadd.f32 %v439, %v442
        %445 = vst [vmem:[%s3] sm:$0xff] %v444
      $region40: #{discriminator_forward.11} parent=31 // pred_fallthru
        _
      // Predicated region
      $region41: #{discriminator_forward.11} parent=31 // pred_check
        %p446 = pneg %p109
      $region42: #{discriminator_forward.11} parent=31 // pred_check_branch
        %448 = sbr.rel (%p446) target = $region44
      $region43: #{discriminator_forward.11} parent=31 // pred_region
        _
      $region44: #{discriminator_forward.11} parent=31 // pred_fallthru
        _
      // Predicated region
      $region45: #{discriminator_forward.11} parent=31 // pred_check
        %p449 = pneg %p109
      $region46: #{discriminator_forward.11} parent=31 // pred_check_branch
        %451 = sbr.rel (%p449) target = $region48
      $region47: #{discriminator_forward.11} parent=31 // pred_region
        _
      $region48: #{discriminator_forward.11} parent=31 // pred_fallthru
        _
    $region32: #{discriminator_forward.11} parent=5 // pred_fallthru
      _
    %p452 = scmp.le.s32.totalorder 2, %s9
    // Predicated region
    $region49: #{discriminator_forward.11} parent=5 // pred_check
      %p453 = pneg %p452
    $region50: #{discriminator_forward.11} parent=5 // pred_check_branch
      %455 = sbr.rel (%p453) target = $region52
    $region51: #{discriminator_forward.11} parent=5 // pred_region
      %s456 = ssub.s32 %s9, 2
    $region52: #{discriminator_forward.11} parent=5 // pred_fallthru
      _
  $region6: #{discriminator_forward.11} parent=0 // loop_footer
    %s13 = sadd.s32 1, %s9
  $region7: #{discriminator_forward.11} parent=0 // loop_footer_branch
    %8 = sbr.rel target = $region3
  $region8: #{discriminator_forward.11} parent=0 // loop_exit
    _

</llo_original>
